<compile_context>
chip_gen: v7x
topology: tpu7x:2x2x1
jax: 0.10.0
libtpu: 0.0.40
codegen_flags: <defaults>
</compile_context>

<pallas_src>
import jax
import jax.numpy as jnp
from jax.experimental import pallas as pl
from jax.experimental.pallas import tpu as pltpu

# ---- synthetic config (stands in for cfg / tokenizer) ----
VOCAB = 128        # tokenizer.max_token_value stand-in (cfg['out'])
EMB   = 32         # cfg['embedding_size']
HID   = 64         # encoder MLP hidden width
N_EXP = 4          # MoE decoder experts
ROPE_BASE = 1000.0 # RotaryPosEmb base (torch.tensor(1000) in __init__)
EPS = float(jnp.finfo(jnp.float32).eps)  # nn.RMSNorm default eps for f32
_NEG = -1e30       # masking constant for the gate softmax

MAX_TILE_M = 1024  # VMEM-safe cap on rows per grid step


def _num_tensorcores():
    """1 TC on v5e/v6e, 2 on v7x (and older megacore parts)."""
    try:
        kind = jax.devices()[0].device_kind.lower()
    except Exception:
        return 1
    if "v5" in kind or "v6" in kind:
        return 1
    return 2


def _choose_tiling(m_rows):
    """Pick (TILE_M, Mpad): one grid step per TensorCore when rows allow."""
    n_tc = _num_tensorcores()
    n_steps = max(n_tc, pl.cdiv(m_rows, MAX_TILE_M))
    n_steps = pl.cdiv(n_steps, n_tc) * n_tc          # keep a multiple of #TCs
    tile = pl.cdiv(m_rows, n_steps * 8) * 8          # 8-sublane aligned
    return tile, tile * n_steps, n_steps


def _rotary_pos(T):
    # TODO(synk): RotaryPosEmb class body undefined in source; standard sin/cos
    # additive position table with base ROPE_BASE is used, shape (T, EMB).
    half = EMB // 2
    inv_freq = 1.0 / (ROPE_BASE ** (jnp.arange(half, dtype=jnp.float32) / half))
    t = jnp.arange(T, dtype=jnp.float32)
    ang = t[:, None] * inv_freq[None, :]                               # (T, half)
    return jnp.concatenate([jnp.sin(ang), jnp.cos(ang)], axis=-1)      # (T, EMB)


def llm_kernel(tok_ref, tgt_ref, pos_ref, emb_ref, w1_ref, b1_ref, w2_ref,
               b2_ref, wf_ref, g_ref, o_ref, loss_ref):
    """Fused emb-gather -> pos-add -> MLP -> MoE -> RMSNorm -> CE row losses."""
    i = pl.program_id(0)
    tile_m = o_ref.shape[0]
    T = pos_ref.shape[0]

    # ---- token embedding gather (exact one-hot f32 matmul; table is VMEM-resident) ----
    tok = tok_ref[...]                                                  # (TILE_M, 1) int32
    lane_v = jax.lax.broadcasted_iota(jnp.int32, (tile_m, VOCAB), 1)    # reused by CE pick below
    onehot_tok = (lane_v == tok).astype(jnp.float32)
    x = jnp.dot(onehot_tok, emb_ref[...], preferred_element_type=jnp.float32)  # (TILE_M, EMB)

    # ---- positional add: position of a row = (global_row % T) ----
    row = jax.lax.broadcasted_iota(jnp.int32, (tile_m, 1), 0) + i * tile_m
    if (T & (T - 1)) == 0:
        p = row & (T - 1)                                               # power-of-two fast path
    else:
        p = row % T
    lane_t = jax.lax.broadcasted_iota(jnp.int32, (tile_m, T), 1)
    onehot_pos = (lane_t == p).astype(jnp.float32)
    x = x + jnp.dot(onehot_pos, pos_ref[...], preferred_element_type=jnp.float32)

    # ---- Encoder: MLP block with residual ----
    # TODO(synk): Encoder class body undefined in source; GELU-MLP stand-in.
    h = jnp.dot(x, w1_ref[...], preferred_element_type=jnp.float32) + b1_ref[...]
    h = jax.nn.gelu(h, approximate=True)
    enc = (jnp.dot(h, w2_ref[...], preferred_element_type=jnp.float32)
           + b2_ref[...] + x)                                           # (TILE_M, EMB)

    # ---- MoE decoder: ONE wide matmul = all expert projections + gate logits ----
    # TODO(synk): MoEDecoder class body undefined in source; dense softmax-gated
    # mixture of N_EXP linear experts stand-in.
    y = jnp.dot(enc, wf_ref[...], preferred_element_type=jnp.float32)  # (TILE_M, (N_EXP+1)*VOCAB)

    gl = y[:, N_EXP * VOCAB:(N_EXP + 1) * VOCAB]         # last 128-lane group = gate logits (lanes 0..N_EXP-1)
    lane = jax.lax.broadcasted_iota(jnp.int32, gl.shape, 1)
    glog = jnp.where(lane < N_EXP, gl, _NEG)
    gmax = jnp.max(glog, axis=-1, keepdims=True)
    gexp = jnp.exp(glog - gmax)
    gate = gexp / jnp.sum(gexp, axis=-1, keepdims=True)  # exact softmax; lanes >= N_EXP are 0

    # expert combine: init from e=0 term (no zeros tile), static 128-aligned slices
    out = gate[:, 0:1] * y[:, 0:VOCAB]
    for e in range(1, N_EXP):
        out = out + gate[:, e:e + 1] * y[:, e * VOCAB:(e + 1) * VOCAB]

    # ---- RMSNorm over the vocab dimension (nn.RMSNorm(max_token_value)) ----
    ms = jnp.mean(out * out, axis=-1, keepdims=True)
    logits = out * jax.lax.rsqrt(ms + EPS) * g_ref[...]
    o_ref[...] = logits                                                 # lane-dense (VOCAB = 128)

    # ---- fused cross-entropy epilogue: per-row (logsumexp - picked) ----
    lmax = jnp.max(logits, axis=-1, keepdims=True)
    lse = jnp.log(jnp.sum(jnp.exp(logits - lmax), axis=-1, keepdims=True)) + lmax
    tgt = tgt_ref[...]                                                  # (TILE_M, 1) int32
    picked = jnp.sum(jnp.where(lane_v == tgt, logits, 0.0), axis=-1, keepdims=True)
    loss_ref[...] = lse - picked


def prepare_params(params, block_size):
    """One-time weight layout prep (hoisted out of the per-call forward)."""
    wg_mat = jnp.transpose(params["wg"][:, 0, :], (1, 0))                # (EMB, N_EXP)
    wg_pad = jnp.pad(wg_mat, ((0, 0), (0, VOCAB - N_EXP)))               # (EMB, VOCAB)
    we_flat = jnp.transpose(params["we"], (1, 0, 2)).reshape(EMB, N_EXP * VOCAB)
    wf = jnp.concatenate([we_flat, wg_pad], axis=1)                      # (EMB, (N_EXP+1)*VOCAB)
    prepared = {
        "pos": _rotary_pos(block_size),                                  # (T, EMB)
        "emb": params["token_emb"],                                      # (VOCAB, EMB)
        "w1": params["w1"], "b1": params["b1"],
        "w2": params["w2"], "b2": params["b2"],
        "wf": wf, "gamma": params["gamma"],
    }
    return jax.tree_util.tree_map(jnp.asarray, prepared)


def llm_forward(x_tokens, prepared, y=None):
    """Mirrors LLM.forward: returns (out, loss) with loss=None when y is None."""
    B, T = x_tokens.shape
    pos = prepared["pos"][:T]                                            # (T, EMB)
    M = B * T
    TILE_M, Mpad, n_steps = _choose_tiling(M)

    tok2d = x_tokens.reshape(M, 1).astype(jnp.int32)
    tgt_src = y if y is not None else jnp.zeros((B, T), jnp.int32)
    tgt2d = tgt_src.reshape(M, 1).astype(jnp.int32)
    if Mpad != M:
        tok2d = jnp.pad(tok2d, ((0, Mpad - M), (0, 0)))
        tgt2d = jnp.pad(tgt2d, ((0, Mpad - M), (0, 0)))

    out2d, rowloss = pl.pallas_call(
        llm_kernel,
        out_shape=(jax.ShapeDtypeStruct((Mpad, VOCAB), jnp.float32),
                   jax.ShapeDtypeStruct((Mpad, 1), jnp.float32)),
        grid_spec=pltpu.PrefetchScalarGridSpec(
            num_scalar_prefetch=0,
            grid=(n_steps,),
            in_specs=[
                pl.BlockSpec((TILE_M, 1), lambda i: (i, 0)),               # token ids
                pl.BlockSpec((TILE_M, 1), lambda i: (i, 0)),               # targets
                pl.BlockSpec((T, EMB), lambda i: (0, 0)),                  # position table
                pl.BlockSpec((VOCAB, EMB), lambda i: (0, 0)),              # embedding table (VMEM-resident)
                pl.BlockSpec((EMB, HID), lambda i: (0, 0)),                # encoder W1
                pl.BlockSpec((1, HID), lambda i: (0, 0)),                  # encoder b1
                pl.BlockSpec((HID, EMB), lambda i: (0, 0)),                # encoder W2
                pl.BlockSpec((1, EMB), lambda i: (0, 0)),                  # encoder b2
                pl.BlockSpec((EMB, (N_EXP + 1) * VOCAB), lambda i: (0, 0)),# fused experts + gate
                pl.BlockSpec((1, VOCAB), lambda i: (0, 0)),                # RMSNorm gamma
            ],
            out_specs=[
                pl.BlockSpec((TILE_M, VOCAB), lambda i: (i, 0)),           # logits (lane-dense)
                pl.BlockSpec((TILE_M, 1), lambda i: (i, 0)),               # per-row CE loss
            ],
        ),
        compiler_params=pltpu.CompilerParams(
            dimension_semantics=("parallel",)),
    )(tok2d, tgt2d, pos, prepared["emb"], prepared["w1"], prepared["b1"],
      prepared["w2"], prepared["b2"], prepared["wf"], prepared["gamma"])

    out = out2d[:M].reshape(B, T, VOCAB)
    if y is None:
        return out, None
    loss = jnp.mean(rowloss[:M, 0])                                      # F.cross_entropy mean reduction
    return out, loss


def init_params(key):
    ks = jax.random.split(key, 6)
    return {
        "token_emb": 0.02 * jax.random.normal(ks[0], (VOCAB, EMB), jnp.float32),
        "w1": 0.1 * jax.random.normal(ks[1], (EMB, HID), jnp.float32),
        "b1": jnp.zeros((1, HID), jnp.float32),
        "w2": 0.1 * jax.random.normal(ks[2], (HID, EMB), jnp.float32),
        "b2": jnp.zeros((1, EMB), jnp.float32),
        "wg": 0.1 * jax.random.normal(ks[3], (N_EXP, 1, EMB), jnp.float32),
        "we": 0.1 * jax.random.normal(ks[4], (N_EXP, EMB, VOCAB), jnp.float32),
        "gamma": jnp.ones((1, VOCAB), jnp.float32),
    }


if __name__ == "__main__":
    key = jax.random.PRNGKey(0)
    pkey, xkey, ykey = jax.random.split(key, 3)
    params = init_params(pkey)

    # batch=4, block_size=128 -> M = 512 rows
    # -> grid = 1 step (TILE_M=512) on v5e/v6e, 2 steps (TILE_M=256) on v7x.
    B, T = 4, 128
    prepared = prepare_params(params, block_size=T)

    x = jax.random.randint(xkey, (B, T), 0, VOCAB, dtype=jnp.int32)
    y = jax.random.randint(ykey, (B, T), 0, VOCAB, dtype=jnp.int32)

    out, loss = llm_forward(x, prepared, y)
    jax.block_until_ready(out)
    jax.block_until_ready(loss)
    assert out.shape == (B, T, VOCAB) and loss.shape == ()
    assert bool(jnp.isfinite(loss))

    # inference path (y=None) also exercised once
    out2, loss2 = llm_forward(x, prepared, None)
    jax.block_until_ready(out2)
    assert loss2 is None

    print("KERNEL_OK")
</pallas_src>

<mosaic_0001>
module attributes {stable_mosaic.version = 11 : i64} {
  func.func @llm_kernel(%arg0: i32, %arg1: memref<256x1xi32, #tpu.memory_space<vmem>>, %arg2: memref<256x1xi32, #tpu.memory_space<vmem>>, %arg3: memref<128x32xf32, #tpu.memory_space<vmem>>, %arg4: memref<128x32xf32, #tpu.memory_space<vmem>>, %arg5: memref<32x64xf32, #tpu.memory_space<vmem>>, %arg6: memref<1x64xf32, #tpu.memory_space<vmem>>, %arg7: memref<64x32xf32, #tpu.memory_space<vmem>>, %arg8: memref<1x32xf32, #tpu.memory_space<vmem>>, %arg9: memref<32x640xf32, #tpu.memory_space<vmem>>, %arg10: memref<1x128xf32, #tpu.memory_space<vmem>>, %arg11: memref<256x128xf32, #tpu.memory_space<vmem>>, %arg12: memref<256x1xf32, #tpu.memory_space<vmem>>) attributes {dimension_semantics = [#tpu.dimension_semantics<parallel>], iteration_bounds = array<i64: 2>, scalar_prefetch = 0 : i64, scratch_operands = 0 : i64, tpu.core_type = #tpu.core_type<tc>, window_params = [{transform_indices = @transform_0, window_bounds = array<i64: 256, 1>}, {transform_indices = @transform_1, window_bounds = array<i64: 256, 1>}, {pipeline_mode = #tpu.pipeline_mode<synchronous>, transform_indices = @transform_2, window_bounds = array<i64: 128, 32>}, {pipeline_mode = #tpu.pipeline_mode<synchronous>, transform_indices = @transform_3, window_bounds = array<i64: 128, 32>}, {pipeline_mode = #tpu.pipeline_mode<synchronous>, transform_indices = @transform_4, window_bounds = array<i64: 32, 64>}, {pipeline_mode = #tpu.pipeline_mode<synchronous>, transform_indices = @transform_5, window_bounds = array<i64: 1, 64>}, {pipeline_mode = #tpu.pipeline_mode<synchronous>, transform_indices = @transform_6, window_bounds = array<i64: 64, 32>}, {pipeline_mode = #tpu.pipeline_mode<synchronous>, transform_indices = @transform_7, window_bounds = array<i64: 1, 32>}, {pipeline_mode = #tpu.pipeline_mode<synchronous>, transform_indices = @transform_8, window_bounds = array<i64: 32, 640>}, {pipeline_mode = #tpu.pipeline_mode<synchronous>, transform_indices = @transform_9, window_bounds = array<i64: 1, 128>}, {transform_indices = @transform_10, window_bounds = array<i64: 256, 128>}, {transform_indices = @transform_11, window_bounds = array<i64: 256, 1>}]} {
    %c0 = arith.constant 0 : index
    %c0_0 = arith.constant 0 : index
    %0 = vector.load %arg1[%c0, %c0_0] : memref<256x1xi32, #tpu.memory_space<vmem>>, vector<256x1xi32>
    %1 = tpu.iota {dimensions = array<i32: 1>} : vector<256x128xi32>
    %2 = vector.broadcast %0 : vector<256x1xi32> to vector<256x128xi32>
    %3 = arith.cmpi eq, %1, %2 : vector<256x128xi32>
    %4 = arith.extui %3 : vector<256x128xi1> to vector<256x128xi32>
    %5 = arith.sitofp %4 : vector<256x128xi32> to vector<256x128xf32>
    %c0_1 = arith.constant 0 : index
    %c0_2 = arith.constant 0 : index
    %6 = vector.load %arg4[%c0_1, %c0_2] : memref<128x32xf32, #tpu.memory_space<vmem>>, vector<128x32xf32>
    %cst = arith.constant dense<0.000000e+00> : vector<256x32xf32>
    %7 = tpu.matmul %5, %6, %cst {dimension_numbers = #tpu.dot_dimension_numbers<[1], [0], [0], [1], [0, 0, 1, 1], [], []>} : vector<256x128xf32>, vector<128x32xf32>, vector<256x32xf32> -> vector<256x32xf32>
    %8 = tpu.iota {dimensions = array<i32: 0>} : vector<256x1xi32>
    %c256_i32 = arith.constant 256 : i32
    %9 = arith.muli %arg0, %c256_i32 : i32
    %10 = vector.broadcast %9 : i32 to vector<256x1xi32>
    %11 = arith.addi %8, %10 : vector<256x1xi32>
    %c127_i32 = arith.constant 127 : i32
    %12 = vector.broadcast %c127_i32 : i32 to vector<256x1xi32>
    %13 = arith.andi %11, %12 : vector<256x1xi32>
    %14 = tpu.iota {dimensions = array<i32: 1>} : vector<256x128xi32>
    %15 = vector.broadcast %13 : vector<256x1xi32> to vector<256x128xi32>
    %16 = arith.cmpi eq, %14, %15 : vector<256x128xi32>
    %17 = arith.extui %16 : vector<256x128xi1> to vector<256x128xi32>
    %18 = arith.sitofp %17 : vector<256x128xi32> to vector<256x128xf32>
    %c0_3 = arith.constant 0 : index
    %c0_4 = arith.constant 0 : index
    %19 = vector.load %arg3[%c0_3, %c0_4] : memref<128x32xf32, #tpu.memory_space<vmem>>, vector<128x32xf32>
    %cst_5 = arith.constant dense<0.000000e+00> : vector<256x32xf32>
    %20 = tpu.matmul %18, %19, %cst_5 {dimension_numbers = #tpu.dot_dimension_numbers<[1], [0], [0], [1], [0, 0, 1, 1], [], []>} : vector<256x128xf32>, vector<128x32xf32>, vector<256x32xf32> -> vector<256x32xf32>
    %21 = arith.addf %7, %20 : vector<256x32xf32>
    %c0_6 = arith.constant 0 : index
    %c0_7 = arith.constant 0 : index
    %22 = vector.load %arg5[%c0_6, %c0_7] : memref<32x64xf32, #tpu.memory_space<vmem>>, vector<32x64xf32>
    %cst_8 = arith.constant dense<0.000000e+00> : vector<256x64xf32>
    %23 = tpu.matmul %21, %22, %cst_8 {dimension_numbers = #tpu.dot_dimension_numbers<[1], [0], [0], [1], [0, 0, 1, 1], [], []>} : vector<256x32xf32>, vector<32x64xf32>, vector<256x64xf32> -> vector<256x64xf32>
    %c0_9 = arith.constant 0 : index
    %c0_10 = arith.constant 0 : index
    %24 = vector.load %arg6[%c0_9, %c0_10] : memref<1x64xf32, #tpu.memory_space<vmem>>, vector<1x64xf32>
    %25 = vector.broadcast %24 : vector<1x64xf32> to vector<256x64xf32>
    %26 = arith.addf %23, %25 : vector<256x64xf32>
    %27 = arith.mulf %26, %26 : vector<256x64xf32>
    %28 = arith.mulf %26, %27 : vector<256x64xf32>
    %cst_11 = arith.constant 4.471500e-02 : f32
    %29 = vector.broadcast %cst_11 : f32 to vector<256x64xf32>
    %30 = arith.mulf %29, %28 : vector<256x64xf32>
    %31 = arith.addf %26, %30 : vector<256x64xf32>
    %cst_12 = arith.constant 0.797884583 : f32
    %32 = vector.broadcast %cst_12 : f32 to vector<256x64xf32>
    %33 = arith.mulf %32, %31 : vector<256x64xf32>
    %34 = math.tanh %33 : vector<256x64xf32>
    %cst_13 = arith.constant 1.000000e+00 : f32
    %35 = vector.broadcast %cst_13 : f32 to vector<256x64xf32>
    %36 = arith.addf %35, %34 : vector<256x64xf32>
    %cst_14 = arith.constant 5.000000e-01 : f32
    %37 = vector.broadcast %cst_14 : f32 to vector<256x64xf32>
    %38 = arith.mulf %37, %36 : vector<256x64xf32>
    %39 = arith.mulf %26, %38 : vector<256x64xf32>
    %c0_15 = arith.constant 0 : index
    %c0_16 = arith.constant 0 : index
    %40 = vector.load %arg7[%c0_15, %c0_16] : memref<64x32xf32, #tpu.memory_space<vmem>>, vector<64x32xf32>
    %cst_17 = arith.constant dense<0.000000e+00> : vector<256x32xf32>
    %41 = tpu.matmul %39, %40, %cst_17 {dimension_numbers = #tpu.dot_dimension_numbers<[1], [0], [0], [1], [0, 0, 1, 1], [], []>} : vector<256x64xf32>, vector<64x32xf32>, vector<256x32xf32> -> vector<256x32xf32>
    %c0_18 = arith.constant 0 : index
    %c0_19 = arith.constant 0 : index
    %42 = vector.load %arg8[%c0_18, %c0_19] : memref<1x32xf32, #tpu.memory_space<vmem>>, vector<1x32xf32>
    %43 = vector.broadcast %42 : vector<1x32xf32> to vector<256x32xf32>
    %44 = arith.addf %41, %43 : vector<256x32xf32>
    %45 = arith.addf %44, %21 : vector<256x32xf32>
    %c0_20 = arith.constant 0 : index
    %c0_21 = arith.constant 0 : index
    %46 = vector.load %arg9[%c0_20, %c0_21] : memref<32x640xf32, #tpu.memory_space<vmem>>, vector<32x640xf32>
    %cst_22 = arith.constant dense<0.000000e+00> : vector<256x640xf32>
    %47 = tpu.matmul %45, %46, %cst_22 {dimension_numbers = #tpu.dot_dimension_numbers<[1], [0], [0], [1], [0, 0, 1, 1], [], []>} : vector<256x32xf32>, vector<32x640xf32>, vector<256x640xf32> -> vector<256x640xf32>
    %48 = vector.extract_strided_slice %47 {offsets = [0, 512], sizes = [256, 128], strides = [1, 1]} : vector<256x640xf32> to vector<256x128xf32>
    %49 = tpu.iota {dimensions = array<i32: 1>} : vector<256x128xi32>
    %c4_i32 = arith.constant 4 : i32
    %50 = vector.broadcast %c4_i32 : i32 to vector<256x128xi32>
    %51 = arith.cmpi slt, %49, %50 : vector<256x128xi32>
    %cst_23 = arith.constant -1.000000e+30 : f32
    %52 = vector.broadcast %cst_23 : f32 to vector<256x128xf32>
    %53 = arith.select %51, %48, %52 : vector<256x128xi1>, vector<256x128xf32>
    %cst_24 = arith.constant dense<0xFF800000> : vector<256xf32>
    %54 = vector.multi_reduction <maximumf>, %53, %cst_24 [1] : vector<256x128xf32> to vector<256xf32>
    %55 = vector.shape_cast %54 : vector<256xf32> to vector<256x1xf32>
    %56 = vector.broadcast %55 : vector<256x1xf32> to vector<256x128xf32>
    %57 = arith.subf %53, %56 : vector<256x128xf32>
    %58 = math.exp %57 : vector<256x128xf32>
    %cst_25 = arith.constant dense<0.000000e+00> : vector<256xf32>
    %59 = vector.multi_reduction <add>, %58, %cst_25 [1] : vector<256x128xf32> to vector<256xf32>
    %60 = vector.shape_cast %59 : vector<256xf32> to vector<256x1xf32>
    %61 = vector.broadcast %60 : vector<256x1xf32> to vector<256x128xf32>
    %62 = arith.divf %58, %61 : vector<256x128xf32>
    %63 = vector.extract_strided_slice %62 {offsets = [0, 0], sizes = [256, 1], strides = [1, 1]} : vector<256x128xf32> to vector<256x1xf32>
    %64 = vector.extract_strided_slice %47 {offsets = [0, 0], sizes = [256, 128], strides = [1, 1]} : vector<256x640xf32> to vector<256x128xf32>
    %65 = vector.broadcast %63 : vector<256x1xf32> to vector<256x128xf32>
    %66 = arith.mulf %65, %64 : vector<256x128xf32>
    %67 = vector.extract_strided_slice %62 {offsets = [0, 1], sizes = [256, 1], strides = [1, 1]} : vector<256x128xf32> to vector<256x1xf32>
    %68 = vector.extract_strided_slice %47 {offsets = [0, 128], sizes = [256, 128], strides = [1, 1]} : vector<256x640xf32> to vector<256x128xf32>
    %69 = vector.broadcast %67 : vector<256x1xf32> to vector<256x128xf32>
    %70 = arith.mulf %69, %68 : vector<256x128xf32>
    %71 = arith.addf %66, %70 : vector<256x128xf32>
    %72 = vector.extract_strided_slice %62 {offsets = [0, 2], sizes = [256, 1], strides = [1, 1]} : vector<256x128xf32> to vector<256x1xf32>
    %73 = vector.extract_strided_slice %47 {offsets = [0, 256], sizes = [256, 128], strides = [1, 1]} : vector<256x640xf32> to vector<256x128xf32>
    %74 = vector.broadcast %72 : vector<256x1xf32> to vector<256x128xf32>
    %75 = arith.mulf %74, %73 : vector<256x128xf32>
    %76 = arith.addf %71, %75 : vector<256x128xf32>
    %77 = vector.extract_strided_slice %62 {offsets = [0, 3], sizes = [256, 1], strides = [1, 1]} : vector<256x128xf32> to vector<256x1xf32>
    %78 = vector.extract_strided_slice %47 {offsets = [0, 384], sizes = [256, 128], strides = [1, 1]} : vector<256x640xf32> to vector<256x128xf32>
    %79 = vector.broadcast %77 : vector<256x1xf32> to vector<256x128xf32>
    %80 = arith.mulf %79, %78 : vector<256x128xf32>
    %81 = arith.addf %76, %80 : vector<256x128xf32>
    %82 = arith.mulf %81, %81 : vector<256x128xf32>
    %cst_26 = arith.constant dense<0.000000e+00> : vector<256xf32>
    %83 = vector.multi_reduction <add>, %82, %cst_26 [1] : vector<256x128xf32> to vector<256xf32>
    %84 = vector.shape_cast %83 : vector<256xf32> to vector<256x1xf32>
    %cst_27 = arith.constant 1.280000e+02 : f32
    %85 = vector.broadcast %cst_27 : f32 to vector<256x1xf32>
    %86 = arith.divf %84, %85 : vector<256x1xf32>
    %cst_28 = arith.constant 1.1920929E-7 : f32
    %87 = vector.broadcast %cst_28 : f32 to vector<256x1xf32>
    %88 = arith.addf %86, %87 : vector<256x1xf32>
    %89 = math.rsqrt %88 : vector<256x1xf32>
    %90 = vector.broadcast %89 : vector<256x1xf32> to vector<256x128xf32>
    %91 = arith.mulf %81, %90 : vector<256x128xf32>
    %c0_29 = arith.constant 0 : index
    %c0_30 = arith.constant 0 : index
    %92 = vector.load %arg10[%c0_29, %c0_30] : memref<1x128xf32, #tpu.memory_space<vmem>>, vector<1x128xf32>
    %93 = vector.broadcast %92 : vector<1x128xf32> to vector<256x128xf32>
    %94 = arith.mulf %91, %93 : vector<256x128xf32>
    %c0_31 = arith.constant 0 : index
    %c0_32 = arith.constant 0 : index
    %95 = vector.load %arg11[%c0_31, %c0_32] : memref<256x128xf32, #tpu.memory_space<vmem>>, vector<256x128xf32>
    tpu.vector_store %arg11[%c0_31, %c0_32], %94 {strides = array<i32>} : memref<256x128xf32, #tpu.memory_space<vmem>>, vector<256x128xf32>,
    %cst_33 = arith.constant dense<0xFF800000> : vector<256xf32>
    %96 = vector.multi_reduction <maximumf>, %94, %cst_33 [1] : vector<256x128xf32> to vector<256xf32>
    %97 = vector.shape_cast %96 : vector<256xf32> to vector<256x1xf32>
    %98 = vector.broadcast %97 : vector<256x1xf32> to vector<256x128xf32>
    %99 = arith.subf %94, %98 : vector<256x128xf32>
    %100 = math.exp %99 : vector<256x128xf32>
    %cst_34 = arith.constant dense<0.000000e+00> : vector<256xf32>
    %101 = vector.multi_reduction <add>, %100, %cst_34 [1] : vector<256x128xf32> to vector<256xf32>
    %102 = vector.shape_cast %101 : vector<256xf32> to vector<256x1xf32>
    %103 = math.log %102 : vector<256x1xf32>
    %104 = arith.addf %103, %97 : vector<256x1xf32>
    %c0_35 = arith.constant 0 : index
    %c0_36 = arith.constant 0 : index
    %105 = vector.load %arg2[%c0_35, %c0_36] : memref<256x1xi32, #tpu.memory_space<vmem>>, vector<256x1xi32>
    %106 = vector.broadcast %105 : vector<256x1xi32> to vector<256x128xi32>
    %107 = arith.cmpi eq, %1, %106 : vector<256x128xi32>
    %cst_37 = arith.constant 0.000000e+00 : f32
    %108 = vector.broadcast %cst_37 : f32 to vector<256x128xf32>
    %109 = arith.select %107, %94, %108 : vector<256x128xi1>, vector<256x128xf32>
    %cst_38 = arith.constant dense<0.000000e+00> : vector<256xf32>
    %110 = vector.multi_reduction <add>, %109, %cst_38 [1] : vector<256x128xf32> to vector<256xf32>
    %111 = vector.shape_cast %110 : vector<256xf32> to vector<256x1xf32>
    %112 = arith.subf %104, %111 : vector<256x1xf32>
    %c0_39 = arith.constant 0 : index
    %c0_40 = arith.constant 0 : index
    %113 = vector.load %arg12[%c0_39, %c0_40] : memref<256x1xf32, #tpu.memory_space<vmem>>, vector<256x1xf32>
    tpu.vector_store %arg12[%c0_39, %c0_40], %112 {strides = array<i32>} : memref<256x1xf32, #tpu.memory_space<vmem>>, vector<256x1xf32>,
    return
  }
  func.func @transform_0(%arg0: i32) -> (i32, i32) {
    %c0_i32 = arith.constant 0 : i32
    %c0_i32_0 = arith.constant 0 : i32
    return %arg0, %c0_i32 : i32, i32
  }
  func.func @transform_1(%arg0: i32) -> (i32, i32) {
    %c0_i32 = arith.constant 0 : i32
    %c0_i32_0 = arith.constant 0 : i32
    return %arg0, %c0_i32 : i32, i32
  }
  func.func @transform_2(%arg0: i32) -> (i32, i32) {
    %c0_i32 = arith.constant 0 : i32
    %c0_i32_0 = arith.constant 0 : i32
    %c0_i32_1 = arith.constant 0 : i32
    return %c0_i32, %c0_i32_0 : i32, i32
  }
  func.func @transform_3(%arg0: i32) -> (i32, i32) {
    %c0_i32 = arith.constant 0 : i32
    %c0_i32_0 = arith.constant 0 : i32
    %c0_i32_1 = arith.constant 0 : i32
    return %c0_i32, %c0_i32_0 : i32, i32
  }
  func.func @transform_4(%arg0: i32) -> (i32, i32) {
    %c0_i32 = arith.constant 0 : i32
    %c0_i32_0 = arith.constant 0 : i32
    %c0_i32_1 = arith.constant 0 : i32
    return %c0_i32, %c0_i32_0 : i32, i32
  }
  func.func @transform_5(%arg0: i32) -> (i32, i32) {
    %c0_i32 = arith.constant 0 : i32
    %c0_i32_0 = arith.constant 0 : i32
    %c0_i32_1 = arith.constant 0 : i32
    return %c0_i32, %c0_i32_0 : i32, i32
  }
  func.func @transform_6(%arg0: i32) -> (i32, i32) {
    %c0_i32 = arith.constant 0 : i32
    %c0_i32_0 = arith.constant 0 : i32
    %c0_i32_1 = arith.constant 0 : i32
    return %c0_i32, %c0_i32_0 : i32, i32
  }
  func.func @transform_7(%arg0: i32) -> (i32, i32) {
    %c0_i32 = arith.constant 0 : i32
    %c0_i32_0 = arith.constant 0 : i32
    %c0_i32_1 = arith.constant 0 : i32
    return %c0_i32, %c0_i32_0 : i32, i32
  }
  func.func @transform_8(%arg0: i32) -> (i32, i32) {
    %c0_i32 = arith.constant 0 : i32
    %c0_i32_0 = arith.constant 0 : i32
    %c0_i32_1 = arith.constant 0 : i32
    return %c0_i32, %c0_i32_0 : i32, i32
  }
  func.func @transform_9(%arg0: i32) -> (i32, i32) {
    %c0_i32 = arith.constant 0 : i32
    %c0_i32_0 = arith.constant 0 : i32
    %c0_i32_1 = arith.constant 0 : i32
    return %c0_i32, %c0_i32_0 : i32, i32
  }
  func.func @transform_10(%arg0: i32) -> (i32, i32) {
    %c0_i32 = arith.constant 0 : i32
    %c0_i32_0 = arith.constant 0 : i32
    return %arg0, %c0_i32 : i32, i32
  }
  func.func @transform_11(%arg0: i32) -> (i32, i32) {
    %c0_i32 = arith.constant 0 : i32
    %c0_i32_0 = arith.constant 0 : i32
    return %arg0, %c0_i32 : i32, i32
  }
}

</mosaic_0001>

<llo_original>
// kernel: tpu_custom_call.1
$region0: #{tpu_custom_call.1}
  #allocation0 [shape = 'u32[]', space=smem, size = 0x4, offset = 0x4, fixed_abs, tag = 'smem constant byte address 0x4 - core index']
  #allocation1 [shape = 'u32[144,128]{1,0:T(1,128)}', space=vmem, size = 0x12000, scoped, tag = 'internal scratch']
  %s0 = inlined_call_operand.vmem [shape: s32[512,1], index: 0, kind: input, shape index: {}]
  %s1 = inlined_call_operand.vmem [shape: s32[512,1], index: 1, kind: input, shape index: {}]
  %s2 = inlined_call_operand.vmem [shape: f32[128,32], index: 2, kind: input, shape index: {}]
  %s3 = inlined_call_operand.vmem [shape: f32[128,32], index: 3, kind: input, shape index: {}]
  %s4 = inlined_call_operand.vmem [shape: f32[32,64], index: 4, kind: input, shape index: {}]
  %s5 = inlined_call_operand.vmem [shape: f32[1,64], index: 5, kind: input, shape index: {}]
  %s6 = inlined_call_operand.vmem [shape: f32[64,32], index: 6, kind: input, shape index: {}]
  %s7 = inlined_call_operand.vmem [shape: f32[1,32], index: 7, kind: input, shape index: {}]
  %s8 = inlined_call_operand.vmem [shape: f32[32,640], index: 8, kind: input, shape index: {}]
  %s9 = inlined_call_operand.vmem [shape: f32[1,128], index: 9, kind: input, shape index: {}]
  %s10 = inlined_call_operand.hbm [shape: f32[512,128], index: 10, kind: output, shape index: {0}]
  %s11 = inlined_call_operand.vmem [shape: f32[512,1], index: 11, kind: output, shape index: {1}]
  %12 = xla_tuple %s10, %s11
  %s13 = sld [smem:[#allocation0]]
  $region81: #{tpu_custom_call.1} parent=0
    _
  %s15 = ssub.s32 1, %s13
  %s16 = scalar_select 0, %s15, %s13
  $region1: #{tpu_custom_call.1} parent=0
    #allocation2 [shape = 'u8[262144]{0}', space=vmem, size = 0x40000, scoped, tag = 'output window, operand 0']
    #allocation3 [shape = 's32[2]{0}', space=sflag, size = 0x8, scoped, tag = 'scoped memory for tpu_custom_call.1']
    %17 = vsyncpa [#allocation3], 0
    %s18 = scalar_lea.sflag [#allocation3], 1
    %19 = vsyncpa %s18, 0
    loop: start=0, step=1, limit=4
    $region2: #{tpu_custom_call.1} parent=1 // loop_pre_header
      _
    $region3: #{tpu_custom_call.1} parent=1 // loop_header
      %s21 = sphi 0, %s25
      %p22 = scmp.ge.s32.totalorder %s21, 4
      %s31 = sphi 0, %s33
      %s34 = sphi 0, %s31
      %s35 = sphi 0, %s34
      %s51 = sphi 0, %s35
      %s57 = sphi 0, %s59
      %s60 = sphi 0, %s57
      %s61 = sphi 0, %s60
      %s77 = sphi 0, %s61
      %s81 = sphi 0, %s81
      %s83 = sphi 0, %s81
      %s84 = sphi 0, %s83
      %s98 = sphi 0, %s84
      %s102 = sphi 0, %s102
      %s104 = sphi 0, %s102
      %s105 = sphi 0, %s104
      %s119 = sphi 0, %s105
      %s123 = sphi 0, %s123
      %s125 = sphi 0, %s123
      %s126 = sphi 0, %s125
      %s140 = sphi 0, %s126
      %s144 = sphi 0, %s144
      %s146 = sphi 0, %s144
      %s147 = sphi 0, %s146
      %s161 = sphi 0, %s147
      %s165 = sphi 0, %s165
      %s167 = sphi 0, %s165
      %s168 = sphi 0, %s167
      %s182 = sphi 0, %s168
      %s186 = sphi 0, %s186
      %s188 = sphi 0, %s186
      %s189 = sphi 0, %s188
      %s203 = sphi 0, %s189
      %s207 = sphi 0, %s207
      %s209 = sphi 0, %s207
      %s210 = sphi 0, %s209
      %s224 = sphi 0, %s210
      %s228 = sphi 0, %s228
      %s230 = sphi 0, %s228
      %s231 = sphi 0, %s230
      %s245 = sphi 0, %s231
      %s251 = sphi 0, %s253
      %s254 = sphi 0, %s251
      %s255 = sphi 0, %s254
      %s271 = sphi 0, %s255
      %s277 = sphi 0, %s279
      %s280 = sphi 0, %s277
      %s281 = sphi 0, %s280
      %s297 = sphi 0, %s281
    $region4: #{tpu_custom_call.1} parent=1 // loop_header_branch
      %24 = sbr.rel (%p22) target = $region8
    $region5: #{tpu_custom_call.1} parent=1 // loop_body
      %s26 = ssub.s32 %s21, 1
      %s27 = ssub.s32 %s21, 2
      %s28 = sadd.s32 %s21, 1
      %s29 = ssub.s32 %s21, %s28
      %p30 = scmp.eq.s32.totalorder %s29, 0
      %s32 = sadd.s32 %s31, 1
      %s33 = scalar_select %p30, %s31, %s32
      %p36 = pneg %p30
      %p37 = scmp.eq.s32.totalorder %s21, 1
      %p38 = por %p36, %p37
      %p39 = scmp.ne.s32.totalorder %s31, %s34
      %p40 = scmp.eq.s32.totalorder %s21, 0
      %p41 = por %p39, %p40
      %p42 = scmp.ne.s32.totalorder %s31, %s34
      %p43 = scmp.eq.s32.totalorder %s26, 1
      %p44 = por %p42, %p43
      %p45 = scmp.ne.s32.totalorder %s34, %s35
      %p46 = scmp.eq.s32.totalorder %s26, 0
      %p47 = por %p45, %p46
      %p48 = scmp.ne.s32.totalorder %s34, %s35
      %p49 = scmp.eq.s32.totalorder %s27, 1
      %p50 = por %p48, %p49
      %p52 = scmp.ne.s32.totalorder %s35, %s51
      %p53 = scmp.eq.s32.totalorder %s27, 0
      %p54 = por %p52, %p53
      %s55 = ssub.s32 %s21, %s28
      %p56 = scmp.eq.s32.totalorder %s55, 0
      %s58 = sadd.s32 %s57, 1
      %s59 = scalar_select %p56, %s57, %s58
      %p62 = pneg %p56
      %p63 = scmp.eq.s32.totalorder %s21, 1
      %p64 = por %p62, %p63
      %p65 = scmp.ne.s32.totalorder %s57, %s60
      %p66 = scmp.eq.s32.totalorder %s21, 0
      %p67 = por %p65, %p66
      %p68 = scmp.ne.s32.totalorder %s57, %s60
      %p69 = scmp.eq.s32.totalorder %s26, 1
      %p70 = por %p68, %p69
      %p71 = scmp.ne.s32.totalorder %s60, %s61
      %p72 = scmp.eq.s32.totalorder %s26, 0
      %p73 = por %p71, %p72
      %p74 = scmp.ne.s32.totalorder %s60, %s61
      %p75 = scmp.eq.s32.totalorder %s27, 1
      %p76 = por %p74, %p75
      %p78 = scmp.ne.s32.totalorder %s61, %s77
      %p79 = scmp.eq.s32.totalorder %s27, 0
      %p80 = por %p78, %p79
      %s82 = sadd.s32 %s81, 1
      %p85 = scmp.eq.s32.totalorder %s21, 1
      %p86 = scmp.ne.s32.totalorder %s81, %s83
      %p87 = scmp.eq.s32.totalorder %s21, 0
      %p88 = por %p86, %p87
      %p89 = scmp.ne.s32.totalorder %s81, %s83
      %p90 = scmp.eq.s32.totalorder %s26, 1
      %p91 = por %p89, %p90
      %p92 = scmp.ne.s32.totalorder %s83, %s84
      %p93 = scmp.eq.s32.totalorder %s26, 0
      %p94 = por %p92, %p93
      %p95 = scmp.ne.s32.totalorder %s83, %s84
      %p96 = scmp.eq.s32.totalorder %s27, 1
      %p97 = por %p95, %p96
      %p99 = scmp.ne.s32.totalorder %s84, %s98
      %p100 = scmp.eq.s32.totalorder %s27, 0
      %p101 = por %p99, %p100
      %s103 = sadd.s32 %s102, 1
      %p106 = scmp.eq.s32.totalorder %s21, 1
      %p107 = scmp.ne.s32.totalorder %s102, %s104
      %p108 = scmp.eq.s32.totalorder %s21, 0
      %p109 = por %p107, %p108
      %p110 = scmp.ne.s32.totalorder %s102, %s104
      %p111 = scmp.eq.s32.totalorder %s26, 1
      %p112 = por %p110, %p111
      %p113 = scmp.ne.s32.totalorder %s104, %s105
      %p114 = scmp.eq.s32.totalorder %s26, 0
      %p115 = por %p113, %p114
      %p116 = scmp.ne.s32.totalorder %s104, %s105
      %p117 = scmp.eq.s32.totalorder %s27, 1
      %p118 = por %p116, %p117
      %p120 = scmp.ne.s32.totalorder %s105, %s119
      %p121 = scmp.eq.s32.totalorder %s27, 0
      %p122 = por %p120, %p121
      %s124 = sadd.s32 %s123, 1
      %p127 = scmp.eq.s32.totalorder %s21, 1
      %p128 = scmp.ne.s32.totalorder %s123, %s125
      %p129 = scmp.eq.s32.totalorder %s21, 0
      %p130 = por %p128, %p129
      %p131 = scmp.ne.s32.totalorder %s123, %s125
      %p132 = scmp.eq.s32.totalorder %s26, 1
      %p133 = por %p131, %p132
      %p134 = scmp.ne.s32.totalorder %s125, %s126
      %p135 = scmp.eq.s32.totalorder %s26, 0
      %p136 = por %p134, %p135
      %p137 = scmp.ne.s32.totalorder %s125, %s126
      %p138 = scmp.eq.s32.totalorder %s27, 1
      %p139 = por %p137, %p138
      %p141 = scmp.ne.s32.totalorder %s126, %s140
      %p142 = scmp.eq.s32.totalorder %s27, 0
      %p143 = por %p141, %p142
      %s145 = sadd.s32 %s144, 1
      %p148 = scmp.eq.s32.totalorder %s21, 1
      %p149 = scmp.ne.s32.totalorder %s144, %s146
      %p150 = scmp.eq.s32.totalorder %s21, 0
      %p151 = por %p149, %p150
      %p152 = scmp.ne.s32.totalorder %s144, %s146
      %p153 = scmp.eq.s32.totalorder %s26, 1
      %p154 = por %p152, %p153
      %p155 = scmp.ne.s32.totalorder %s146, %s147
      %p156 = scmp.eq.s32.totalorder %s26, 0
      %p157 = por %p155, %p156
      %p158 = scmp.ne.s32.totalorder %s146, %s147
      %p159 = scmp.eq.s32.totalorder %s27, 1
      %p160 = por %p158, %p159
      %p162 = scmp.ne.s32.totalorder %s147, %s161
      %p163 = scmp.eq.s32.totalorder %s27, 0
      %p164 = por %p162, %p163
      %s166 = sadd.s32 %s165, 1
      %p169 = scmp.eq.s32.totalorder %s21, 1
      %p170 = scmp.ne.s32.totalorder %s165, %s167
      %p171 = scmp.eq.s32.totalorder %s21, 0
      %p172 = por %p170, %p171
      %p173 = scmp.ne.s32.totalorder %s165, %s167
      %p174 = scmp.eq.s32.totalorder %s26, 1
      %p175 = por %p173, %p174
      %p176 = scmp.ne.s32.totalorder %s167, %s168
      %p177 = scmp.eq.s32.totalorder %s26, 0
      %p178 = por %p176, %p177
      %p179 = scmp.ne.s32.totalorder %s167, %s168
      %p180 = scmp.eq.s32.totalorder %s27, 1
      %p181 = por %p179, %p180
      %p183 = scmp.ne.s32.totalorder %s168, %s182
      %p184 = scmp.eq.s32.totalorder %s27, 0
      %p185 = por %p183, %p184
      %s187 = sadd.s32 %s186, 1
      %p190 = scmp.eq.s32.totalorder %s21, 1
      %p191 = scmp.ne.s32.totalorder %s186, %s188
      %p192 = scmp.eq.s32.totalorder %s21, 0
      %p193 = por %p191, %p192
      %p194 = scmp.ne.s32.totalorder %s186, %s188
      %p195 = scmp.eq.s32.totalorder %s26, 1
      %p196 = por %p194, %p195
      %p197 = scmp.ne.s32.totalorder %s188, %s189
      %p198 = scmp.eq.s32.totalorder %s26, 0
      %p199 = por %p197, %p198
      %p200 = scmp.ne.s32.totalorder %s188, %s189
      %p201 = scmp.eq.s32.totalorder %s27, 1
      %p202 = por %p200, %p201
      %p204 = scmp.ne.s32.totalorder %s189, %s203
      %p205 = scmp.eq.s32.totalorder %s27, 0
      %p206 = por %p204, %p205
      %s208 = sadd.s32 %s207, 1
      %p211 = scmp.eq.s32.totalorder %s21, 1
      %p212 = scmp.ne.s32.totalorder %s207, %s209
      %p213 = scmp.eq.s32.totalorder %s21, 0
      %p214 = por %p212, %p213
      %p215 = scmp.ne.s32.totalorder %s207, %s209
      %p216 = scmp.eq.s32.totalorder %s26, 1
      %p217 = por %p215, %p216
      %p218 = scmp.ne.s32.totalorder %s209, %s210
      %p219 = scmp.eq.s32.totalorder %s26, 0
      %p220 = por %p218, %p219
      %p221 = scmp.ne.s32.totalorder %s209, %s210
      %p222 = scmp.eq.s32.totalorder %s27, 1
      %p223 = por %p221, %p222
      %p225 = scmp.ne.s32.totalorder %s210, %s224
      %p226 = scmp.eq.s32.totalorder %s27, 0
      %p227 = por %p225, %p226
      %s229 = sadd.s32 %s228, 1
      %p232 = scmp.eq.s32.totalorder %s21, 1
      %p233 = scmp.ne.s32.totalorder %s228, %s230
      %p234 = scmp.eq.s32.totalorder %s21, 0
      %p235 = por %p233, %p234
      %p236 = scmp.ne.s32.totalorder %s228, %s230
      %p237 = scmp.eq.s32.totalorder %s26, 1
      %p238 = por %p236, %p237
      %p239 = scmp.ne.s32.totalorder %s230, %s231
      %p240 = scmp.eq.s32.totalorder %s26, 0
      %p241 = por %p239, %p240
      %p242 = scmp.ne.s32.totalorder %s230, %s231
      %p243 = scmp.eq.s32.totalorder %s27, 1
      %p244 = por %p242, %p243
      %p246 = scmp.ne.s32.totalorder %s231, %s245
      %p247 = scmp.eq.s32.totalorder %s27, 0
      %p248 = por %p246, %p247
      %s249 = ssub.s32 %s21, %s28
      %p250 = scmp.eq.s32.totalorder %s249, 0
      %s252 = sadd.s32 %s251, 1
      %s253 = scalar_select %p250, %s251, %s252
      %p256 = pneg %p250
      %p257 = scmp.eq.s32.totalorder %s21, 1
      %p258 = por %p256, %p257
      %p259 = scmp.ne.s32.totalorder %s251, %s254
      %p260 = scmp.eq.s32.totalorder %s21, 0
      %p261 = por %p259, %p260
      %p262 = scmp.ne.s32.totalorder %s251, %s254
      %p263 = scmp.eq.s32.totalorder %s26, 1
      %p264 = por %p262, %p263
      %p265 = scmp.ne.s32.totalorder %s254, %s255
      %p266 = scmp.eq.s32.totalorder %s26, 0
      %p267 = por %p265, %p266
      %p268 = scmp.ne.s32.totalorder %s254, %s255
      %p269 = scmp.eq.s32.totalorder %s27, 1
      %p270 = por %p268, %p269
      %p272 = scmp.ne.s32.totalorder %s255, %s271
      %p273 = scmp.eq.s32.totalorder %s27, 0
      %p274 = por %p272, %p273
      %s275 = ssub.s32 %s21, %s28
      %p276 = scmp.eq.s32.totalorder %s275, 0
      %s278 = sadd.s32 %s277, 1
      %s279 = scalar_select %p276, %s277, %s278
      %p282 = pneg %p276
      %p283 = scmp.eq.s32.totalorder %s21, 1
      %p284 = por %p282, %p283
      %p285 = scmp.ne.s32.totalorder %s277, %s280
      %p286 = scmp.eq.s32.totalorder %s21, 0
      %p287 = por %p285, %p286
      %p288 = scmp.ne.s32.totalorder %s277, %s280
      %p289 = scmp.eq.s32.totalorder %s26, 1
      %p290 = por %p288, %p289
      %p291 = scmp.ne.s32.totalorder %s280, %s281
      %p292 = scmp.eq.s32.totalorder %s26, 0
      %p293 = por %p291, %p292
      %p294 = scmp.ne.s32.totalorder %s280, %s281
      %p295 = scmp.eq.s32.totalorder %s27, 1
      %p296 = por %p294, %p295
      %p298 = scmp.ne.s32.totalorder %s281, %s297
      %p299 = scmp.eq.s32.totalorder %s27, 0
      %p300 = por %p298, %p299
      %p301 = scmp.le.s32.totalorder 1, %s21
      %p302 = scmp.lt.s32.totalorder %s21, 3
      %p303 = pnand %p301, %p302
      %p304 = pneg %p303
      // Predicated region
      $region9: #{tpu_custom_call.1} parent=5 // pred_check
        _
      $region10: #{tpu_custom_call.1} parent=5 // pred_check_branch
        %306 = sbr.rel (%p303) target = $region12
      $region11: #{tpu_custom_call.1} parent=5 // pred_region
        %s307 = ssub.s32 %s21, 1
        // Predicated region
        $region13: #{tpu_custom_call.1} parent=11 // pred_check
          %p308 = pneg %p94
        $region14: #{tpu_custom_call.1} parent=11 // pred_check_branch
          %310 = sbr.rel (%p308) target = $region16
        $region15: #{tpu_custom_call.1} parent=11 // pred_region
          _
        $region16: #{tpu_custom_call.1} parent=11 // pred_fallthru
          _
        // Predicated region
        $region17: #{tpu_custom_call.1} parent=11 // pred_check
          %p311 = pneg %p115
        $region18: #{tpu_custom_call.1} parent=11 // pred_check_branch
          %313 = sbr.rel (%p311) target = $region20
        $region19: #{tpu_custom_call.1} parent=11 // pred_region
          _
        $region20: #{tpu_custom_call.1} parent=11 // pred_fallthru
          _
        // Predicated region
        $region21: #{tpu_custom_call.1} parent=11 // pred_check
          %p314 = pneg %p136
        $region22: #{tpu_custom_call.1} parent=11 // pred_check_branch
          %316 = sbr.rel (%p314) target = $region24
        $region23: #{tpu_custom_call.1} parent=11 // pred_region
          _
        $region24: #{tpu_custom_call.1} parent=11 // pred_fallthru
          _
        // Predicated region
        $region25: #{tpu_custom_call.1} parent=11 // pred_check
          %p317 = pneg %p157
        $region26: #{tpu_custom_call.1} parent=11 // pred_check_branch
          %319 = sbr.rel (%p317) target = $region28
        $region27: #{tpu_custom_call.1} parent=11 // pred_region
          _
        $region28: #{tpu_custom_call.1} parent=11 // pred_fallthru
          _
        // Predicated region
        $region29: #{tpu_custom_call.1} parent=11 // pred_check
          %p320 = pneg %p178
        $region30: #{tpu_custom_call.1} parent=11 // pred_check_branch
          %322 = sbr.rel (%p320) target = $region32
        $region31: #{tpu_custom_call.1} parent=11 // pred_region
          _
        $region32: #{tpu_custom_call.1} parent=11 // pred_fallthru
          _
        // Predicated region
        $region33: #{tpu_custom_call.1} parent=11 // pred_check
          %p323 = pneg %p199
        $region34: #{tpu_custom_call.1} parent=11 // pred_check_branch
          %325 = sbr.rel (%p323) target = $region36
        $region35: #{tpu_custom_call.1} parent=11 // pred_region
          _
        $region36: #{tpu_custom_call.1} parent=11 // pred_fallthru
          _
        // Predicated region
        $region37: #{tpu_custom_call.1} parent=11 // pred_check
          %p326 = pneg %p220
        $region38: #{tpu_custom_call.1} parent=11 // pred_check_branch
          %328 = sbr.rel (%p326) target = $region40
        $region39: #{tpu_custom_call.1} parent=11 // pred_region
          _
        $region40: #{tpu_custom_call.1} parent=11 // pred_fallthru
          _
        // Predicated region
        $region41: #{tpu_custom_call.1} parent=11 // pred_check
          %p329 = pneg %p241
        $region42: #{tpu_custom_call.1} parent=11 // pred_check_branch
          %331 = sbr.rel (%p329) target = $region44
        $region43: #{tpu_custom_call.1} parent=11 // pred_region
          _
        $region44: #{tpu_custom_call.1} parent=11 // pred_fallthru
          _
      $region12: #{tpu_custom_call.1} parent=5 // pred_fallthru
        _
      %p332 = scmp.lt.s32.totalorder %s21, 2
      // Predicated region
      $region45: #{tpu_custom_call.1} parent=5 // pred_check
        %p333 = pneg %p332
      $region46: #{tpu_custom_call.1} parent=5 // pred_check_branch
        %335 = sbr.rel (%p333) target = $region48
      $region47: #{tpu_custom_call.1} parent=5 // pred_region
        // Predicated region
        $region49: #{tpu_custom_call.1} parent=47 // pred_check
          %p336 = pneg %p41
        $region50: #{tpu_custom_call.1} parent=47 // pred_check_branch
          %338 = sbr.rel (%p336) target = $region52
        $region51: #{tpu_custom_call.1} parent=47 // pred_region
          %s339 = smul.u32 32, %s21
          %p340 = scmp.lt.s32.totalorder %s339, 63
          %s341 = scalar_select %p340, %s339, 63
          %s342 = smul.addr %s341, 8
          %s343 = scalar_lea.vmem %s0, %s342
          %s344 = smul.u32 32, %s21
        $region52: #{tpu_custom_call.1} parent=47 // pred_fallthru
          _
        // Predicated region
        $region53: #{tpu_custom_call.1} parent=47 // pred_check
          %p345 = pneg %p67
        $region54: #{tpu_custom_call.1} parent=47 // pred_check_branch
          %347 = sbr.rel (%p345) target = $region56
        $region55: #{tpu_custom_call.1} parent=47 // pred_region
          %s348 = smul.u32 32, %s21
          %p349 = scmp.lt.s32.totalorder %s348, 63
          %s350 = scalar_select %p349, %s348, 63
          %s351 = smul.addr %s350, 8
          %s352 = scalar_lea.vmem %s1, %s351
          %s353 = smul.u32 32, %s21
        $region56: #{tpu_custom_call.1} parent=47 // pred_fallthru
          _
      $region48: #{tpu_custom_call.1} parent=5 // pred_fallthru
        _
      %p354 = scmp.le.s32.totalorder 1, %s21
      %p355 = scmp.lt.s32.totalorder %s21, 3
      %p356 = pnand %p354, %p355
      %p357 = pneg %p356
      // Predicated region
      $region57: #{tpu_custom_call.1} parent=5 // pred_check
        _
      $region58: #{tpu_custom_call.1} parent=5 // pred_check_branch
        %359 = sbr.rel (%p356) target = $region60
      $region59: #{tpu_custom_call.1} parent=5 // pred_region
        %s360 = ssub.s32 %s21, 1
        %s361 = smul.u32 32, %s26
        %p362 = scmp.lt.s32.totalorder %s361, 63
        %s363 = scalar_select %p362, %s361, 63
        %s364 = smul.addr %s363, 8
        %s365 = scalar_lea.vmem %s0, %s364
        %p366 = pneg %p47
        %p367 = pneg %p44
        %s368 = smul.u32 32, %s26
        %p369 = scmp.lt.s32.totalorder %s368, 63
        %s370 = scalar_select %p369, %s368, 63
        %s371 = smul.addr %s370, 8
        %s372 = scalar_lea.vmem %s1, %s371
        %p373 = pneg %p73
        %p374 = pneg %p70
        %p375 = pneg %p94
        %p376 = pneg %p91
        %p377 = pneg %p115
        %p378 = pneg %p112
        %p379 = pneg %p136
        %p380 = pneg %p133
        %p381 = pneg %p157
        %p382 = pneg %p154
        %p383 = pneg %p178
        %p384 = pneg %p175
        %p385 = pneg %p199
        %p386 = pneg %p196
        %p387 = pneg %p220
        %p388 = pneg %p217
        %p389 = pneg %p241
        %p390 = pneg %p238
        %p391 = pneg %p267
        %p392 = pneg %p264
        %s393 = sand.u32 %s254, 1
        %s394 = scalar_lea.sflag [#allocation3], %s393
        %s395 = sand.u32 %s254, 1
        %s396 = smul.addr %s395, 256
        %s397 = scalar_lea.vmem [#allocation2], %s396
        %p398 = pneg %p293
        %p399 = pneg %p290
        %s400 = smul.u32 32, %s26
        %p401 = scmp.lt.s32.totalorder %s400, 63
        %s402 = scalar_select %p401, %s400, 63
        %s403 = smul.addr %s402, 8
        %s404 = scalar_lea.vmem %s11, %s403
        %s405 = smul.u32 32, %s26
        %p406 = scmp.lt.s32.totalorder %s405, 63
        %s407 = scalar_select %p406, %s405, 63
        %s408 = smul.addr %s407, 8
        %s409 = scalar_lea.vmem %s0, %s408
        %s410 = smul.u32 32, %s26
        %s411 = smul.u32 32, %s26
        %p412 = scmp.lt.s32.totalorder %s411, 63
        %s413 = scalar_select %p412, %s411, 63
        %s414 = smul.addr %s413, 8
        %s415 = scalar_lea.vmem %s1, %s414
        %s416 = smul.u32 32, %s26
        %s417 = smul.u32 32, %s26
        %s418 = smul.u32 32, %s26
        %p419 = scmp.lt.s32.totalorder %s418, 63
        %s420 = scalar_select %p419, %s418, 63
        %s421 = smul.addr %s420, 8
        %s422 = scalar_lea.vmem %s11, %s421
        %s423 = smul.u32 32, %s26
        %v424 = vld [vmem:[%s409] sm:$0xff]
        %v425 = vld [vmem:[%s409 + $0x8] sm:$0xff]
        %v426 = vld [vmem:[%s409 + $0x10] sm:$0xff]
        %v427 = vld [vmem:[%s409 + $0x18] sm:$0xff]
        %v428 = vld [vmem:[%s409 + $0x20] sm:$0xff]
        %v429 = vld [vmem:[%s409 + $0x28] sm:$0xff]
        %v430 = vld [vmem:[%s409 + $0x30] sm:$0xff]
        %v431 = vld [vmem:[%s409 + $0x38] sm:$0xff]
        %v432 = vld [vmem:[%s409 + $0x40] sm:$0xff]
        %v433 = vld [vmem:[%s409 + $0x48] sm:$0xff]
        %v434 = vld [vmem:[%s409 + $0x50] sm:$0xff]
        %v435 = vld [vmem:[%s409 + $0x58] sm:$0xff]
        %v436 = vld [vmem:[%s409 + $0x60] sm:$0xff]
        %v437 = vld [vmem:[%s409 + $0x68] sm:$0xff]
        %v438 = vld [vmem:[%s409 + $0x70] sm:$0xff]
        %v439 = vld [vmem:[%s409 + $0x78] sm:$0xff]
        %v440 = vld [vmem:[%s409 + $0x80] sm:$0xff]
        %v441 = vld [vmem:[%s409 + $0x88] sm:$0xff]
        %v442 = vld [vmem:[%s409 + $0x90] sm:$0xff]
        %v443 = vld [vmem:[%s409 + $0x98] sm:$0xff]
        %v444 = vld [vmem:[%s409 + $0xa0] sm:$0xff]
        %v445 = vld [vmem:[%s409 + $0xa8] sm:$0xff]
        %v446 = vld [vmem:[%s409 + $0xb0] sm:$0xff]
        %v447 = vld [vmem:[%s409 + $0xb8] sm:$0xff]
        %v448 = vld [vmem:[%s409 + $0xc0] sm:$0xff]
        %v449 = vld [vmem:[%s409 + $0xc8] sm:$0xff]
        %v450 = vld [vmem:[%s409 + $0xd0] sm:$0xff]
        %v451 = vld [vmem:[%s409 + $0xd8] sm:$0xff]
        %v452 = vld [vmem:[%s409 + $0xe0] sm:$0xff]
        %v453 = vld [vmem:[%s409 + $0xe8] sm:$0xff]
        %v454 = vld [vmem:[%s409 + $0xf0] sm:$0xff]
        %v455 = vld [vmem:[%s409 + $0xf8] sm:$0xff]
        %v456 = vlaneseq
        %v457 = vand.u32 %v456, 127
        %458 = vset.pattern.permute.xlu0 0
        %459 = vperm.xlu0 %458, %v424
        %v460 = vpop.permute.xlu0 %459
        %461 = vset.pattern.permute.xlu0 0
        %462 = vperm.xlu0 %461, %v425
        %v463 = vpop.permute.xlu0 %462
        %464 = vset.pattern.permute.xlu0 0
        %465 = vperm.xlu0 %464, %v426
        %v466 = vpop.permute.xlu0 %465
        %467 = vset.pattern.permute.xlu0 0
        %468 = vperm.xlu0 %467, %v427
        %v469 = vpop.permute.xlu0 %468
        %470 = vset.pattern.permute.xlu0 0
        %471 = vperm.xlu0 %470, %v428
        %v472 = vpop.permute.xlu0 %471
        %473 = vset.pattern.permute.xlu0 0
        %474 = vperm.xlu0 %473, %v429
        %v475 = vpop.permute.xlu0 %474
        %476 = vset.pattern.permute.xlu0 0
        %477 = vperm.xlu0 %476, %v430
        %v478 = vpop.permute.xlu0 %477
        %479 = vset.pattern.permute.xlu0 0
        %480 = vperm.xlu0 %479, %v431
        %v481 = vpop.permute.xlu0 %480
        %482 = vset.pattern.permute.xlu0 0
        %483 = vperm.xlu0 %482, %v432
        %v484 = vpop.permute.xlu0 %483
        %485 = vset.pattern.permute.xlu0 0
        %486 = vperm.xlu0 %485, %v433
        %v487 = vpop.permute.xlu0 %486
        %488 = vset.pattern.permute.xlu0 0
        %489 = vperm.xlu0 %488, %v434
        %v490 = vpop.permute.xlu0 %489
        %491 = vset.pattern.permute.xlu0 0
        %492 = vperm.xlu0 %491, %v435
        %v493 = vpop.permute.xlu0 %492
        %494 = vset.pattern.permute.xlu0 0
        %495 = vperm.xlu0 %494, %v436
        %v496 = vpop.permute.xlu0 %495
        %497 = vset.pattern.permute.xlu0 0
        %498 = vperm.xlu0 %497, %v437
        %v499 = vpop.permute.xlu0 %498
        %500 = vset.pattern.permute.xlu0 0
        %501 = vperm.xlu0 %500, %v438
        %v502 = vpop.permute.xlu0 %501
        %503 = vset.pattern.permute.xlu0 0
        %504 = vperm.xlu0 %503, %v439
        %v505 = vpop.permute.xlu0 %504
        %506 = vset.pattern.permute.xlu0 0
        %507 = vperm.xlu0 %506, %v440
        %v508 = vpop.permute.xlu0 %507
        %509 = vset.pattern.permute.xlu0 0
        %510 = vperm.xlu0 %509, %v441
        %v511 = vpop.permute.xlu0 %510
        %512 = vset.pattern.permute.xlu0 0
        %513 = vperm.xlu0 %512, %v442
        %v514 = vpop.permute.xlu0 %513
        %515 = vset.pattern.permute.xlu0 0
        %516 = vperm.xlu0 %515, %v443
        %v517 = vpop.permute.xlu0 %516
        %518 = vset.pattern.permute.xlu0 0
        %519 = vperm.xlu0 %518, %v444
        %v520 = vpop.permute.xlu0 %519
        %521 = vset.pattern.permute.xlu0 0
        %522 = vperm.xlu0 %521, %v445
        %v523 = vpop.permute.xlu0 %522
        %524 = vset.pattern.permute.xlu0 0
        %525 = vperm.xlu0 %524, %v446
        %v526 = vpop.permute.xlu0 %525
        %527 = vset.pattern.permute.xlu0 0
        %528 = vperm.xlu0 %527, %v447
        %v529 = vpop.permute.xlu0 %528
        %530 = vset.pattern.permute.xlu0 0
        %531 = vperm.xlu0 %530, %v448
        %v532 = vpop.permute.xlu0 %531
        %533 = vset.pattern.permute.xlu0 0
        %534 = vperm.xlu0 %533, %v449
        %v535 = vpop.permute.xlu0 %534
        %536 = vset.pattern.permute.xlu0 0
        %537 = vperm.xlu0 %536, %v450
        %v538 = vpop.permute.xlu0 %537
        %539 = vset.pattern.permute.xlu0 0
        %540 = vperm.xlu0 %539, %v451
        %v541 = vpop.permute.xlu0 %540
        %542 = vset.pattern.permute.xlu0 0
        %543 = vperm.xlu0 %542, %v452
        %v544 = vpop.permute.xlu0 %543
        %545 = vset.pattern.permute.xlu0 0
        %546 = vperm.xlu0 %545, %v453
        %v547 = vpop.permute.xlu0 %546
        %548 = vset.pattern.permute.xlu0 0
        %549 = vperm.xlu0 %548, %v454
        %v550 = vpop.permute.xlu0 %549
        %551 = vset.pattern.permute.xlu0 0
        %552 = vperm.xlu0 %551, %v455
        %v553 = vpop.permute.xlu0 %552
        %vm554 = vcmp.eq.s32.totalorder %v457, %v460
        %vm555 = vcmp.eq.s32.totalorder %v457, %v463
        %vm556 = vcmp.eq.s32.totalorder %v457, %v466
        %vm557 = vcmp.eq.s32.totalorder %v457, %v469
        %vm558 = vcmp.eq.s32.totalorder %v457, %v472
        %vm559 = vcmp.eq.s32.totalorder %v457, %v475
        %vm560 = vcmp.eq.s32.totalorder %v457, %v478
        %vm561 = vcmp.eq.s32.totalorder %v457, %v481
        %vm562 = vcmp.eq.s32.totalorder %v457, %v484
        %vm563 = vcmp.eq.s32.totalorder %v457, %v487
        %vm564 = vcmp.eq.s32.totalorder %v457, %v490
        %vm565 = vcmp.eq.s32.totalorder %v457, %v493
        %vm566 = vcmp.eq.s32.totalorder %v457, %v496
        %vm567 = vcmp.eq.s32.totalorder %v457, %v499
        %vm568 = vcmp.eq.s32.totalorder %v457, %v502
        %vm569 = vcmp.eq.s32.totalorder %v457, %v505
        %vm570 = vcmp.eq.s32.totalorder %v457, %v508
        %vm571 = vcmp.eq.s32.totalorder %v457, %v511
        %vm572 = vcmp.eq.s32.totalorder %v457, %v514
        %vm573 = vcmp.eq.s32.totalorder %v457, %v517
        %vm574 = vcmp.eq.s32.totalorder %v457, %v520
        %vm575 = vcmp.eq.s32.totalorder %v457, %v523
        %vm576 = vcmp.eq.s32.totalorder %v457, %v526
        %vm577 = vcmp.eq.s32.totalorder %v457, %v529
        %vm578 = vcmp.eq.s32.totalorder %v457, %v532
        %vm579 = vcmp.eq.s32.totalorder %v457, %v535
        %vm580 = vcmp.eq.s32.totalorder %v457, %v538
        %vm581 = vcmp.eq.s32.totalorder %v457, %v541
        %vm582 = vcmp.eq.s32.totalorder %v457, %v544
        %vm583 = vcmp.eq.s32.totalorder %v457, %v547
        %vm584 = vcmp.eq.s32.totalorder %v457, %v550
        %vm585 = vcmp.eq.s32.totalorder %v457, %v553
        %v586 = vsel %vm554, 1, 0
        %v587 = vsel %vm555, 1, 0
        %v588 = vsel %vm556, 1, 0
        %v589 = vsel %vm557, 1, 0
        %v590 = vsel %vm558, 1, 0
        %v591 = vsel %vm559, 1, 0
        %v592 = vsel %vm560, 1, 0
        %v593 = vsel %vm561, 1, 0
        %v594 = vsel %vm562, 1, 0
        %v595 = vsel %vm563, 1, 0
        %v596 = vsel %vm564, 1, 0
        %v597 = vsel %vm565, 1, 0
        %v598 = vsel %vm566, 1, 0
        %v599 = vsel %vm567, 1, 0
        %v600 = vsel %vm568, 1, 0
        %v601 = vsel %vm569, 1, 0
        %v602 = vsel %vm570, 1, 0
        %v603 = vsel %vm571, 1, 0
        %v604 = vsel %vm572, 1, 0
        %v605 = vsel %vm573, 1, 0
        %v606 = vsel %vm574, 1, 0
        %v607 = vsel %vm575, 1, 0
        %v608 = vsel %vm576, 1, 0
        %v609 = vsel %vm577, 1, 0
        %v610 = vsel %vm578, 1, 0
        %v611 = vsel %vm579, 1, 0
        %v612 = vsel %vm580, 1, 0
        %v613 = vsel %vm581, 1, 0
        %v614 = vsel %vm582, 1, 0
        %v615 = vsel %vm583, 1, 0
        %v616 = vsel %vm584, 1, 0
        %v617 = vsel %vm585, 1, 0
        %v618 = vcvt.s32.f32 %v586
        %v619 = vcvt.s32.f32 %v587
        %v620 = vcvt.s32.f32 %v588
        %v621 = vcvt.s32.f32 %v589
        %v622 = vcvt.s32.f32 %v590
        %v623 = vcvt.s32.f32 %v591
        %v624 = vcvt.s32.f32 %v592
        %v625 = vcvt.s32.f32 %v593
        %v626 = vcvt.s32.f32 %v594
        %v627 = vcvt.s32.f32 %v595
        %v628 = vcvt.s32.f32 %v596
        %v629 = vcvt.s32.f32 %v597
        %v630 = vcvt.s32.f32 %v598
        %v631 = vcvt.s32.f32 %v599
        %v632 = vcvt.s32.f32 %v600
        %v633 = vcvt.s32.f32 %v601
        %v634 = vcvt.s32.f32 %v602
        %v635 = vcvt.s32.f32 %v603
        %v636 = vcvt.s32.f32 %v604
        %v637 = vcvt.s32.f32 %v605
        %v638 = vcvt.s32.f32 %v606
        %v639 = vcvt.s32.f32 %v607
        %v640 = vcvt.s32.f32 %v608
        %v641 = vcvt.s32.f32 %v609
        %v642 = vcvt.s32.f32 %v610
        %v643 = vcvt.s32.f32 %v611
        %v644 = vcvt.s32.f32 %v612
        %v645 = vcvt.s32.f32 %v613
        %v646 = vcvt.s32.f32 %v614
        %v647 = vcvt.s32.f32 %v615
        %v648 = vcvt.s32.f32 %v616
        %v649 = vcvt.s32.f32 %v617
        %v650 = vld [vmem:[%s3] sm:$0xff]
        %v651 = vld [vmem:[%s3 + $0x8] sm:$0xff]
        %v652 = vld [vmem:[%s3 + $0x10] sm:$0xff]
        %v653 = vld [vmem:[%s3 + $0x18] sm:$0xff]
        %v654 = vld [vmem:[%s3 + $0x20] sm:$0xff]
        %v655 = vld [vmem:[%s3 + $0x28] sm:$0xff]
        %v656 = vld [vmem:[%s3 + $0x30] sm:$0xff]
        %v657 = vld [vmem:[%s3 + $0x38] sm:$0xff]
        %v658 = vld [vmem:[%s3 + $0x40] sm:$0xff]
        %v659 = vld [vmem:[%s3 + $0x48] sm:$0xff]
        %v660 = vld [vmem:[%s3 + $0x50] sm:$0xff]
        %v661 = vld [vmem:[%s3 + $0x58] sm:$0xff]
        %v662 = vld [vmem:[%s3 + $0x60] sm:$0xff]
        %v663 = vld [vmem:[%s3 + $0x68] sm:$0xff]
        %v664 = vld [vmem:[%s3 + $0x70] sm:$0xff]
        %v665 = vld [vmem:[%s3 + $0x78] sm:$0xff]
        %v666 = vlaneseq
        %v667 = vshrl.u32 %v666, 7
        %v668 = vadd.s32 %v667, 8
        %v669 = vadd.s32 %v667, 16
        %v670 = vadd.s32 %v667, 24
        %v671 = vadd.s32 %v667, 32
        %v672 = vadd.s32 %v667, 40
        %v673 = vadd.s32 %v667, 48
        %v674 = vadd.s32 %v667, 56
        %v675 = vadd.s32 %v667, 64
        %v676 = vadd.s32 %v667, 72
        %v677 = vadd.s32 %v667, 80
        %v678 = vadd.s32 %v667, 88
        %v679 = vadd.s32 %v667, 96
        %v680 = vadd.s32 %v667, 104
        %v681 = vadd.s32 %v667, 112
        %v682 = vadd.s32 %v667, 120
        %v683 = vadd.s32 %v667, 128
        %v684 = vadd.s32 %v667, 136
        %v685 = vadd.s32 %v667, 144
        %v686 = vadd.s32 %v667, 152
        %v687 = vadd.s32 %v667, 160
        %v688 = vadd.s32 %v667, 168
        %v689 = vadd.s32 %v667, 176
        %v690 = vadd.s32 %v667, 184
        %v691 = vadd.s32 %v667, 192
        %v692 = vadd.s32 %v667, 200
        %v693 = vadd.s32 %v667, 208
        %v694 = vadd.s32 %v667, 216
        %v695 = vadd.s32 %v667, 224
        %v696 = vadd.s32 %v667, 232
        %v697 = vadd.s32 %v667, 240
        %v698 = vadd.s32 %v667, 248
        %s699 = smul.u32 %s26, 256
        %v700 = vstv %s699
        %v701 = vadd.s32 %v667, %v700
        %v702 = vadd.s32 %v668, %v700
        %v703 = vadd.s32 %v669, %v700
        %v704 = vadd.s32 %v670, %v700
        %v705 = vadd.s32 %v671, %v700
        %v706 = vadd.s32 %v672, %v700
        %v707 = vadd.s32 %v673, %v700
        %v708 = vadd.s32 %v674, %v700
        %v709 = vadd.s32 %v675, %v700
        %v710 = vadd.s32 %v676, %v700
        %v711 = vadd.s32 %v677, %v700
        %v712 = vadd.s32 %v678, %v700
        %v713 = vadd.s32 %v679, %v700
        %v714 = vadd.s32 %v680, %v700
        %v715 = vadd.s32 %v681, %v700
        %v716 = vadd.s32 %v682, %v700
        %v717 = vadd.s32 %v683, %v700
        %v718 = vadd.s32 %v684, %v700
        %v719 = vadd.s32 %v685, %v700
        %v720 = vadd.s32 %v686, %v700
        %v721 = vadd.s32 %v687, %v700
        %v722 = vadd.s32 %v688, %v700
        %v723 = vadd.s32 %v689, %v700
        %v724 = vadd.s32 %v690, %v700
        %v725 = vadd.s32 %v691, %v700
        %v726 = vadd.s32 %v692, %v700
        %v727 = vadd.s32 %v693, %v700
        %v728 = vadd.s32 %v694, %v700
        %v729 = vadd.s32 %v695, %v700
        %v730 = vadd.s32 %v696, %v700
        %v731 = vadd.s32 %v697, %v700
        %v732 = vadd.s32 %v698, %v700
        %v733 = vand.u32 %v701, 127
        %v734 = vand.u32 %v702, 127
        %v735 = vand.u32 %v703, 127
        %v736 = vand.u32 %v704, 127
        %v737 = vand.u32 %v705, 127
        %v738 = vand.u32 %v706, 127
        %v739 = vand.u32 %v707, 127
        %v740 = vand.u32 %v708, 127
        %v741 = vand.u32 %v709, 127
        %v742 = vand.u32 %v710, 127
        %v743 = vand.u32 %v711, 127
        %v744 = vand.u32 %v712, 127
        %v745 = vand.u32 %v713, 127
        %v746 = vand.u32 %v714, 127
        %v747 = vand.u32 %v715, 127
        %v748 = vand.u32 %v716, 127
        %v749 = vand.u32 %v717, 127
        %v750 = vand.u32 %v718, 127
        %v751 = vand.u32 %v719, 127
        %v752 = vand.u32 %v720, 127
        %v753 = vand.u32 %v721, 127
        %v754 = vand.u32 %v722, 127
        %v755 = vand.u32 %v723, 127
        %v756 = vand.u32 %v724, 127
        %v757 = vand.u32 %v725, 127
        %v758 = vand.u32 %v726, 127
        %v759 = vand.u32 %v727, 127
        %v760 = vand.u32 %v728, 127
        %v761 = vand.u32 %v729, 127
        %v762 = vand.u32 %v730, 127
        %v763 = vand.u32 %v731, 127
        %v764 = vand.u32 %v732, 127
        %vm765 = vcmp.eq.s32.totalorder %v457, %v733
        %vm766 = vcmp.eq.s32.totalorder %v457, %v734
        %vm767 = vcmp.eq.s32.totalorder %v457, %v735
        %vm768 = vcmp.eq.s32.totalorder %v457, %v736
        %vm769 = vcmp.eq.s32.totalorder %v457, %v737
        %vm770 = vcmp.eq.s32.totalorder %v457, %v738
        %vm771 = vcmp.eq.s32.totalorder %v457, %v739
        %vm772 = vcmp.eq.s32.totalorder %v457, %v740
        %vm773 = vcmp.eq.s32.totalorder %v457, %v741
        %vm774 = vcmp.eq.s32.totalorder %v457, %v742
        %vm775 = vcmp.eq.s32.totalorder %v457, %v743
        %vm776 = vcmp.eq.s32.totalorder %v457, %v744
        %vm777 = vcmp.eq.s32.totalorder %v457, %v745
        %vm778 = vcmp.eq.s32.totalorder %v457, %v746
        %vm779 = vcmp.eq.s32.totalorder %v457, %v747
        %vm780 = vcmp.eq.s32.totalorder %v457, %v748
        %vm781 = vcmp.eq.s32.totalorder %v457, %v749
        %vm782 = vcmp.eq.s32.totalorder %v457, %v750
        %vm783 = vcmp.eq.s32.totalorder %v457, %v751
        %vm784 = vcmp.eq.s32.totalorder %v457, %v752
        %vm785 = vcmp.eq.s32.totalorder %v457, %v753
        %vm786 = vcmp.eq.s32.totalorder %v457, %v754
        %vm787 = vcmp.eq.s32.totalorder %v457, %v755
        %vm788 = vcmp.eq.s32.totalorder %v457, %v756
        %vm789 = vcmp.eq.s32.totalorder %v457, %v757
        %vm790 = vcmp.eq.s32.totalorder %v457, %v758
        %vm791 = vcmp.eq.s32.totalorder %v457, %v759
        %vm792 = vcmp.eq.s32.totalorder %v457, %v760
        %vm793 = vcmp.eq.s32.totalorder %v457, %v761
        %vm794 = vcmp.eq.s32.totalorder %v457, %v762
        %vm795 = vcmp.eq.s32.totalorder %v457, %v763
        %vm796 = vcmp.eq.s32.totalorder %v457, %v764
        %v797 = vsel %vm765, 1, 0
        %v798 = vsel %vm766, 1, 0
        %v799 = vsel %vm767, 1, 0
        %v800 = vsel %vm768, 1, 0
        %v801 = vsel %vm769, 1, 0
        %v802 = vsel %vm770, 1, 0
        %v803 = vsel %vm771, 1, 0
        %v804 = vsel %vm772, 1, 0
        %v805 = vsel %vm773, 1, 0
        %v806 = vsel %vm774, 1, 0
        %v807 = vsel %vm775, 1, 0
        %v808 = vsel %vm776, 1, 0
        %v809 = vsel %vm777, 1, 0
        %v810 = vsel %vm778, 1, 0
        %v811 = vsel %vm779, 1, 0
        %v812 = vsel %vm780, 1, 0
        %v813 = vsel %vm781, 1, 0
        %v814 = vsel %vm782, 1, 0
        %v815 = vsel %vm783, 1, 0
        %v816 = vsel %vm784, 1, 0
        %v817 = vsel %vm785, 1, 0
        %v818 = vsel %vm786, 1, 0
        %v819 = vsel %vm787, 1, 0
        %v820 = vsel %vm788, 1, 0
        %v821 = vsel %vm789, 1, 0
        %v822 = vsel %vm790, 1, 0
        %v823 = vsel %vm791, 1, 0
        %v824 = vsel %vm792, 1, 0
        %v825 = vsel %vm793, 1, 0
        %v826 = vsel %vm794, 1, 0
        %v827 = vsel %vm795, 1, 0
        %v828 = vsel %vm796, 1, 0
        %v829 = vcvt.s32.f32 %v797
        %v830 = vcvt.s32.f32 %v798
        %v831 = vcvt.s32.f32 %v799
        %v832 = vcvt.s32.f32 %v800
        %v833 = vcvt.s32.f32 %v801
        %v834 = vcvt.s32.f32 %v802
        %v835 = vcvt.s32.f32 %v803
        %v836 = vcvt.s32.f32 %v804
        %v837 = vcvt.s32.f32 %v805
        %v838 = vcvt.s32.f32 %v806
        %v839 = vcvt.s32.f32 %v807
        %v840 = vcvt.s32.f32 %v808
        %v841 = vcvt.s32.f32 %v809
        %v842 = vcvt.s32.f32 %v810
        %v843 = vcvt.s32.f32 %v811
        %v844 = vcvt.s32.f32 %v812
        %v845 = vcvt.s32.f32 %v813
        %v846 = vcvt.s32.f32 %v814
        %v847 = vcvt.s32.f32 %v815
        %v848 = vcvt.s32.f32 %v816
        %v849 = vcvt.s32.f32 %v817
        %v850 = vcvt.s32.f32 %v818
        %v851 = vcvt.s32.f32 %v819
        %v852 = vcvt.s32.f32 %v820
        %v853 = vcvt.s32.f32 %v821
        %v854 = vcvt.s32.f32 %v822
        %v855 = vcvt.s32.f32 %v823
        %v856 = vcvt.s32.f32 %v824
        %v857 = vcvt.s32.f32 %v825
        %v858 = vcvt.s32.f32 %v826
        %v859 = vcvt.s32.f32 %v827
        %v860 = vcvt.s32.f32 %v828
        %v861 = vld [vmem:[%s2] sm:$0xff]
        %v862 = vld [vmem:[%s2 + $0x8] sm:$0xff]
        %v863 = vld [vmem:[%s2 + $0x10] sm:$0xff]
        %v864 = vld [vmem:[%s2 + $0x18] sm:$0xff]
        %v865 = vld [vmem:[%s2 + $0x20] sm:$0xff]
        %v866 = vld [vmem:[%s2 + $0x28] sm:$0xff]
        %v867 = vld [vmem:[%s2 + $0x30] sm:$0xff]
        %v868 = vld [vmem:[%s2 + $0x38] sm:$0xff]
        %v869 = vld [vmem:[%s2 + $0x40] sm:$0xff]
        %v870 = vld [vmem:[%s2 + $0x48] sm:$0xff]
        %v871 = vld [vmem:[%s2 + $0x50] sm:$0xff]
        %v872 = vld [vmem:[%s2 + $0x58] sm:$0xff]
        %v873 = vld [vmem:[%s2 + $0x60] sm:$0xff]
        %v874 = vld [vmem:[%s2 + $0x68] sm:$0xff]
        %v875 = vld [vmem:[%s2 + $0x70] sm:$0xff]
        %v876 = vld [vmem:[%s2 + $0x78] sm:$0xff]
        %877 = vmatprep.subr.mxu0 0.0
        %878 = vmatpush1.msra.mxu0 %v861
        %879 = vmatprep.subr.mxu0 0.0
        %880 = vmatpush1.msra.mxu0 %v862
        %881 = vmatprep.subr.mxu0 0.0
        %882 = vmatpush1.msra.mxu0 %v863
        %883 = vmatprep.subr.mxu0 0.0
        %884 = vmatpush1.msra.mxu0 %v864
        %885 = vmatprep.subr.mxu0 0.0
        %886 = vmatpush1.msra.mxu0 %v865
        %887 = vmatprep.subr.mxu0 0.0
        %888 = vmatpush1.msra.mxu0 %v866
        %889 = vmatprep.subr.mxu0 0.0
        %890 = vmatpush1.msra.mxu0 %v867
        %891 = vmatprep.subr.mxu0 0.0
        %892 = vmatpush1.msra.mxu0 %v868
        %893 = vmatprep.subr.mxu0 0.0
        %894 = vmatpush1.msra.mxu0 %v869
        %895 = vmatprep.subr.mxu0 0.0
        %896 = vmatpush1.msra.mxu0 %v870
        %897 = vmatprep.subr.mxu0 0.0
        %898 = vmatpush1.msra.mxu0 %v871
        %899 = vmatprep.subr.mxu0 0.0
        %900 = vmatpush1.msra.mxu0 %v872
        %901 = vmatprep.subr.mxu0 0.0
        %902 = vmatpush1.msra.mxu0 %v873
        %903 = vmatprep.subr.mxu0 0.0
        %904 = vmatpush1.msra.mxu0 %v874
        %905 = vmatprep.subr.mxu0 0.0
        %906 = vmatpush1.msra.mxu0 %v875
        %907 = vmatprep.subr.mxu0 0.0
        %908 = vmatpush1.msra.mxu0 %v876
        %909 = vmatprep.subr.mxu0 0.0
        %910 = vmatpush1.msra.mxu0 0.0
        %911 = vmatprep.subr.mxu0 0.0
        %912 = vmatpush1.msra.mxu0 0.0
        %913 = vmatprep.subr.mxu0 0.0
        %914 = vmatpush1.msra.mxu0 0.0
        %915 = vmatprep.subr.mxu0 0.0
        %916 = vmatpush1.msra.mxu0 0.0
        %917 = vmatprep.subr.mxu0 0.0
        %918 = vmatpush1.msra.mxu0 0.0
        %919 = vmatprep.subr.mxu0 0.0
        %920 = vmatpush1.msra.mxu0 0.0
        %921 = vmatprep.subr.mxu0 0.0
        %922 = vmatpush1.msra.mxu0 0.0
        %923 = vmatprep.subr.mxu0 0.0
        %924 = vmatpush1.msra.mxu0 0.0
        %925 = vmatprep.subr.mxu0 0.0
        %926 = vmatpush1.msra.mxu0 0.0
        %927 = vmatprep.subr.mxu0 0.0
        %928 = vmatpush1.msra.mxu0 0.0
        %929 = vmatprep.subr.mxu0 0.0
        %930 = vmatpush1.msra.mxu0 0.0
        %931 = vmatprep.subr.mxu0 0.0
        %932 = vmatpush1.msra.mxu0 0.0
        %933 = vmatprep.subr.mxu0 0.0
        %934 = vmatpush1.msra.mxu0 0.0
        %935 = vmatprep.subr.mxu0 0.0
        %936 = vmatpush1.msra.mxu0 0.0
        %937 = vmatprep.subr.mxu0 0.0
        %938 = vmatpush1.msra.mxu0 0.0
        %939 = vmatprep.subr.mxu0 0.0
        %940 = vmatpush1.msra.mxu0 0.0
        %941 = vmatprep.mubr.f32.mxu0 0.0
        %942 = vmatmul.mubr.f32.gmra.mrb[0].mxu0 %v829
        %v943 = vpop.f32.mrb[0].mxu0
        %v944 = vadd.f32 0.0, %v943
        %v945 = vpop.f32.mrb[0].mxu0
        %946 = vmatprep.mubr.f32.mxu0 0.0
        %947 = vmatmul.mubr.f32.gmra.mrb[0].mxu0 %v830
        %v948 = vpop.f32.mrb[0].mxu0
        %v949 = vadd.f32 0.0, %v948
        %v950 = vpop.f32.mrb[0].mxu0
        %951 = vmatprep.mubr.f32.mxu0 0.0
        %952 = vmatmul.mubr.f32.gmra.mrb[0].mxu0 %v831
        %v953 = vpop.f32.mrb[0].mxu0
        %v954 = vadd.f32 0.0, %v953
        %v955 = vpop.f32.mrb[0].mxu0
        %956 = vmatprep.mubr.f32.mxu0 0.0
        %957 = vmatmul.mubr.f32.gmra.mrb[0].mxu0 %v832
        %v958 = vpop.f32.mrb[0].mxu0
        %v959 = vadd.f32 0.0, %v958
        %v960 = vpop.f32.mrb[0].mxu0
        %961 = vmatprep.mubr.f32.mxu0 0.0
        %962 = vmatmul.mubr.f32.gmra.mrb[0].mxu0 %v833
        %v963 = vpop.f32.mrb[0].mxu0
        %v964 = vadd.f32 0.0, %v963
        %v965 = vpop.f32.mrb[0].mxu0
        %966 = vmatprep.mubr.f32.mxu0 0.0
        %967 = vmatmul.mubr.f32.gmra.mrb[0].mxu0 %v834
        %v968 = vpop.f32.mrb[0].mxu0
        %v969 = vadd.f32 0.0, %v968
        %v970 = vpop.f32.mrb[0].mxu0
        %971 = vmatprep.mubr.f32.mxu0 0.0
        %972 = vmatmul.mubr.f32.gmra.mrb[0].mxu0 %v835
        %v973 = vpop.f32.mrb[0].mxu0
        %v974 = vadd.f32 0.0, %v973
        %v975 = vpop.f32.mrb[0].mxu0
        %976 = vmatprep.mubr.f32.mxu0 0.0
        %977 = vmatmul.mubr.f32.gmra.mrb[0].mxu0 %v836
        %v978 = vpop.f32.mrb[0].mxu0
        %v979 = vadd.f32 0.0, %v978
        %v980 = vpop.f32.mrb[0].mxu0
        %981 = vmatprep.mubr.f32.mxu0 0.0
        %982 = vmatmul.mubr.f32.gmra.mrb[0].mxu0 %v837
        %v983 = vpop.f32.mrb[0].mxu0
        %v984 = vadd.f32 0.0, %v983
        %v985 = vpop.f32.mrb[0].mxu0
        %986 = vmatprep.mubr.f32.mxu0 0.0
        %987 = vmatmul.mubr.f32.gmra.mrb[0].mxu0 %v838
        %v988 = vpop.f32.mrb[0].mxu0
        %v989 = vadd.f32 0.0, %v988
        %v990 = vpop.f32.mrb[0].mxu0
        %991 = vmatprep.mubr.f32.mxu0 0.0
        %992 = vmatmul.mubr.f32.gmra.mrb[0].mxu0 %v839
        %v993 = vpop.f32.mrb[0].mxu0
        %v994 = vadd.f32 0.0, %v993
        %v995 = vpop.f32.mrb[0].mxu0
        %996 = vmatprep.mubr.f32.mxu0 0.0
        %997 = vmatmul.mubr.f32.gmra.mrb[0].mxu0 %v840
        %v998 = vpop.f32.mrb[0].mxu0
        %v999 = vadd.f32 0.0, %v998
        %v1000 = vpop.f32.mrb[0].mxu0
        %1001 = vmatprep.mubr.f32.mxu0 0.0
        %1002 = vmatmul.mubr.f32.gmra.mrb[0].mxu0 %v841
        %v1003 = vpop.f32.mrb[0].mxu0
        %v1004 = vadd.f32 0.0, %v1003
        %v1005 = vpop.f32.mrb[0].mxu0
        %1006 = vmatprep.mubr.f32.mxu0 0.0
        %1007 = vmatmul.mubr.f32.gmra.mrb[0].mxu0 %v842
        %v1008 = vpop.f32.mrb[0].mxu0
        %v1009 = vadd.f32 0.0, %v1008
        %v1010 = vpop.f32.mrb[0].mxu0
        %1011 = vmatprep.mubr.f32.mxu0 0.0
        %1012 = vmatmul.mubr.f32.gmra.mrb[0].mxu0 %v843
        %v1013 = vpop.f32.mrb[0].mxu0
        %v1014 = vadd.f32 0.0, %v1013
        %v1015 = vpop.f32.mrb[0].mxu0
        %1016 = vmatprep.mubr.f32.mxu0 0.0
        %1017 = vmatmul.mubr.f32.gmra.mrb[0].mxu0 %v844
        %v1018 = vpop.f32.mrb[0].mxu0
        %v1019 = vadd.f32 0.0, %v1018
        %v1020 = vpop.f32.mrb[0].mxu0
        %1021 = vmatprep.mubr.f32.mxu0 0.0
        %1022 = vmatmul.mubr.f32.gmra.mrb[0].mxu0 %v845
        %v1023 = vpop.f32.mrb[0].mxu0
        %v1024 = vadd.f32 0.0, %v1023
        %v1025 = vpop.f32.mrb[0].mxu0
        %1026 = vmatprep.mubr.f32.mxu0 0.0
        %1027 = vmatmul.mubr.f32.gmra.mrb[0].mxu0 %v846
        %v1028 = vpop.f32.mrb[0].mxu0
        %v1029 = vadd.f32 0.0, %v1028
        %v1030 = vpop.f32.mrb[0].mxu0
        %1031 = vmatprep.mubr.f32.mxu0 0.0
        %1032 = vmatmul.mubr.f32.gmra.mrb[0].mxu0 %v847
        %v1033 = vpop.f32.mrb[0].mxu0
        %v1034 = vadd.f32 0.0, %v1033
        %v1035 = vpop.f32.mrb[0].mxu0
        %1036 = vmatprep.mubr.f32.mxu0 0.0
        %1037 = vmatmul.mubr.f32.gmra.mrb[0].mxu0 %v848
        %v1038 = vpop.f32.mrb[0].mxu0
        %v1039 = vadd.f32 0.0, %v1038
        %v1040 = vpop.f32.mrb[0].mxu0
        %1041 = vmatprep.mubr.f32.mxu0 0.0
        %1042 = vmatmul.mubr.f32.gmra.mrb[0].mxu0 %v849
        %v1043 = vpop.f32.mrb[0].mxu0
        %v1044 = vadd.f32 0.0, %v1043
        %v1045 = vpop.f32.mrb[0].mxu0
        %1046 = vmatprep.mubr.f32.mxu0 0.0
        %1047 = vmatmul.mubr.f32.gmra.mrb[0].mxu0 %v850
        %v1048 = vpop.f32.mrb[0].mxu0
        %v1049 = vadd.f32 0.0, %v1048
        %v1050 = vpop.f32.mrb[0].mxu0
        %1051 = vmatprep.mubr.f32.mxu0 0.0
        %1052 = vmatmul.mubr.f32.gmra.mrb[0].mxu0 %v851
        %v1053 = vpop.f32.mrb[0].mxu0
        %v1054 = vadd.f32 0.0, %v1053
        %v1055 = vpop.f32.mrb[0].mxu0
        %1056 = vmatprep.mubr.f32.mxu0 0.0
        %1057 = vmatmul.mubr.f32.gmra.mrb[0].mxu0 %v852
        %v1058 = vpop.f32.mrb[0].mxu0
        %v1059 = vadd.f32 0.0, %v1058
        %v1060 = vpop.f32.mrb[0].mxu0
        %1061 = vmatprep.mubr.f32.mxu0 0.0
        %1062 = vmatmul.mubr.f32.gmra.mrb[0].mxu0 %v853
        %v1063 = vpop.f32.mrb[0].mxu0
        %v1064 = vadd.f32 0.0, %v1063
        %v1065 = vpop.f32.mrb[0].mxu0
        %1066 = vmatprep.mubr.f32.mxu0 0.0
        %1067 = vmatmul.mubr.f32.gmra.mrb[0].mxu0 %v854
        %v1068 = vpop.f32.mrb[0].mxu0
        %v1069 = vadd.f32 0.0, %v1068
        %v1070 = vpop.f32.mrb[0].mxu0
        %1071 = vmatprep.mubr.f32.mxu0 0.0
        %1072 = vmatmul.mubr.f32.gmra.mrb[0].mxu0 %v855
        %v1073 = vpop.f32.mrb[0].mxu0
        %v1074 = vadd.f32 0.0, %v1073
        %v1075 = vpop.f32.mrb[0].mxu0
        %1076 = vmatprep.mubr.f32.mxu0 0.0
        %1077 = vmatmul.mubr.f32.gmra.mrb[0].mxu0 %v856
        %v1078 = vpop.f32.mrb[0].mxu0
        %v1079 = vadd.f32 0.0, %v1078
        %v1080 = vpop.f32.mrb[0].mxu0
        %1081 = vmatprep.mubr.f32.mxu0 0.0
        %1082 = vmatmul.mubr.f32.gmra.mrb[0].mxu0 %v857
        %v1083 = vpop.f32.mrb[0].mxu0
        %v1084 = vadd.f32 0.0, %v1083
        %v1085 = vpop.f32.mrb[0].mxu0
        %1086 = vmatprep.mubr.f32.mxu0 0.0
        %1087 = vmatmul.mubr.f32.gmra.mrb[0].mxu0 %v858
        %v1088 = vpop.f32.mrb[0].mxu0
        %v1089 = vadd.f32 0.0, %v1088
        %v1090 = vpop.f32.mrb[0].mxu0
        %1091 = vmatprep.mubr.f32.mxu0 0.0
        %1092 = vmatmul.mubr.f32.gmra.mrb[0].mxu0 %v859
        %v1093 = vpop.f32.mrb[0].mxu0
        %v1094 = vadd.f32 0.0, %v1093
        %v1095 = vpop.f32.mrb[0].mxu0
        %1096 = vmatprep.mubr.f32.mxu0 0.0
        %1097 = vmatmul.mubr.f32.gmra.mrb[0].mxu0 %v860
        %v1098 = vpop.f32.mrb[0].mxu0
        %v1099 = vadd.f32 0.0, %v1098
        %v1100 = vpop.f32.mrb[0].mxu0
        %1101 = vdwg.mxu0
        %1102 = vmatprep.subr.mxu0 0.0
        %1103 = vmatpush1.msra.mxu0 %v650
        %1104 = vmatprep.subr.mxu0 0.0
        %1105 = vmatpush1.msra.mxu0 %v651
        %1106 = vmatprep.subr.mxu0 0.0
        %1107 = vmatpush1.msra.mxu0 %v652
        %1108 = vmatprep.subr.mxu0 0.0
        %1109 = vmatpush1.msra.mxu0 %v653
        %1110 = vmatprep.subr.mxu0 0.0
        %1111 = vmatpush1.msra.mxu0 %v654
        %1112 = vmatprep.subr.mxu0 0.0
        %1113 = vmatpush1.msra.mxu0 %v655
        %1114 = vmatprep.subr.mxu0 0.0
        %1115 = vmatpush1.msra.mxu0 %v656
        %1116 = vmatprep.subr.mxu0 0.0
        %1117 = vmatpush1.msra.mxu0 %v657
        %1118 = vmatprep.subr.mxu0 0.0
        %1119 = vmatpush1.msra.mxu0 %v658
        %1120 = vmatprep.subr.mxu0 0.0
        %1121 = vmatpush1.msra.mxu0 %v659
        %1122 = vmatprep.subr.mxu0 0.0
        %1123 = vmatpush1.msra.mxu0 %v660
        %1124 = vmatprep.subr.mxu0 0.0
        %1125 = vmatpush1.msra.mxu0 %v661
        %1126 = vmatprep.subr.mxu0 0.0
        %1127 = vmatpush1.msra.mxu0 %v662
        %1128 = vmatprep.subr.mxu0 0.0
        %1129 = vmatpush1.msra.mxu0 %v663
        %1130 = vmatprep.subr.mxu0 0.0
        %1131 = vmatpush1.msra.mxu0 %v664
        %1132 = vmatprep.subr.mxu0 0.0
        %1133 = vmatpush1.msra.mxu0 %v665
        %1134 = vmatprep.subr.mxu0 0.0
        %1135 = vmatpush1.msra.mxu0 0.0
        %1136 = vmatprep.subr.mxu0 0.0
        %1137 = vmatpush1.msra.mxu0 0.0
        %1138 = vmatprep.subr.mxu0 0.0
        %1139 = vmatpush1.msra.mxu0 0.0
        %1140 = vmatprep.subr.mxu0 0.0
        %1141 = vmatpush1.msra.mxu0 0.0
        %1142 = vmatprep.subr.mxu0 0.0
        %1143 = vmatpush1.msra.mxu0 0.0
        %1144 = vmatprep.subr.mxu0 0.0
        %1145 = vmatpush1.msra.mxu0 0.0
        %1146 = vmatprep.subr.mxu0 0.0
        %1147 = vmatpush1.msra.mxu0 0.0
        %1148 = vmatprep.subr.mxu0 0.0
        %1149 = vmatpush1.msra.mxu0 0.0
        %1150 = vmatprep.subr.mxu0 0.0
        %1151 = vmatpush1.msra.mxu0 0.0
        %1152 = vmatprep.subr.mxu0 0.0
        %1153 = vmatpush1.msra.mxu0 0.0
        %1154 = vmatprep.subr.mxu0 0.0
        %1155 = vmatpush1.msra.mxu0 0.0
        %1156 = vmatprep.subr.mxu0 0.0
        %1157 = vmatpush1.msra.mxu0 0.0
        %1158 = vmatprep.subr.mxu0 0.0
        %1159 = vmatpush1.msra.mxu0 0.0
        %1160 = vmatprep.subr.mxu0 0.0
        %1161 = vmatpush1.msra.mxu0 0.0
        %1162 = vmatprep.subr.mxu0 0.0
        %1163 = vmatpush1.msra.mxu0 0.0
        %1164 = vmatprep.subr.mxu0 0.0
        %1165 = vmatpush1.msra.mxu0 0.0
        %1166 = vmatprep.mubr.f32.mxu0 0.0
        %1167 = vmatmul.mubr.f32.gmra.mrb[0].mxu0 %v618
        %v1168 = vpop.f32.mrb[0].mxu0
        %v1169 = vadd.f32 %v944, %v1168
        %v1170 = vpop.f32.mrb[0].mxu0
        %1171 = vmatprep.mubr.f32.mxu0 0.0
        %1172 = vmatmul.mubr.f32.gmra.mrb[0].mxu0 %v619
        %v1173 = vpop.f32.mrb[0].mxu0
        %v1174 = vadd.f32 %v949, %v1173
        %v1175 = vpop.f32.mrb[0].mxu0
        %1176 = vmatprep.mubr.f32.mxu0 0.0
        %1177 = vmatmul.mubr.f32.gmra.mrb[0].mxu0 %v620
        %v1178 = vpop.f32.mrb[0].mxu0
        %v1179 = vadd.f32 %v954, %v1178
        %v1180 = vpop.f32.mrb[0].mxu0
        %1181 = vmatprep.mubr.f32.mxu0 0.0
        %1182 = vmatmul.mubr.f32.gmra.mrb[0].mxu0 %v621
        %v1183 = vpop.f32.mrb[0].mxu0
        %v1184 = vadd.f32 %v959, %v1183
        %v1185 = vpop.f32.mrb[0].mxu0
        %1186 = vmatprep.mubr.f32.mxu0 0.0
        %1187 = vmatmul.mubr.f32.gmra.mrb[0].mxu0 %v622
        %v1188 = vpop.f32.mrb[0].mxu0
        %v1189 = vadd.f32 %v964, %v1188
        %v1190 = vpop.f32.mrb[0].mxu0
        %1191 = vmatprep.mubr.f32.mxu0 0.0
        %1192 = vmatmul.mubr.f32.gmra.mrb[0].mxu0 %v623
        %v1193 = vpop.f32.mrb[0].mxu0
        %v1194 = vadd.f32 %v969, %v1193
        %v1195 = vpop.f32.mrb[0].mxu0
        %1196 = vmatprep.mubr.f32.mxu0 0.0
        %1197 = vmatmul.mubr.f32.gmra.mrb[0].mxu0 %v624
        %v1198 = vpop.f32.mrb[0].mxu0
        %v1199 = vadd.f32 %v974, %v1198
        %v1200 = vpop.f32.mrb[0].mxu0
        %1201 = vmatprep.mubr.f32.mxu0 0.0
        %1202 = vmatmul.mubr.f32.gmra.mrb[0].mxu0 %v625
        %v1203 = vpop.f32.mrb[0].mxu0
        %v1204 = vadd.f32 %v979, %v1203
        %v1205 = vpop.f32.mrb[0].mxu0
        %1206 = vmatprep.mubr.f32.mxu0 0.0
        %1207 = vmatmul.mubr.f32.gmra.mrb[0].mxu0 %v626
        %v1208 = vpop.f32.mrb[0].mxu0
        %v1209 = vadd.f32 %v984, %v1208
        %v1210 = vpop.f32.mrb[0].mxu0
        %1211 = vmatprep.mubr.f32.mxu0 0.0
        %1212 = vmatmul.mubr.f32.gmra.mrb[0].mxu0 %v627
        %v1213 = vpop.f32.mrb[0].mxu0
        %v1214 = vadd.f32 %v989, %v1213
        %v1215 = vpop.f32.mrb[0].mxu0
        %1216 = vmatprep.mubr.f32.mxu0 0.0
        %1217 = vmatmul.mubr.f32.gmra.mrb[0].mxu0 %v628
        %v1218 = vpop.f32.mrb[0].mxu0
        %v1219 = vadd.f32 %v994, %v1218
        %v1220 = vpop.f32.mrb[0].mxu0
        %1221 = vmatprep.mubr.f32.mxu0 0.0
        %1222 = vmatmul.mubr.f32.gmra.mrb[0].mxu0 %v629
        %v1223 = vpop.f32.mrb[0].mxu0
        %v1224 = vadd.f32 %v999, %v1223
        %v1225 = vpop.f32.mrb[0].mxu0
        %1226 = vmatprep.mubr.f32.mxu0 0.0
        %1227 = vmatmul.mubr.f32.gmra.mrb[0].mxu0 %v630
        %v1228 = vpop.f32.mrb[0].mxu0
        %v1229 = vadd.f32 %v1004, %v1228
        %v1230 = vpop.f32.mrb[0].mxu0
        %1231 = vmatprep.mubr.f32.mxu0 0.0
        %1232 = vmatmul.mubr.f32.gmra.mrb[0].mxu0 %v631
        %v1233 = vpop.f32.mrb[0].mxu0
        %v1234 = vadd.f32 %v1009, %v1233
        %v1235 = vpop.f32.mrb[0].mxu0
        %1236 = vmatprep.mubr.f32.mxu0 0.0
        %1237 = vmatmul.mubr.f32.gmra.mrb[0].mxu0 %v632
        %v1238 = vpop.f32.mrb[0].mxu0
        %v1239 = vadd.f32 %v1014, %v1238
        %v1240 = vpop.f32.mrb[0].mxu0
        %1241 = vmatprep.mubr.f32.mxu0 0.0
        %1242 = vmatmul.mubr.f32.gmra.mrb[0].mxu0 %v633
        %v1243 = vpop.f32.mrb[0].mxu0
        %v1244 = vadd.f32 %v1019, %v1243
        %v1245 = vpop.f32.mrb[0].mxu0
        %1246 = vmatprep.mubr.f32.mxu0 0.0
        %1247 = vmatmul.mubr.f32.gmra.mrb[0].mxu0 %v634
        %v1248 = vpop.f32.mrb[0].mxu0
        %v1249 = vadd.f32 %v1024, %v1248
        %v1250 = vpop.f32.mrb[0].mxu0
        %1251 = vmatprep.mubr.f32.mxu0 0.0
        %1252 = vmatmul.mubr.f32.gmra.mrb[0].mxu0 %v635
        %v1253 = vpop.f32.mrb[0].mxu0
        %v1254 = vadd.f32 %v1029, %v1253
        %v1255 = vpop.f32.mrb[0].mxu0
        %1256 = vmatprep.mubr.f32.mxu0 0.0
        %1257 = vmatmul.mubr.f32.gmra.mrb[0].mxu0 %v636
        %v1258 = vpop.f32.mrb[0].mxu0
        %v1259 = vadd.f32 %v1034, %v1258
        %v1260 = vpop.f32.mrb[0].mxu0
        %1261 = vmatprep.mubr.f32.mxu0 0.0
        %1262 = vmatmul.mubr.f32.gmra.mrb[0].mxu0 %v637
        %v1263 = vpop.f32.mrb[0].mxu0
        %v1264 = vadd.f32 %v1039, %v1263
        %v1265 = vpop.f32.mrb[0].mxu0
        %1266 = vmatprep.mubr.f32.mxu0 0.0
        %1267 = vmatmul.mubr.f32.gmra.mrb[0].mxu0 %v638
        %v1268 = vpop.f32.mrb[0].mxu0
        %v1269 = vadd.f32 %v1044, %v1268
        %v1270 = vpop.f32.mrb[0].mxu0
        %1271 = vmatprep.mubr.f32.mxu0 0.0
        %1272 = vmatmul.mubr.f32.gmra.mrb[0].mxu0 %v639
        %v1273 = vpop.f32.mrb[0].mxu0
        %v1274 = vadd.f32 %v1049, %v1273
        %v1275 = vpop.f32.mrb[0].mxu0
        %1276 = vmatprep.mubr.f32.mxu0 0.0
        %1277 = vmatmul.mubr.f32.gmra.mrb[0].mxu0 %v640
        %v1278 = vpop.f32.mrb[0].mxu0
        %v1279 = vadd.f32 %v1054, %v1278
        %v1280 = vpop.f32.mrb[0].mxu0
        %1281 = vmatprep.mubr.f32.mxu0 0.0
        %1282 = vmatmul.mubr.f32.gmra.mrb[0].mxu0 %v641
        %v1283 = vpop.f32.mrb[0].mxu0
        %v1284 = vadd.f32 %v1059, %v1283
        %v1285 = vpop.f32.mrb[0].mxu0
        %1286 = vmatprep.mubr.f32.mxu0 0.0
        %1287 = vmatmul.mubr.f32.gmra.mrb[0].mxu0 %v642
        %v1288 = vpop.f32.mrb[0].mxu0
        %v1289 = vadd.f32 %v1064, %v1288
        %v1290 = vpop.f32.mrb[0].mxu0
        %1291 = vmatprep.mubr.f32.mxu0 0.0
        %1292 = vmatmul.mubr.f32.gmra.mrb[0].mxu0 %v643
        %v1293 = vpop.f32.mrb[0].mxu0
        %v1294 = vadd.f32 %v1069, %v1293
        %v1295 = vpop.f32.mrb[0].mxu0
        %1296 = vmatprep.mubr.f32.mxu0 0.0
        %1297 = vmatmul.mubr.f32.gmra.mrb[0].mxu0 %v644
        %v1298 = vpop.f32.mrb[0].mxu0
        %v1299 = vadd.f32 %v1074, %v1298
        %v1300 = vpop.f32.mrb[0].mxu0
        %1301 = vmatprep.mubr.f32.mxu0 0.0
        %1302 = vmatmul.mubr.f32.gmra.mrb[0].mxu0 %v645
        %v1303 = vpop.f32.mrb[0].mxu0
        %v1304 = vadd.f32 %v1079, %v1303
        %v1305 = vpop.f32.mrb[0].mxu0
        %1306 = vmatprep.mubr.f32.mxu0 0.0
        %1307 = vmatmul.mubr.f32.gmra.mrb[0].mxu0 %v646
        %v1308 = vpop.f32.mrb[0].mxu0
        %v1309 = vadd.f32 %v1084, %v1308
        %v1310 = vpop.f32.mrb[0].mxu0
        %1311 = vmatprep.mubr.f32.mxu0 0.0
        %1312 = vmatmul.mubr.f32.gmra.mrb[0].mxu0 %v647
        %v1313 = vpop.f32.mrb[0].mxu0
        %v1314 = vadd.f32 %v1089, %v1313
        %v1315 = vpop.f32.mrb[0].mxu0
        %1316 = vmatprep.mubr.f32.mxu0 0.0
        %1317 = vmatmul.mubr.f32.gmra.mrb[0].mxu0 %v648
        %v1318 = vpop.f32.mrb[0].mxu0
        %v1319 = vadd.f32 %v1094, %v1318
        %v1320 = vpop.f32.mrb[0].mxu0
        %1321 = vmatprep.mubr.f32.mxu0 0.0
        %1322 = vmatmul.mubr.f32.gmra.mrb[0].mxu0 %v649
        %v1323 = vpop.f32.mrb[0].mxu0
        %v1324 = vadd.f32 %v1099, %v1323
        %v1325 = vpop.f32.mrb[0].mxu0
        %1326 = vdwg.mxu0
        %v1327 = vld [vmem:[%s4] sm:$0xff]
        %v1328 = vld [vmem:[%s4 + $0x8] sm:$0xff]
        %v1329 = vld [vmem:[%s4 + $0x10] sm:$0xff]
        %v1330 = vld [vmem:[%s4 + $0x18] sm:$0xff]
        %v1331 = vld [vmem:[%s5] sm:$0x1]
        %v1333 = vlaneseq
        %v1334 = vshrl.u32 %v1333, 7
        %v1335 = vsub.s32 0, %v1334
        %v1336 = vrot.slane %v1331, %v1335
        %vm1338 = vcmask 261120
        %v1340 = vsel %vm1338, %v1169, 0
        %v1343 = vsel %vm1338, %v1174, 0
        %v1346 = vsel %vm1338, %v1179, 0
        %v1349 = vsel %vm1338, %v1184, 0
        %v1352 = vsel %vm1338, %v1189, 0
        %v1355 = vsel %vm1338, %v1194, 0
        %v1358 = vsel %vm1338, %v1199, 0
        %v1361 = vsel %vm1338, %v1204, 0
        %v1364 = vsel %vm1338, %v1209, 0
        %v1367 = vsel %vm1338, %v1214, 0
        %v1370 = vsel %vm1338, %v1219, 0
        %v1373 = vsel %vm1338, %v1224, 0
        %v1376 = vsel %vm1338, %v1229, 0
        %v1379 = vsel %vm1338, %v1234, 0
        %v1382 = vsel %vm1338, %v1239, 0
        %v1385 = vsel %vm1338, %v1244, 0
        %v1388 = vsel %vm1338, %v1249, 0
        %v1391 = vsel %vm1338, %v1254, 0
        %v1394 = vsel %vm1338, %v1259, 0
        %v1397 = vsel %vm1338, %v1264, 0
        %v1400 = vsel %vm1338, %v1269, 0
        %v1403 = vsel %vm1338, %v1274, 0
        %v1406 = vsel %vm1338, %v1279, 0
        %v1409 = vsel %vm1338, %v1284, 0
        %v1412 = vsel %vm1338, %v1289, 0
        %v1415 = vsel %vm1338, %v1294, 0
        %v1418 = vsel %vm1338, %v1299, 0
        %v1421 = vsel %vm1338, %v1304, 0
        %v1424 = vsel %vm1338, %v1309, 0
        %v1427 = vsel %vm1338, %v1314, 0
        %v1430 = vsel %vm1338, %v1319, 0
        %v1433 = vsel %vm1338, %v1324, 0
        %1435 = vmatprep.subr.mxu0 0.0
        %1436 = vmatpush1.msra.mxu0 %v1327
        %1437 = vmatprep.subr.mxu0 0.0
        %1438 = vmatpush1.msra.mxu0 %v1328
        %1439 = vmatprep.subr.mxu0 0.0
        %1440 = vmatpush1.msra.mxu0 %v1329
        %1441 = vmatprep.subr.mxu0 0.0
        %1442 = vmatpush1.msra.mxu0 %v1330
        %1443 = vmatprep.subr.mxu0 0.0
        %1444 = vmatpush1.msra.mxu0 0.0
        %1445 = vmatprep.subr.mxu0 0.0
        %1446 = vmatpush1.msra.mxu0 0.0
        %1447 = vmatprep.subr.mxu0 0.0
        %1448 = vmatpush1.msra.mxu0 0.0
        %1449 = vmatprep.subr.mxu0 0.0
        %1450 = vmatpush1.msra.mxu0 0.0
        %1451 = vmatprep.subr.mxu0 0.0
        %1452 = vmatpush1.msra.mxu0 0.0
        %1453 = vmatprep.subr.mxu0 0.0
        %1454 = vmatpush1.msra.mxu0 0.0
        %1455 = vmatprep.subr.mxu0 0.0
        %1456 = vmatpush1.msra.mxu0 0.0
        %1457 = vmatprep.subr.mxu0 0.0
        %1458 = vmatpush1.msra.mxu0 0.0
        %1459 = vmatprep.subr.mxu0 0.0
        %1460 = vmatpush1.msra.mxu0 0.0
        %1461 = vmatprep.subr.mxu0 0.0
        %1462 = vmatpush1.msra.mxu0 0.0
        %1463 = vmatprep.subr.mxu0 0.0
        %1464 = vmatpush1.msra.mxu0 0.0
        %1465 = vmatprep.subr.mxu0 0.0
        %1466 = vmatpush1.msra.mxu0 0.0
        %1467 = vmatprep.subr.mxu0 0.0
        %1468 = vmatpush1.msra.mxu0 0.0
        %1469 = vmatprep.subr.mxu0 0.0
        %1470 = vmatpush1.msra.mxu0 0.0
        %1471 = vmatprep.subr.mxu0 0.0
        %1472 = vmatpush1.msra.mxu0 0.0
        %1473 = vmatprep.subr.mxu0 0.0
        %1474 = vmatpush1.msra.mxu0 0.0
        %1475 = vmatprep.subr.mxu0 0.0
        %1476 = vmatpush1.msra.mxu0 0.0
        %1477 = vmatprep.subr.mxu0 0.0
        %1478 = vmatpush1.msra.mxu0 0.0
        %1479 = vmatprep.subr.mxu0 0.0
        %1480 = vmatpush1.msra.mxu0 0.0
        %1481 = vmatprep.subr.mxu0 0.0
        %1482 = vmatpush1.msra.mxu0 0.0
        %1483 = vmatprep.subr.mxu0 0.0
        %1484 = vmatpush1.msra.mxu0 0.0
        %1485 = vmatprep.subr.mxu0 0.0
        %1486 = vmatpush1.msra.mxu0 0.0
        %1487 = vmatprep.subr.mxu0 0.0
        %1488 = vmatpush1.msra.mxu0 0.0
        %1489 = vmatprep.subr.mxu0 0.0
        %1490 = vmatpush1.msra.mxu0 0.0
        %1491 = vmatprep.subr.mxu0 0.0
        %1492 = vmatpush1.msra.mxu0 0.0
        %1493 = vmatprep.subr.mxu0 0.0
        %1494 = vmatpush1.msra.mxu0 0.0
        %1495 = vmatprep.subr.mxu0 0.0
        %1496 = vmatpush1.msra.mxu0 0.0
        %1497 = vmatprep.subr.mxu0 0.0
        %1498 = vmatpush1.msra.mxu0 0.0
        %1499 = vmatprep.mubr.f32.mxu0 0.0
        %1500 = vmatmul.mubr.f32.gmra.mrb[0].mxu0 %v1340
        %v1501 = vpop.f32.mrb[0].mxu0
        %v1502 = vadd.f32 %v1336, %v1501
        %v1503 = vpop.f32.mrb[0].mxu0
        %1504 = vmatprep.mubr.f32.mxu0 0.0
        %1505 = vmatmul.mubr.f32.gmra.mrb[0].mxu0 %v1343
        %v1506 = vpop.f32.mrb[0].mxu0
        %v1507 = vadd.f32 %v1336, %v1506
        %v1508 = vpop.f32.mrb[0].mxu0
        %1509 = vmatprep.mubr.f32.mxu0 0.0
        %1510 = vmatmul.mubr.f32.gmra.mrb[0].mxu0 %v1346
        %v1511 = vpop.f32.mrb[0].mxu0
        %v1512 = vadd.f32 %v1336, %v1511
        %v1513 = vpop.f32.mrb[0].mxu0
        %1514 = vmatprep.mubr.f32.mxu0 0.0
        %1515 = vmatmul.mubr.f32.gmra.mrb[0].mxu0 %v1349
        %v1516 = vpop.f32.mrb[0].mxu0
        %v1517 = vadd.f32 %v1336, %v1516
        %v1518 = vpop.f32.mrb[0].mxu0
        %1519 = vmatprep.mubr.f32.mxu0 0.0
        %1520 = vmatmul.mubr.f32.gmra.mrb[0].mxu0 %v1352
        %v1521 = vpop.f32.mrb[0].mxu0
        %v1522 = vadd.f32 %v1336, %v1521
        %v1523 = vpop.f32.mrb[0].mxu0
        %1524 = vmatprep.mubr.f32.mxu0 0.0
        %1525 = vmatmul.mubr.f32.gmra.mrb[0].mxu0 %v1355
        %v1526 = vpop.f32.mrb[0].mxu0
        %v1527 = vadd.f32 %v1336, %v1526
        %v1528 = vpop.f32.mrb[0].mxu0
        %1529 = vmatprep.mubr.f32.mxu0 0.0
        %1530 = vmatmul.mubr.f32.gmra.mrb[0].mxu0 %v1358
        %v1531 = vpop.f32.mrb[0].mxu0
        %v1532 = vadd.f32 %v1336, %v1531
        %v1533 = vpop.f32.mrb[0].mxu0
        %1534 = vmatprep.mubr.f32.mxu0 0.0
        %1535 = vmatmul.mubr.f32.gmra.mrb[0].mxu0 %v1361
        %v1536 = vpop.f32.mrb[0].mxu0
        %v1537 = vadd.f32 %v1336, %v1536
        %v1538 = vpop.f32.mrb[0].mxu0
        %1539 = vmatprep.mubr.f32.mxu0 0.0
        %1540 = vmatmul.mubr.f32.gmra.mrb[0].mxu0 %v1364
        %v1541 = vpop.f32.mrb[0].mxu0
        %v1542 = vadd.f32 %v1336, %v1541
        %v1543 = vpop.f32.mrb[0].mxu0
        %1544 = vmatprep.mubr.f32.mxu0 0.0
        %1545 = vmatmul.mubr.f32.gmra.mrb[0].mxu0 %v1367
        %v1546 = vpop.f32.mrb[0].mxu0
        %v1547 = vadd.f32 %v1336, %v1546
        %v1548 = vpop.f32.mrb[0].mxu0
        %1549 = vmatprep.mubr.f32.mxu0 0.0
        %1550 = vmatmul.mubr.f32.gmra.mrb[0].mxu0 %v1370
        %v1551 = vpop.f32.mrb[0].mxu0
        %v1552 = vadd.f32 %v1336, %v1551
        %v1553 = vpop.f32.mrb[0].mxu0
        %1554 = vmatprep.mubr.f32.mxu0 0.0
        %1555 = vmatmul.mubr.f32.gmra.mrb[0].mxu0 %v1373
        %v1556 = vpop.f32.mrb[0].mxu0
        %v1557 = vadd.f32 %v1336, %v1556
        %v1558 = vpop.f32.mrb[0].mxu0
        %1559 = vmatprep.mubr.f32.mxu0 0.0
        %1560 = vmatmul.mubr.f32.gmra.mrb[0].mxu0 %v1376
        %v1561 = vpop.f32.mrb[0].mxu0
        %v1562 = vadd.f32 %v1336, %v1561
        %v1563 = vpop.f32.mrb[0].mxu0
        %1564 = vmatprep.mubr.f32.mxu0 0.0
        %1565 = vmatmul.mubr.f32.gmra.mrb[0].mxu0 %v1379
        %v1566 = vpop.f32.mrb[0].mxu0
        %v1567 = vadd.f32 %v1336, %v1566
        %v1568 = vpop.f32.mrb[0].mxu0
        %1569 = vmatprep.mubr.f32.mxu0 0.0
        %1570 = vmatmul.mubr.f32.gmra.mrb[0].mxu0 %v1382
        %v1571 = vpop.f32.mrb[0].mxu0
        %v1572 = vadd.f32 %v1336, %v1571
        %v1573 = vpop.f32.mrb[0].mxu0
        %1574 = vmatprep.mubr.f32.mxu0 0.0
        %1575 = vmatmul.mubr.f32.gmra.mrb[0].mxu0 %v1385
        %v1576 = vpop.f32.mrb[0].mxu0
        %v1577 = vadd.f32 %v1336, %v1576
        %v1578 = vpop.f32.mrb[0].mxu0
        %1579 = vmatprep.mubr.f32.mxu0 0.0
        %1580 = vmatmul.mubr.f32.gmra.mrb[0].mxu0 %v1388
        %v1581 = vpop.f32.mrb[0].mxu0
        %v1582 = vadd.f32 %v1336, %v1581
        %v1583 = vpop.f32.mrb[0].mxu0
        %1584 = vmatprep.mubr.f32.mxu0 0.0
        %1585 = vmatmul.mubr.f32.gmra.mrb[0].mxu0 %v1391
        %v1586 = vpop.f32.mrb[0].mxu0
        %v1587 = vadd.f32 %v1336, %v1586
        %v1588 = vpop.f32.mrb[0].mxu0
        %1589 = vmatprep.mubr.f32.mxu0 0.0
        %1590 = vmatmul.mubr.f32.gmra.mrb[0].mxu0 %v1394
        %v1591 = vpop.f32.mrb[0].mxu0
        %v1592 = vadd.f32 %v1336, %v1591
        %v1593 = vpop.f32.mrb[0].mxu0
        %1594 = vmatprep.mubr.f32.mxu0 0.0
        %1595 = vmatmul.mubr.f32.gmra.mrb[0].mxu0 %v1397
        %v1596 = vpop.f32.mrb[0].mxu0
        %v1597 = vadd.f32 %v1336, %v1596
        %v1598 = vpop.f32.mrb[0].mxu0
        %1599 = vmatprep.mubr.f32.mxu0 0.0
        %1600 = vmatmul.mubr.f32.gmra.mrb[0].mxu0 %v1400
        %v1601 = vpop.f32.mrb[0].mxu0
        %v1602 = vadd.f32 %v1336, %v1601
        %v1603 = vpop.f32.mrb[0].mxu0
        %1604 = vmatprep.mubr.f32.mxu0 0.0
        %1605 = vmatmul.mubr.f32.gmra.mrb[0].mxu0 %v1403
        %v1606 = vpop.f32.mrb[0].mxu0
        %v1607 = vadd.f32 %v1336, %v1606
        %v1608 = vpop.f32.mrb[0].mxu0
        %1609 = vmatprep.mubr.f32.mxu0 0.0
        %1610 = vmatmul.mubr.f32.gmra.mrb[0].mxu0 %v1406
        %v1611 = vpop.f32.mrb[0].mxu0
        %v1612 = vadd.f32 %v1336, %v1611
        %v1613 = vpop.f32.mrb[0].mxu0
        %1614 = vmatprep.mubr.f32.mxu0 0.0
        %1615 = vmatmul.mubr.f32.gmra.mrb[0].mxu0 %v1409
        %v1616 = vpop.f32.mrb[0].mxu0
        %v1617 = vadd.f32 %v1336, %v1616
        %v1618 = vpop.f32.mrb[0].mxu0
        %1619 = vmatprep.mubr.f32.mxu0 0.0
        %1620 = vmatmul.mubr.f32.gmra.mrb[0].mxu0 %v1412
        %v1621 = vpop.f32.mrb[0].mxu0
        %v1622 = vadd.f32 %v1336, %v1621
        %v1623 = vpop.f32.mrb[0].mxu0
        %1624 = vmatprep.mubr.f32.mxu0 0.0
        %1625 = vmatmul.mubr.f32.gmra.mrb[0].mxu0 %v1415
        %v1626 = vpop.f32.mrb[0].mxu0
        %v1627 = vadd.f32 %v1336, %v1626
        %v1628 = vpop.f32.mrb[0].mxu0
        %1629 = vmatprep.mubr.f32.mxu0 0.0
        %1630 = vmatmul.mubr.f32.gmra.mrb[0].mxu0 %v1418
        %v1631 = vpop.f32.mrb[0].mxu0
        %v1632 = vadd.f32 %v1336, %v1631
        %v1633 = vpop.f32.mrb[0].mxu0
        %1634 = vmatprep.mubr.f32.mxu0 0.0
        %1635 = vmatmul.mubr.f32.gmra.mrb[0].mxu0 %v1421
        %v1636 = vpop.f32.mrb[0].mxu0
        %v1637 = vadd.f32 %v1336, %v1636
        %v1638 = vpop.f32.mrb[0].mxu0
        %1639 = vmatprep.mubr.f32.mxu0 0.0
        %1640 = vmatmul.mubr.f32.gmra.mrb[0].mxu0 %v1424
        %v1641 = vpop.f32.mrb[0].mxu0
        %v1642 = vadd.f32 %v1336, %v1641
        %v1643 = vpop.f32.mrb[0].mxu0
        %1644 = vmatprep.mubr.f32.mxu0 0.0
        %1645 = vmatmul.mubr.f32.gmra.mrb[0].mxu0 %v1427
        %v1646 = vpop.f32.mrb[0].mxu0
        %v1647 = vadd.f32 %v1336, %v1646
        %v1648 = vpop.f32.mrb[0].mxu0
        %1649 = vmatprep.mubr.f32.mxu0 0.0
        %1650 = vmatmul.mubr.f32.gmra.mrb[0].mxu0 %v1430
        %v1651 = vpop.f32.mrb[0].mxu0
        %v1652 = vadd.f32 %v1336, %v1651
        %v1653 = vpop.f32.mrb[0].mxu0
        %1654 = vmatprep.mubr.f32.mxu0 0.0
        %1655 = vmatmul.mubr.f32.gmra.mrb[0].mxu0 %v1433
        %v1656 = vpop.f32.mrb[0].mxu0
        %v1657 = vadd.f32 %v1336, %v1656
        %v1658 = vpop.f32.mrb[0].mxu0
        %1659 = vdwg.mxu0
        %v1660 = vmul.f32 %v1502, %v1502
        %v1661 = vmul.f32 %v1507, %v1507
        %v1662 = vmul.f32 %v1512, %v1512
        %v1663 = vmul.f32 %v1517, %v1517
        %v1664 = vmul.f32 %v1522, %v1522
        %v1665 = vmul.f32 %v1527, %v1527
        %v1666 = vmul.f32 %v1532, %v1532
        %v1667 = vmul.f32 %v1537, %v1537
        %v1668 = vmul.f32 %v1542, %v1542
        %v1669 = vmul.f32 %v1547, %v1547
        %v1670 = vmul.f32 %v1552, %v1552
        %v1671 = vmul.f32 %v1557, %v1557
        %v1672 = vmul.f32 %v1562, %v1562
        %v1673 = vmul.f32 %v1567, %v1567
        %v1674 = vmul.f32 %v1572, %v1572
        %v1675 = vmul.f32 %v1577, %v1577
        %v1676 = vmul.f32 %v1582, %v1582
        %v1677 = vmul.f32 %v1587, %v1587
        %v1678 = vmul.f32 %v1592, %v1592
        %v1679 = vmul.f32 %v1597, %v1597
        %v1680 = vmul.f32 %v1602, %v1602
        %v1681 = vmul.f32 %v1607, %v1607
        %v1682 = vmul.f32 %v1612, %v1612
        %v1683 = vmul.f32 %v1617, %v1617
        %v1684 = vmul.f32 %v1622, %v1622
        %v1685 = vmul.f32 %v1627, %v1627
        %v1686 = vmul.f32 %v1632, %v1632
        %v1687 = vmul.f32 %v1637, %v1637
        %v1688 = vmul.f32 %v1642, %v1642
        %v1689 = vmul.f32 %v1647, %v1647
        %v1690 = vmul.f32 %v1652, %v1652
        %v1691 = vmul.f32 %v1657, %v1657
        %v1692 = vmul.f32 %v1502, %v1660
        %v1693 = vmul.f32 %v1507, %v1661
        %v1694 = vmul.f32 %v1512, %v1662
        %v1695 = vmul.f32 %v1517, %v1663
        %v1696 = vmul.f32 %v1522, %v1664
        %v1697 = vmul.f32 %v1527, %v1665
        %v1698 = vmul.f32 %v1532, %v1666
        %v1699 = vmul.f32 %v1537, %v1667
        %v1700 = vmul.f32 %v1542, %v1668
        %v1701 = vmul.f32 %v1547, %v1669
        %v1702 = vmul.f32 %v1552, %v1670
        %v1703 = vmul.f32 %v1557, %v1671
        %v1704 = vmul.f32 %v1562, %v1672
        %v1705 = vmul.f32 %v1567, %v1673
        %v1706 = vmul.f32 %v1572, %v1674
        %v1707 = vmul.f32 %v1577, %v1675
        %v1708 = vmul.f32 %v1582, %v1676
        %v1709 = vmul.f32 %v1587, %v1677
        %v1710 = vmul.f32 %v1592, %v1678
        %v1711 = vmul.f32 %v1597, %v1679
        %v1712 = vmul.f32 %v1602, %v1680
        %v1713 = vmul.f32 %v1607, %v1681
        %v1714 = vmul.f32 %v1612, %v1682
        %v1715 = vmul.f32 %v1617, %v1683
        %v1716 = vmul.f32 %v1622, %v1684
        %v1717 = vmul.f32 %v1627, %v1685
        %v1718 = vmul.f32 %v1632, %v1686
        %v1719 = vmul.f32 %v1637, %v1687
        %v1720 = vmul.f32 %v1642, %v1688
        %v1721 = vmul.f32 %v1647, %v1689
        %v1722 = vmul.f32 %v1652, %v1690
        %v1723 = vmul.f32 %v1657, %v1691
        %v1724 = vmul.f32 %v1692, 0.044715
        %v1725 = vmul.f32 %v1693, 0.044715
        %v1726 = vmul.f32 %v1694, 0.044715
        %v1727 = vmul.f32 %v1695, 0.044715
        %v1728 = vmul.f32 %v1696, 0.044715
        %v1729 = vmul.f32 %v1697, 0.044715
        %v1730 = vmul.f32 %v1698, 0.044715
        %v1731 = vmul.f32 %v1699, 0.044715
        %v1732 = vmul.f32 %v1700, 0.044715
        %v1733 = vmul.f32 %v1701, 0.044715
        %v1734 = vmul.f32 %v1702, 0.044715
        %v1735 = vmul.f32 %v1703, 0.044715
        %v1736 = vmul.f32 %v1704, 0.044715
        %v1737 = vmul.f32 %v1705, 0.044715
        %v1738 = vmul.f32 %v1706, 0.044715
        %v1739 = vmul.f32 %v1707, 0.044715
        %v1740 = vmul.f32 %v1708, 0.044715
        %v1741 = vmul.f32 %v1709, 0.044715
        %v1742 = vmul.f32 %v1710, 0.044715
        %v1743 = vmul.f32 %v1711, 0.044715
        %v1744 = vmul.f32 %v1712, 0.044715
        %v1745 = vmul.f32 %v1713, 0.044715
        %v1746 = vmul.f32 %v1714, 0.044715
        %v1747 = vmul.f32 %v1715, 0.044715
        %v1748 = vmul.f32 %v1716, 0.044715
        %v1749 = vmul.f32 %v1717, 0.044715
        %v1750 = vmul.f32 %v1718, 0.044715
        %v1751 = vmul.f32 %v1719, 0.044715
        %v1752 = vmul.f32 %v1720, 0.044715
        %v1753 = vmul.f32 %v1721, 0.044715
        %v1754 = vmul.f32 %v1722, 0.044715
        %v1755 = vmul.f32 %v1723, 0.044715
        %v1756 = vadd.f32 %v1502, %v1724
        %v1757 = vadd.f32 %v1507, %v1725
        %v1758 = vadd.f32 %v1512, %v1726
        %v1759 = vadd.f32 %v1517, %v1727
        %v1760 = vadd.f32 %v1522, %v1728
        %v1761 = vadd.f32 %v1527, %v1729
        %v1762 = vadd.f32 %v1532, %v1730
        %v1763 = vadd.f32 %v1537, %v1731
        %v1764 = vadd.f32 %v1542, %v1732
        %v1765 = vadd.f32 %v1547, %v1733
        %v1766 = vadd.f32 %v1552, %v1734
        %v1767 = vadd.f32 %v1557, %v1735
        %v1768 = vadd.f32 %v1562, %v1736
        %v1769 = vadd.f32 %v1567, %v1737
        %v1770 = vadd.f32 %v1572, %v1738
        %v1771 = vadd.f32 %v1577, %v1739
        %v1772 = vadd.f32 %v1582, %v1740
        %v1773 = vadd.f32 %v1587, %v1741
        %v1774 = vadd.f32 %v1592, %v1742
        %v1775 = vadd.f32 %v1597, %v1743
        %v1776 = vadd.f32 %v1602, %v1744
        %v1777 = vadd.f32 %v1607, %v1745
        %v1778 = vadd.f32 %v1612, %v1746
        %v1779 = vadd.f32 %v1617, %v1747
        %v1780 = vadd.f32 %v1622, %v1748
        %v1781 = vadd.f32 %v1627, %v1749
        %v1782 = vadd.f32 %v1632, %v1750
        %v1783 = vadd.f32 %v1637, %v1751
        %v1784 = vadd.f32 %v1642, %v1752
        %v1785 = vadd.f32 %v1647, %v1753
        %v1786 = vadd.f32 %v1652, %v1754
        %v1787 = vadd.f32 %v1657, %v1755
        %v1788 = vmul.f32 %v1756, 0.7978846
        %v1789 = vmul.f32 %v1757, 0.7978846
        %v1790 = vmul.f32 %v1758, 0.7978846
        %v1791 = vmul.f32 %v1759, 0.7978846
        %v1792 = vmul.f32 %v1760, 0.7978846
        %v1793 = vmul.f32 %v1761, 0.7978846
        %v1794 = vmul.f32 %v1762, 0.7978846
        %v1795 = vmul.f32 %v1763, 0.7978846
        %v1796 = vmul.f32 %v1764, 0.7978846
        %v1797 = vmul.f32 %v1765, 0.7978846
        %v1798 = vmul.f32 %v1766, 0.7978846
        %v1799 = vmul.f32 %v1767, 0.7978846
        %v1800 = vmul.f32 %v1768, 0.7978846
        %v1801 = vmul.f32 %v1769, 0.7978846
        %v1802 = vmul.f32 %v1770, 0.7978846
        %v1803 = vmul.f32 %v1771, 0.7978846
        %v1804 = vmul.f32 %v1772, 0.7978846
        %v1805 = vmul.f32 %v1773, 0.7978846
        %v1806 = vmul.f32 %v1774, 0.7978846
        %v1807 = vmul.f32 %v1775, 0.7978846
        %v1808 = vmul.f32 %v1776, 0.7978846
        %v1809 = vmul.f32 %v1777, 0.7978846
        %v1810 = vmul.f32 %v1778, 0.7978846
        %v1811 = vmul.f32 %v1779, 0.7978846
        %v1812 = vmul.f32 %v1780, 0.7978846
        %v1813 = vmul.f32 %v1781, 0.7978846
        %v1814 = vmul.f32 %v1782, 0.7978846
        %v1815 = vmul.f32 %v1783, 0.7978846
        %v1816 = vmul.f32 %v1784, 0.7978846
        %v1817 = vmul.f32 %v1785, 0.7978846
        %v1818 = vmul.f32 %v1786, 0.7978846
        %v1819 = vmul.f32 %v1787, 0.7978846
        %v1820 = vtanh.pop %v1788
        %v1821 = vtanh.pop %v1789
        %v1822 = vtanh.pop %v1790
        %v1823 = vtanh.pop %v1791
        %v1824 = vtanh.pop %v1792
        %v1825 = vtanh.pop %v1793
        %v1826 = vtanh.pop %v1794
        %v1827 = vtanh.pop %v1795
        %v1828 = vtanh.pop %v1796
        %v1829 = vtanh.pop %v1797
        %v1830 = vtanh.pop %v1798
        %v1831 = vtanh.pop %v1799
        %v1832 = vtanh.pop %v1800
        %v1833 = vtanh.pop %v1801
        %v1834 = vtanh.pop %v1802
        %v1835 = vtanh.pop %v1803
        %v1836 = vtanh.pop %v1804
        %v1837 = vtanh.pop %v1805
        %v1838 = vtanh.pop %v1806
        %v1839 = vtanh.pop %v1807
        %v1840 = vtanh.pop %v1808
        %v1841 = vtanh.pop %v1809
        %v1842 = vtanh.pop %v1810
        %v1843 = vtanh.pop %v1811
        %v1844 = vtanh.pop %v1812
        %v1845 = vtanh.pop %v1813
        %v1846 = vtanh.pop %v1814
        %v1847 = vtanh.pop %v1815
        %v1848 = vtanh.pop %v1816
        %v1849 = vtanh.pop %v1817
        %v1850 = vtanh.pop %v1818
        %v1851 = vtanh.pop %v1819
        %v1852 = vadd.f32 %v1820, 1.0
        %v1853 = vadd.f32 %v1821, 1.0
        %v1854 = vadd.f32 %v1822, 1.0
        %v1855 = vadd.f32 %v1823, 1.0
        %v1856 = vadd.f32 %v1824, 1.0
        %v1857 = vadd.f32 %v1825, 1.0
        %v1858 = vadd.f32 %v1826, 1.0
        %v1859 = vadd.f32 %v1827, 1.0
        %v1860 = vadd.f32 %v1828, 1.0
        %v1861 = vadd.f32 %v1829, 1.0
        %v1862 = vadd.f32 %v1830, 1.0
        %v1863 = vadd.f32 %v1831, 1.0
        %v1864 = vadd.f32 %v1832, 1.0
        %v1865 = vadd.f32 %v1833, 1.0
        %v1866 = vadd.f32 %v1834, 1.0
        %v1867 = vadd.f32 %v1835, 1.0
        %v1868 = vadd.f32 %v1836, 1.0
        %v1869 = vadd.f32 %v1837, 1.0
        %v1870 = vadd.f32 %v1838, 1.0
        %v1871 = vadd.f32 %v1839, 1.0
        %v1872 = vadd.f32 %v1840, 1.0
        %v1873 = vadd.f32 %v1841, 1.0
        %v1874 = vadd.f32 %v1842, 1.0
        %v1875 = vadd.f32 %v1843, 1.0
        %v1876 = vadd.f32 %v1844, 1.0
        %v1877 = vadd.f32 %v1845, 1.0
        %v1878 = vadd.f32 %v1846, 1.0
        %v1879 = vadd.f32 %v1847, 1.0
        %v1880 = vadd.f32 %v1848, 1.0
        %v1881 = vadd.f32 %v1849, 1.0
        %v1882 = vadd.f32 %v1850, 1.0
        %v1883 = vadd.f32 %v1851, 1.0
        %v1884 = vmul.f32 %v1852, 0.5
        %v1885 = vmul.f32 %v1853, 0.5
        %v1886 = vmul.f32 %v1854, 0.5
        %v1887 = vmul.f32 %v1855, 0.5
        %v1888 = vmul.f32 %v1856, 0.5
        %v1889 = vmul.f32 %v1857, 0.5
        %v1890 = vmul.f32 %v1858, 0.5
        %v1891 = vmul.f32 %v1859, 0.5
        %v1892 = vmul.f32 %v1860, 0.5
        %v1893 = vmul.f32 %v1861, 0.5
        %v1894 = vmul.f32 %v1862, 0.5
        %v1895 = vmul.f32 %v1863, 0.5
        %v1896 = vmul.f32 %v1864, 0.5
        %v1897 = vmul.f32 %v1865, 0.5
        %v1898 = vmul.f32 %v1866, 0.5
        %v1899 = vmul.f32 %v1867, 0.5
        %v1900 = vmul.f32 %v1868, 0.5
        %v1901 = vmul.f32 %v1869, 0.5
        %v1902 = vmul.f32 %v1870, 0.5
        %v1903 = vmul.f32 %v1871, 0.5
        %v1904 = vmul.f32 %v1872, 0.5
        %v1905 = vmul.f32 %v1873, 0.5
        %v1906 = vmul.f32 %v1874, 0.5
        %v1907 = vmul.f32 %v1875, 0.5
        %v1908 = vmul.f32 %v1876, 0.5
        %v1909 = vmul.f32 %v1877, 0.5
        %v1910 = vmul.f32 %v1878, 0.5
        %v1911 = vmul.f32 %v1879, 0.5
        %v1912 = vmul.f32 %v1880, 0.5
        %v1913 = vmul.f32 %v1881, 0.5
        %v1914 = vmul.f32 %v1882, 0.5
        %v1915 = vmul.f32 %v1883, 0.5
        %v1916 = vmul.f32 %v1502, %v1884
        %v1917 = vmul.f32 %v1507, %v1885
        %v1918 = vmul.f32 %v1512, %v1886
        %v1919 = vmul.f32 %v1517, %v1887
        %v1920 = vmul.f32 %v1522, %v1888
        %v1921 = vmul.f32 %v1527, %v1889
        %v1922 = vmul.f32 %v1532, %v1890
        %v1923 = vmul.f32 %v1537, %v1891
        %v1924 = vmul.f32 %v1542, %v1892
        %v1925 = vmul.f32 %v1547, %v1893
        %v1926 = vmul.f32 %v1552, %v1894
        %v1927 = vmul.f32 %v1557, %v1895
        %v1928 = vmul.f32 %v1562, %v1896
        %v1929 = vmul.f32 %v1567, %v1897
        %v1930 = vmul.f32 %v1572, %v1898
        %v1931 = vmul.f32 %v1577, %v1899
        %v1932 = vmul.f32 %v1582, %v1900
        %v1933 = vmul.f32 %v1587, %v1901
        %v1934 = vmul.f32 %v1592, %v1902
        %v1935 = vmul.f32 %v1597, %v1903
        %v1936 = vmul.f32 %v1602, %v1904
        %v1937 = vmul.f32 %v1607, %v1905
        %v1938 = vmul.f32 %v1612, %v1906
        %v1939 = vmul.f32 %v1617, %v1907
        %v1940 = vmul.f32 %v1622, %v1908
        %v1941 = vmul.f32 %v1627, %v1909
        %v1942 = vmul.f32 %v1632, %v1910
        %v1943 = vmul.f32 %v1637, %v1911
        %v1944 = vmul.f32 %v1642, %v1912
        %v1945 = vmul.f32 %v1647, %v1913
        %v1946 = vmul.f32 %v1652, %v1914
        %v1947 = vmul.f32 %v1657, %v1915
        %v1948 = vld [vmem:[%s6] sm:$0xff]
        %v1949 = vld [vmem:[%s6 + $0x8] sm:$0xff]
        %v1950 = vld [vmem:[%s6 + $0x10] sm:$0xff]
        %v1951 = vld [vmem:[%s6 + $0x18] sm:$0xff]
        %v1952 = vld [vmem:[%s6 + $0x20] sm:$0xff]
        %v1953 = vld [vmem:[%s6 + $0x28] sm:$0xff]
        %v1954 = vld [vmem:[%s6 + $0x30] sm:$0xff]
        %v1955 = vld [vmem:[%s6 + $0x38] sm:$0xff]
        %v1956 = vld [vmem:[%s7] sm:$0x1]
        %v1958 = vlaneseq
        %v1959 = vshrl.u32 %v1958, 7
        %v1960 = vsub.s32 0, %v1959
        %v1961 = vrot.slane %v1956, %v1960
        %vm1963 = vcmask 523264
        %v1965 = vsel %vm1963, %v1916, 0
        %v1968 = vsel %vm1963, %v1917, 0
        %v1971 = vsel %vm1963, %v1918, 0
        %v1974 = vsel %vm1963, %v1919, 0
        %v1977 = vsel %vm1963, %v1920, 0
        %v1980 = vsel %vm1963, %v1921, 0
        %v1983 = vsel %vm1963, %v1922, 0
        %v1986 = vsel %vm1963, %v1923, 0
        %v1989 = vsel %vm1963, %v1924, 0
        %v1992 = vsel %vm1963, %v1925, 0
        %v1995 = vsel %vm1963, %v1926, 0
        %v1998 = vsel %vm1963, %v1927, 0
        %v2001 = vsel %vm1963, %v1928, 0
        %v2004 = vsel %vm1963, %v1929, 0
        %v2007 = vsel %vm1963, %v1930, 0
        %v2010 = vsel %vm1963, %v1931, 0
        %v2013 = vsel %vm1963, %v1932, 0
        %v2016 = vsel %vm1963, %v1933, 0
        %v2019 = vsel %vm1963, %v1934, 0
        %v2022 = vsel %vm1963, %v1935, 0
        %v2025 = vsel %vm1963, %v1936, 0
        %v2028 = vsel %vm1963, %v1937, 0
        %v2031 = vsel %vm1963, %v1938, 0
        %v2034 = vsel %vm1963, %v1939, 0
        %v2037 = vsel %vm1963, %v1940, 0
        %v2040 = vsel %vm1963, %v1941, 0
        %v2043 = vsel %vm1963, %v1942, 0
        %v2046 = vsel %vm1963, %v1943, 0
        %v2049 = vsel %vm1963, %v1944, 0
        %v2052 = vsel %vm1963, %v1945, 0
        %v2055 = vsel %vm1963, %v1946, 0
        %v2058 = vsel %vm1963, %v1947, 0
        %2060 = vmatprep.subr.mxu0 0.0
        %2061 = vmatpush1.msra.mxu0 %v1948
        %2062 = vmatprep.subr.mxu0 0.0
        %2063 = vmatpush1.msra.mxu0 %v1949
        %2064 = vmatprep.subr.mxu0 0.0
        %2065 = vmatpush1.msra.mxu0 %v1950
        %2066 = vmatprep.subr.mxu0 0.0
        %2067 = vmatpush1.msra.mxu0 %v1951
        %2068 = vmatprep.subr.mxu0 0.0
        %2069 = vmatpush1.msra.mxu0 %v1952
        %2070 = vmatprep.subr.mxu0 0.0
        %2071 = vmatpush1.msra.mxu0 %v1953
        %2072 = vmatprep.subr.mxu0 0.0
        %2073 = vmatpush1.msra.mxu0 %v1954
        %2074 = vmatprep.subr.mxu0 0.0
        %2075 = vmatpush1.msra.mxu0 %v1955
        %2076 = vmatprep.subr.mxu0 0.0
        %2077 = vmatpush1.msra.mxu0 0.0
        %2078 = vmatprep.subr.mxu0 0.0
        %2079 = vmatpush1.msra.mxu0 0.0
        %2080 = vmatprep.subr.mxu0 0.0
        %2081 = vmatpush1.msra.mxu0 0.0
        %2082 = vmatprep.subr.mxu0 0.0
        %2083 = vmatpush1.msra.mxu0 0.0
        %2084 = vmatprep.subr.mxu0 0.0
        %2085 = vmatpush1.msra.mxu0 0.0
        %2086 = vmatprep.subr.mxu0 0.0
        %2087 = vmatpush1.msra.mxu0 0.0
        %2088 = vmatprep.subr.mxu0 0.0
        %2089 = vmatpush1.msra.mxu0 0.0
        %2090 = vmatprep.subr.mxu0 0.0
        %2091 = vmatpush1.msra.mxu0 0.0
        %2092 = vmatprep.subr.mxu0 0.0
        %2093 = vmatpush1.msra.mxu0 0.0
        %2094 = vmatprep.subr.mxu0 0.0
        %2095 = vmatpush1.msra.mxu0 0.0
        %2096 = vmatprep.subr.mxu0 0.0
        %2097 = vmatpush1.msra.mxu0 0.0
        %2098 = vmatprep.subr.mxu0 0.0
        %2099 = vmatpush1.msra.mxu0 0.0
        %2100 = vmatprep.subr.mxu0 0.0
        %2101 = vmatpush1.msra.mxu0 0.0
        %2102 = vmatprep.subr.mxu0 0.0
        %2103 = vmatpush1.msra.mxu0 0.0
        %2104 = vmatprep.subr.mxu0 0.0
        %2105 = vmatpush1.msra.mxu0 0.0
        %2106 = vmatprep.subr.mxu0 0.0
        %2107 = vmatpush1.msra.mxu0 0.0
        %2108 = vmatprep.subr.mxu0 0.0
        %2109 = vmatpush1.msra.mxu0 0.0
        %2110 = vmatprep.subr.mxu0 0.0
        %2111 = vmatpush1.msra.mxu0 0.0
        %2112 = vmatprep.subr.mxu0 0.0
        %2113 = vmatpush1.msra.mxu0 0.0
        %2114 = vmatprep.subr.mxu0 0.0
        %2115 = vmatpush1.msra.mxu0 0.0
        %2116 = vmatprep.subr.mxu0 0.0
        %2117 = vmatpush1.msra.mxu0 0.0
        %2118 = vmatprep.subr.mxu0 0.0
        %2119 = vmatpush1.msra.mxu0 0.0
        %2120 = vmatprep.subr.mxu0 0.0
        %2121 = vmatpush1.msra.mxu0 0.0
        %2122 = vmatprep.subr.mxu0 0.0
        %2123 = vmatpush1.msra.mxu0 0.0
        %2124 = vmatprep.mubr.f32.mxu0 0.0
        %2125 = vmatmul.mubr.f32.gmra.mrb[0].mxu0 %v1965
        %v2126 = vpop.f32.mrb[0].mxu0
        %v2127 = vadd.f32 %v1961, %v2126
        %v2128 = vpop.f32.mrb[0].mxu0
        %2129 = vmatprep.mubr.f32.mxu0 0.0
        %2130 = vmatmul.mubr.f32.gmra.mrb[0].mxu0 %v1968
        %v2131 = vpop.f32.mrb[0].mxu0
        %v2132 = vadd.f32 %v1961, %v2131
        %v2133 = vpop.f32.mrb[0].mxu0
        %2134 = vmatprep.mubr.f32.mxu0 0.0
        %2135 = vmatmul.mubr.f32.gmra.mrb[0].mxu0 %v1971
        %v2136 = vpop.f32.mrb[0].mxu0
        %v2137 = vadd.f32 %v1961, %v2136
        %v2138 = vpop.f32.mrb[0].mxu0
        %2139 = vmatprep.mubr.f32.mxu0 0.0
        %2140 = vmatmul.mubr.f32.gmra.mrb[0].mxu0 %v1974
        %v2141 = vpop.f32.mrb[0].mxu0
        %v2142 = vadd.f32 %v1961, %v2141
        %v2143 = vpop.f32.mrb[0].mxu0
        %2144 = vmatprep.mubr.f32.mxu0 0.0
        %2145 = vmatmul.mubr.f32.gmra.mrb[0].mxu0 %v1977
        %v2146 = vpop.f32.mrb[0].mxu0
        %v2147 = vadd.f32 %v1961, %v2146
        %v2148 = vpop.f32.mrb[0].mxu0
        %2149 = vmatprep.mubr.f32.mxu0 0.0
        %2150 = vmatmul.mubr.f32.gmra.mrb[0].mxu0 %v1980
        %v2151 = vpop.f32.mrb[0].mxu0
        %v2152 = vadd.f32 %v1961, %v2151
        %v2153 = vpop.f32.mrb[0].mxu0
        %2154 = vmatprep.mubr.f32.mxu0 0.0
        %2155 = vmatmul.mubr.f32.gmra.mrb[0].mxu0 %v1983
        %v2156 = vpop.f32.mrb[0].mxu0
        %v2157 = vadd.f32 %v1961, %v2156
        %v2158 = vpop.f32.mrb[0].mxu0
        %2159 = vmatprep.mubr.f32.mxu0 0.0
        %2160 = vmatmul.mubr.f32.gmra.mrb[0].mxu0 %v1986
        %v2161 = vpop.f32.mrb[0].mxu0
        %v2162 = vadd.f32 %v1961, %v2161
        %v2163 = vpop.f32.mrb[0].mxu0
        %2164 = vmatprep.mubr.f32.mxu0 0.0
        %2165 = vmatmul.mubr.f32.gmra.mrb[0].mxu0 %v1989
        %v2166 = vpop.f32.mrb[0].mxu0
        %v2167 = vadd.f32 %v1961, %v2166
        %v2168 = vpop.f32.mrb[0].mxu0
        %2169 = vmatprep.mubr.f32.mxu0 0.0
        %2170 = vmatmul.mubr.f32.gmra.mrb[0].mxu0 %v1992
        %v2171 = vpop.f32.mrb[0].mxu0
        %v2172 = vadd.f32 %v1961, %v2171
        %v2173 = vpop.f32.mrb[0].mxu0
        %2174 = vmatprep.mubr.f32.mxu0 0.0
        %2175 = vmatmul.mubr.f32.gmra.mrb[0].mxu0 %v1995
        %v2176 = vpop.f32.mrb[0].mxu0
        %v2177 = vadd.f32 %v1961, %v2176
        %v2178 = vpop.f32.mrb[0].mxu0
        %2179 = vmatprep.mubr.f32.mxu0 0.0
        %2180 = vmatmul.mubr.f32.gmra.mrb[0].mxu0 %v1998
        %v2181 = vpop.f32.mrb[0].mxu0
        %v2182 = vadd.f32 %v1961, %v2181
        %v2183 = vpop.f32.mrb[0].mxu0
        %2184 = vmatprep.mubr.f32.mxu0 0.0
        %2185 = vmatmul.mubr.f32.gmra.mrb[0].mxu0 %v2001
        %v2186 = vpop.f32.mrb[0].mxu0
        %v2187 = vadd.f32 %v1961, %v2186
        %v2188 = vpop.f32.mrb[0].mxu0
        %2189 = vmatprep.mubr.f32.mxu0 0.0
        %2190 = vmatmul.mubr.f32.gmra.mrb[0].mxu0 %v2004
        %v2191 = vpop.f32.mrb[0].mxu0
        %v2192 = vadd.f32 %v1961, %v2191
        %v2193 = vpop.f32.mrb[0].mxu0
        %2194 = vmatprep.mubr.f32.mxu0 0.0
        %2195 = vmatmul.mubr.f32.gmra.mrb[0].mxu0 %v2007
        %v2196 = vpop.f32.mrb[0].mxu0
        %v2197 = vadd.f32 %v1961, %v2196
        %v2198 = vpop.f32.mrb[0].mxu0
        %2199 = vmatprep.mubr.f32.mxu0 0.0
        %2200 = vmatmul.mubr.f32.gmra.mrb[0].mxu0 %v2010
        %v2201 = vpop.f32.mrb[0].mxu0
        %v2202 = vadd.f32 %v1961, %v2201
        %v2203 = vpop.f32.mrb[0].mxu0
        %2204 = vmatprep.mubr.f32.mxu0 0.0
        %2205 = vmatmul.mubr.f32.gmra.mrb[0].mxu0 %v2013
        %v2206 = vpop.f32.mrb[0].mxu0
        %v2207 = vadd.f32 %v1961, %v2206
        %v2208 = vpop.f32.mrb[0].mxu0
        %2209 = vmatprep.mubr.f32.mxu0 0.0
        %2210 = vmatmul.mubr.f32.gmra.mrb[0].mxu0 %v2016
        %v2211 = vpop.f32.mrb[0].mxu0
        %v2212 = vadd.f32 %v1961, %v2211
        %v2213 = vpop.f32.mrb[0].mxu0
        %2214 = vmatprep.mubr.f32.mxu0 0.0
        %2215 = vmatmul.mubr.f32.gmra.mrb[0].mxu0 %v2019
        %v2216 = vpop.f32.mrb[0].mxu0
        %v2217 = vadd.f32 %v1961, %v2216
        %v2218 = vpop.f32.mrb[0].mxu0
        %2219 = vmatprep.mubr.f32.mxu0 0.0
        %2220 = vmatmul.mubr.f32.gmra.mrb[0].mxu0 %v2022
        %v2221 = vpop.f32.mrb[0].mxu0
        %v2222 = vadd.f32 %v1961, %v2221
        %v2223 = vpop.f32.mrb[0].mxu0
        %2224 = vmatprep.mubr.f32.mxu0 0.0
        %2225 = vmatmul.mubr.f32.gmra.mrb[0].mxu0 %v2025
        %v2226 = vpop.f32.mrb[0].mxu0
        %v2227 = vadd.f32 %v1961, %v2226
        %v2228 = vpop.f32.mrb[0].mxu0
        %2229 = vmatprep.mubr.f32.mxu0 0.0
        %2230 = vmatmul.mubr.f32.gmra.mrb[0].mxu0 %v2028
        %v2231 = vpop.f32.mrb[0].mxu0
        %v2232 = vadd.f32 %v1961, %v2231
        %v2233 = vpop.f32.mrb[0].mxu0
        %2234 = vmatprep.mubr.f32.mxu0 0.0
        %2235 = vmatmul.mubr.f32.gmra.mrb[0].mxu0 %v2031
        %v2236 = vpop.f32.mrb[0].mxu0
        %v2237 = vadd.f32 %v1961, %v2236
        %v2238 = vpop.f32.mrb[0].mxu0
        %2239 = vmatprep.mubr.f32.mxu0 0.0
        %2240 = vmatmul.mubr.f32.gmra.mrb[0].mxu0 %v2034
        %v2241 = vpop.f32.mrb[0].mxu0
        %v2242 = vadd.f32 %v1961, %v2241
        %v2243 = vpop.f32.mrb[0].mxu0
        %2244 = vmatprep.mubr.f32.mxu0 0.0
        %2245 = vmatmul.mubr.f32.gmra.mrb[0].mxu0 %v2037
        %v2246 = vpop.f32.mrb[0].mxu0
        %v2247 = vadd.f32 %v1961, %v2246
        %v2248 = vpop.f32.mrb[0].mxu0
        %2249 = vmatprep.mubr.f32.mxu0 0.0
        %2250 = vmatmul.mubr.f32.gmra.mrb[0].mxu0 %v2040
        %v2251 = vpop.f32.mrb[0].mxu0
        %v2252 = vadd.f32 %v1961, %v2251
        %v2253 = vpop.f32.mrb[0].mxu0
        %2254 = vmatprep.mubr.f32.mxu0 0.0
        %2255 = vmatmul.mubr.f32.gmra.mrb[0].mxu0 %v2043
        %v2256 = vpop.f32.mrb[0].mxu0
        %v2257 = vadd.f32 %v1961, %v2256
        %v2258 = vpop.f32.mrb[0].mxu0
        %2259 = vmatprep.mubr.f32.mxu0 0.0
        %2260 = vmatmul.mubr.f32.gmra.mrb[0].mxu0 %v2046
        %v2261 = vpop.f32.mrb[0].mxu0
        %v2262 = vadd.f32 %v1961, %v2261
        %v2263 = vpop.f32.mrb[0].mxu0
        %2264 = vmatprep.mubr.f32.mxu0 0.0
        %2265 = vmatmul.mubr.f32.gmra.mrb[0].mxu0 %v2049
        %v2266 = vpop.f32.mrb[0].mxu0
        %v2267 = vadd.f32 %v1961, %v2266
        %v2268 = vpop.f32.mrb[0].mxu0
        %2269 = vmatprep.mubr.f32.mxu0 0.0
        %2270 = vmatmul.mubr.f32.gmra.mrb[0].mxu0 %v2052
        %v2271 = vpop.f32.mrb[0].mxu0
        %v2272 = vadd.f32 %v1961, %v2271
        %v2273 = vpop.f32.mrb[0].mxu0
        %2274 = vmatprep.mubr.f32.mxu0 0.0
        %2275 = vmatmul.mubr.f32.gmra.mrb[0].mxu0 %v2055
        %v2276 = vpop.f32.mrb[0].mxu0
        %v2277 = vadd.f32 %v1961, %v2276
        %v2278 = vpop.f32.mrb[0].mxu0
        %2279 = vmatprep.mubr.f32.mxu0 0.0
        %2280 = vmatmul.mubr.f32.gmra.mrb[0].mxu0 %v2058
        %v2281 = vpop.f32.mrb[0].mxu0
        %v2282 = vadd.f32 %v1961, %v2281
        %v2283 = vpop.f32.mrb[0].mxu0
        %2284 = vdwg.mxu0
        %v2285 = vadd.f32 %v2127, %v1169
        %v2286 = vadd.f32 %v2132, %v1174
        %v2287 = vadd.f32 %v2137, %v1179
        %v2288 = vadd.f32 %v2142, %v1184
        %v2289 = vadd.f32 %v2147, %v1189
        %v2290 = vadd.f32 %v2152, %v1194
        %v2291 = vadd.f32 %v2157, %v1199
        %v2292 = vadd.f32 %v2162, %v1204
        %v2293 = vadd.f32 %v2167, %v1209
        %v2294 = vadd.f32 %v2172, %v1214
        %v2295 = vadd.f32 %v2177, %v1219
        %v2296 = vadd.f32 %v2182, %v1224
        %v2297 = vadd.f32 %v2187, %v1229
        %v2298 = vadd.f32 %v2192, %v1234
        %v2299 = vadd.f32 %v2197, %v1239
        %v2300 = vadd.f32 %v2202, %v1244
        %v2301 = vadd.f32 %v2207, %v1249
        %v2302 = vadd.f32 %v2212, %v1254
        %v2303 = vadd.f32 %v2217, %v1259
        %v2304 = vadd.f32 %v2222, %v1264
        %v2305 = vadd.f32 %v2227, %v1269
        %v2306 = vadd.f32 %v2232, %v1274
        %v2307 = vadd.f32 %v2237, %v1279
        %v2308 = vadd.f32 %v2242, %v1284
        %v2309 = vadd.f32 %v2247, %v1289
        %v2310 = vadd.f32 %v2252, %v1294
        %v2311 = vadd.f32 %v2257, %v1299
        %v2312 = vadd.f32 %v2262, %v1304
        %v2313 = vadd.f32 %v2267, %v1309
        %v2314 = vadd.f32 %v2272, %v1314
        %v2315 = vadd.f32 %v2277, %v1319
        %v2316 = vadd.f32 %v2282, %v1324
        %v2317 = vld [vmem:[%s8] sm:$0xff]
        %v2318 = vld [vmem:[%s8 + $0x8] sm:$0xff]
        %v2319 = vld [vmem:[%s8 + $0x10] sm:$0xff]
        %v2320 = vld [vmem:[%s8 + $0x18] sm:$0xff]
        %v2321 = vld [vmem:[%s8 + $0x20] sm:$0xff]
        %v2322 = vld [vmem:[%s8 + $0x28] sm:$0xff]
        %v2323 = vld [vmem:[%s8 + $0x30] sm:$0xff]
        %v2324 = vld [vmem:[%s8 + $0x38] sm:$0xff]
        %v2325 = vld [vmem:[%s8 + $0x40] sm:$0xff]
        %v2326 = vld [vmem:[%s8 + $0x48] sm:$0xff]
        %v2327 = vld [vmem:[%s8 + $0x50] sm:$0xff]
        %v2328 = vld [vmem:[%s8 + $0x58] sm:$0xff]
        %v2329 = vld [vmem:[%s8 + $0x60] sm:$0xff]
        %v2330 = vld [vmem:[%s8 + $0x68] sm:$0xff]
        %v2331 = vld [vmem:[%s8 + $0x70] sm:$0xff]
        %v2332 = vld [vmem:[%s8 + $0x78] sm:$0xff]
        %v2333 = vld [vmem:[%s8 + $0x80] sm:$0xff]
        %v2334 = vld [vmem:[%s8 + $0x88] sm:$0xff]
        %v2335 = vld [vmem:[%s8 + $0x90] sm:$0xff]
        %v2336 = vld [vmem:[%s8 + $0x98] sm:$0xff]
        %v2338 = vsel %vm1338, %v2285, 0
        %v2341 = vsel %vm1338, %v2286, 0
        %v2344 = vsel %vm1338, %v2287, 0
        %v2347 = vsel %vm1338, %v2288, 0
        %v2350 = vsel %vm1338, %v2289, 0
        %v2353 = vsel %vm1338, %v2290, 0
        %v2356 = vsel %vm1338, %v2291, 0
        %v2359 = vsel %vm1338, %v2292, 0
        %v2362 = vsel %vm1338, %v2293, 0
        %v2365 = vsel %vm1338, %v2294, 0
        %v2368 = vsel %vm1338, %v2295, 0
        %v2371 = vsel %vm1338, %v2296, 0
        %v2374 = vsel %vm1338, %v2297, 0
        %v2377 = vsel %vm1338, %v2298, 0
        %v2380 = vsel %vm1338, %v2299, 0
        %v2383 = vsel %vm1338, %v2300, 0
        %v2386 = vsel %vm1338, %v2301, 0
        %v2389 = vsel %vm1338, %v2302, 0
        %v2392 = vsel %vm1338, %v2303, 0
        %v2395 = vsel %vm1338, %v2304, 0
        %v2398 = vsel %vm1338, %v2305, 0
        %v2401 = vsel %vm1338, %v2306, 0
        %v2404 = vsel %vm1338, %v2307, 0
        %v2407 = vsel %vm1338, %v2308, 0
        %v2410 = vsel %vm1338, %v2309, 0
        %v2413 = vsel %vm1338, %v2310, 0
        %v2416 = vsel %vm1338, %v2311, 0
        %v2419 = vsel %vm1338, %v2312, 0
        %v2422 = vsel %vm1338, %v2313, 0
        %v2425 = vsel %vm1338, %v2314, 0
        %v2428 = vsel %vm1338, %v2315, 0
        %v2431 = vsel %vm1338, %v2316, 0
        %2433 = vmatprep.subr.mxu0 %v2318
        %2434 = vmatpush1.msra.mxu0 %v2317
        %2435 = vmatprep.subr.mxu0 %v2323
        %2436 = vmatpush1.msra.mxu0 %v2322
        %2437 = vmatprep.subr.mxu0 %v2328
        %2438 = vmatpush1.msra.mxu0 %v2327
        %2439 = vmatprep.subr.mxu0 %v2333
        %2440 = vmatpush1.msra.mxu0 %v2332
        %2441 = vmatprep.subr.mxu0 0.0
        %2442 = vmatpush1.msra.mxu0 0.0
        %2443 = vmatprep.subr.mxu0 0.0
        %2444 = vmatpush1.msra.mxu0 0.0
        %2445 = vmatprep.subr.mxu0 0.0
        %2446 = vmatpush1.msra.mxu0 0.0
        %2447 = vmatprep.subr.mxu0 0.0
        %2448 = vmatpush1.msra.mxu0 0.0
        %2449 = vmatprep.subr.mxu0 0.0
        %2450 = vmatpush1.msra.mxu0 0.0
        %2451 = vmatprep.subr.mxu0 0.0
        %2452 = vmatpush1.msra.mxu0 0.0
        %2453 = vmatprep.subr.mxu0 0.0
        %2454 = vmatpush1.msra.mxu0 0.0
        %2455 = vmatprep.subr.mxu0 0.0
        %2456 = vmatpush1.msra.mxu0 0.0
        %2457 = vmatprep.subr.mxu0 0.0
        %2458 = vmatpush1.msra.mxu0 0.0
        %2459 = vmatprep.subr.mxu0 0.0
        %2460 = vmatpush1.msra.mxu0 0.0
        %2461 = vmatprep.subr.mxu0 0.0
        %2462 = vmatpush1.msra.mxu0 0.0
        %2463 = vmatprep.subr.mxu0 0.0
        %2464 = vmatpush1.msra.mxu0 0.0
        %2465 = vmatprep.subr.mxu0 0.0
        %2466 = vmatpush1.msra.mxu0 0.0
        %2467 = vmatprep.subr.mxu0 0.0
        %2468 = vmatpush1.msra.mxu0 0.0
        %2469 = vmatprep.subr.mxu0 0.0
        %2470 = vmatpush1.msra.mxu0 0.0
        %2471 = vmatprep.subr.mxu0 0.0
        %2472 = vmatpush1.msra.mxu0 0.0
        %2473 = vmatprep.subr.mxu0 0.0
        %2474 = vmatpush1.msra.mxu0 0.0
        %2475 = vmatprep.subr.mxu0 0.0
        %2476 = vmatpush1.msra.mxu0 0.0
        %2477 = vmatprep.subr.mxu0 0.0
        %2478 = vmatpush1.msra.mxu0 0.0
        %2479 = vmatprep.subr.mxu0 0.0
        %2480 = vmatpush1.msra.mxu0 0.0
        %2481 = vmatprep.subr.mxu0 0.0
        %2482 = vmatpush1.msra.mxu0 0.0
        %2483 = vmatprep.subr.mxu0 0.0
        %2484 = vmatpush1.msra.mxu0 0.0
        %2485 = vmatprep.subr.mxu0 0.0
        %2486 = vmatpush1.msra.mxu0 0.0
        %2487 = vmatprep.subr.mxu0 0.0
        %2488 = vmatpush1.msra.mxu0 0.0
        %2489 = vmatprep.subr.mxu0 0.0
        %2490 = vmatpush1.msra.mxu0 0.0
        %2491 = vmatprep.subr.mxu0 0.0
        %2492 = vmatpush1.msra.mxu0 0.0
        %2493 = vmatprep.subr.mxu0 0.0
        %2494 = vmatpush1.msra.mxu0 0.0
        %2495 = vmatprep.subr.mxu0 0.0
        %2496 = vmatpush1.msra.mxu0 0.0
        %2497 = vmatprep.mubr.f32.mxu0 0.0
        %2498 = vmatmul.mubr.f32.gmra.mrb[0].mxu0 %v2338
        %v2499 = vpop.f32.mrb[0].mxu0
        %v2500 = vadd.f32 0.0, %v2499
        %v2501 = vpop.f32.mrb[0].mxu0
        %v2502 = vadd.f32 0.0, %v2501
        %2503 = vmatprep.mubr.f32.mxu0 0.0
        %2504 = vmatmul.mubr.f32.gmra.mrb[0].mxu0 %v2341
        %v2505 = vpop.f32.mrb[0].mxu0
        %v2506 = vadd.f32 0.0, %v2505
        %v2507 = vpop.f32.mrb[0].mxu0
        %v2508 = vadd.f32 0.0, %v2507
        %2509 = vmatprep.mubr.f32.mxu0 0.0
        %2510 = vmatmul.mubr.f32.gmra.mrb[0].mxu0 %v2344
        %v2511 = vpop.f32.mrb[0].mxu0
        %v2512 = vadd.f32 0.0, %v2511
        %v2513 = vpop.f32.mrb[0].mxu0
        %v2514 = vadd.f32 0.0, %v2513
        %2515 = vmatprep.mubr.f32.mxu0 0.0
        %2516 = vmatmul.mubr.f32.gmra.mrb[0].mxu0 %v2347
        %v2517 = vpop.f32.mrb[0].mxu0
        %v2518 = vadd.f32 0.0, %v2517
        %v2519 = vpop.f32.mrb[0].mxu0
        %v2520 = vadd.f32 0.0, %v2519
        %2521 = vmatprep.mubr.f32.mxu0 0.0
        %2522 = vmatmul.mubr.f32.gmra.mrb[0].mxu0 %v2350
        %v2523 = vpop.f32.mrb[0].mxu0
        %v2524 = vadd.f32 0.0, %v2523
        %v2525 = vpop.f32.mrb[0].mxu0
        %v2526 = vadd.f32 0.0, %v2525
        %2527 = vmatprep.mubr.f32.mxu0 0.0
        %2528 = vmatmul.mubr.f32.gmra.mrb[0].mxu0 %v2353
        %v2529 = vpop.f32.mrb[0].mxu0
        %v2530 = vadd.f32 0.0, %v2529
        %v2531 = vpop.f32.mrb[0].mxu0
        %v2532 = vadd.f32 0.0, %v2531
        %2533 = vmatprep.mubr.f32.mxu0 0.0
        %2534 = vmatmul.mubr.f32.gmra.mrb[0].mxu0 %v2356
        %v2535 = vpop.f32.mrb[0].mxu0
        %v2536 = vadd.f32 0.0, %v2535
        %v2537 = vpop.f32.mrb[0].mxu0
        %v2538 = vadd.f32 0.0, %v2537
        %2539 = vmatprep.mubr.f32.mxu0 0.0
        %2540 = vmatmul.mubr.f32.gmra.mrb[0].mxu0 %v2359
        %v2541 = vpop.f32.mrb[0].mxu0
        %v2542 = vadd.f32 0.0, %v2541
        %v2543 = vpop.f32.mrb[0].mxu0
        %v2544 = vadd.f32 0.0, %v2543
        %2545 = vmatprep.mubr.f32.mxu0 0.0
        %2546 = vmatmul.mubr.f32.gmra.mrb[0].mxu0 %v2362
        %v2547 = vpop.f32.mrb[0].mxu0
        %v2548 = vadd.f32 0.0, %v2547
        %v2549 = vpop.f32.mrb[0].mxu0
        %v2550 = vadd.f32 0.0, %v2549
        %2551 = vmatprep.mubr.f32.mxu0 0.0
        %2552 = vmatmul.mubr.f32.gmra.mrb[0].mxu0 %v2365
        %v2553 = vpop.f32.mrb[0].mxu0
        %v2554 = vadd.f32 0.0, %v2553
        %v2555 = vpop.f32.mrb[0].mxu0
        %v2556 = vadd.f32 0.0, %v2555
        %2557 = vmatprep.mubr.f32.mxu0 0.0
        %2558 = vmatmul.mubr.f32.gmra.mrb[0].mxu0 %v2368
        %v2559 = vpop.f32.mrb[0].mxu0
        %v2560 = vadd.f32 0.0, %v2559
        %v2561 = vpop.f32.mrb[0].mxu0
        %v2562 = vadd.f32 0.0, %v2561
        %2563 = vmatprep.mubr.f32.mxu0 0.0
        %2564 = vmatmul.mubr.f32.gmra.mrb[0].mxu0 %v2371
        %v2565 = vpop.f32.mrb[0].mxu0
        %v2566 = vadd.f32 0.0, %v2565
        %v2567 = vpop.f32.mrb[0].mxu0
        %v2568 = vadd.f32 0.0, %v2567
        %2569 = vmatprep.mubr.f32.mxu0 0.0
        %2570 = vmatmul.mubr.f32.gmra.mrb[0].mxu0 %v2374
        %v2571 = vpop.f32.mrb[0].mxu0
        %v2572 = vadd.f32 0.0, %v2571
        %v2573 = vpop.f32.mrb[0].mxu0
        %v2574 = vadd.f32 0.0, %v2573
        %2575 = vmatprep.mubr.f32.mxu0 0.0
        %2576 = vmatmul.mubr.f32.gmra.mrb[0].mxu0 %v2377
        %v2577 = vpop.f32.mrb[0].mxu0
        %v2578 = vadd.f32 0.0, %v2577
        %v2579 = vpop.f32.mrb[0].mxu0
        %v2580 = vadd.f32 0.0, %v2579
        %2581 = vmatprep.mubr.f32.mxu0 0.0
        %2582 = vmatmul.mubr.f32.gmra.mrb[0].mxu0 %v2380
        %v2583 = vpop.f32.mrb[0].mxu0
        %v2584 = vadd.f32 0.0, %v2583
        %v2585 = vpop.f32.mrb[0].mxu0
        %v2586 = vadd.f32 0.0, %v2585
        %2587 = vmatprep.mubr.f32.mxu0 0.0
        %2588 = vmatmul.mubr.f32.gmra.mrb[0].mxu0 %v2383
        %v2589 = vpop.f32.mrb[0].mxu0
        %v2590 = vadd.f32 0.0, %v2589
        %v2591 = vpop.f32.mrb[0].mxu0
        %v2592 = vadd.f32 0.0, %v2591
        %2593 = vmatprep.mubr.f32.mxu0 0.0
        %2594 = vmatmul.mubr.f32.gmra.mrb[0].mxu0 %v2386
        %v2595 = vpop.f32.mrb[0].mxu0
        %v2596 = vadd.f32 0.0, %v2595
        %v2597 = vpop.f32.mrb[0].mxu0
        %v2598 = vadd.f32 0.0, %v2597
        %2599 = vmatprep.mubr.f32.mxu0 0.0
        %2600 = vmatmul.mubr.f32.gmra.mrb[0].mxu0 %v2389
        %v2601 = vpop.f32.mrb[0].mxu0
        %v2602 = vadd.f32 0.0, %v2601
        %v2603 = vpop.f32.mrb[0].mxu0
        %v2604 = vadd.f32 0.0, %v2603
        %2605 = vmatprep.mubr.f32.mxu0 0.0
        %2606 = vmatmul.mubr.f32.gmra.mrb[0].mxu0 %v2392
        %v2607 = vpop.f32.mrb[0].mxu0
        %v2608 = vadd.f32 0.0, %v2607
        %v2609 = vpop.f32.mrb[0].mxu0
        %v2610 = vadd.f32 0.0, %v2609
        %2611 = vmatprep.mubr.f32.mxu0 0.0
        %2612 = vmatmul.mubr.f32.gmra.mrb[0].mxu0 %v2395
        %v2613 = vpop.f32.mrb[0].mxu0
        %v2614 = vadd.f32 0.0, %v2613
        %v2615 = vpop.f32.mrb[0].mxu0
        %v2616 = vadd.f32 0.0, %v2615
        %2617 = vmatprep.mubr.f32.mxu0 0.0
        %2618 = vmatmul.mubr.f32.gmra.mrb[0].mxu0 %v2398
        %v2619 = vpop.f32.mrb[0].mxu0
        %v2620 = vadd.f32 0.0, %v2619
        %v2621 = vpop.f32.mrb[0].mxu0
        %v2622 = vadd.f32 0.0, %v2621
        %2623 = vmatprep.mubr.f32.mxu0 0.0
        %2624 = vmatmul.mubr.f32.gmra.mrb[0].mxu0 %v2401
        %v2625 = vpop.f32.mrb[0].mxu0
        %v2626 = vadd.f32 0.0, %v2625
        %v2627 = vpop.f32.mrb[0].mxu0
        %v2628 = vadd.f32 0.0, %v2627
        %2629 = vmatprep.mubr.f32.mxu0 0.0
        %2630 = vmatmul.mubr.f32.gmra.mrb[0].mxu0 %v2404
        %v2631 = vpop.f32.mrb[0].mxu0
        %v2632 = vadd.f32 0.0, %v2631
        %v2633 = vpop.f32.mrb[0].mxu0
        %v2634 = vadd.f32 0.0, %v2633
        %2635 = vmatprep.mubr.f32.mxu0 0.0
        %2636 = vmatmul.mubr.f32.gmra.mrb[0].mxu0 %v2407
        %v2637 = vpop.f32.mrb[0].mxu0
        %v2638 = vadd.f32 0.0, %v2637
        %v2639 = vpop.f32.mrb[0].mxu0
        %v2640 = vadd.f32 0.0, %v2639
        %2641 = vmatprep.mubr.f32.mxu0 0.0
        %2642 = vmatmul.mubr.f32.gmra.mrb[0].mxu0 %v2410
        %v2643 = vpop.f32.mrb[0].mxu0
        %v2644 = vadd.f32 0.0, %v2643
        %v2645 = vpop.f32.mrb[0].mxu0
        %v2646 = vadd.f32 0.0, %v2645
        %2647 = vmatprep.mubr.f32.mxu0 0.0
        %2648 = vmatmul.mubr.f32.gmra.mrb[0].mxu0 %v2413
        %v2649 = vpop.f32.mrb[0].mxu0
        %v2650 = vadd.f32 0.0, %v2649
        %v2651 = vpop.f32.mrb[0].mxu0
        %v2652 = vadd.f32 0.0, %v2651
        %2653 = vmatprep.mubr.f32.mxu0 0.0
        %2654 = vmatmul.mubr.f32.gmra.mrb[0].mxu0 %v2416
        %v2655 = vpop.f32.mrb[0].mxu0
        %v2656 = vadd.f32 0.0, %v2655
        %v2657 = vpop.f32.mrb[0].mxu0
        %v2658 = vadd.f32 0.0, %v2657
        %2659 = vmatprep.mubr.f32.mxu0 0.0
        %2660 = vmatmul.mubr.f32.gmra.mrb[0].mxu0 %v2419
        %v2661 = vpop.f32.mrb[0].mxu0
        %v2662 = vadd.f32 0.0, %v2661
        %v2663 = vpop.f32.mrb[0].mxu0
        %v2664 = vadd.f32 0.0, %v2663
        %2665 = vmatprep.mubr.f32.mxu0 0.0
        %2666 = vmatmul.mubr.f32.gmra.mrb[0].mxu0 %v2422
        %v2667 = vpop.f32.mrb[0].mxu0
        %v2668 = vadd.f32 0.0, %v2667
        %v2669 = vpop.f32.mrb[0].mxu0
        %v2670 = vadd.f32 0.0, %v2669
        %2671 = vmatprep.mubr.f32.mxu0 0.0
        %2672 = vmatmul.mubr.f32.gmra.mrb[0].mxu0 %v2425
        %v2673 = vpop.f32.mrb[0].mxu0
        %v2674 = vadd.f32 0.0, %v2673
        %v2675 = vpop.f32.mrb[0].mxu0
        %v2676 = vadd.f32 0.0, %v2675
        %2677 = vmatprep.mubr.f32.mxu0 0.0
        %2678 = vmatmul.mubr.f32.gmra.mrb[0].mxu0 %v2428
        %v2679 = vpop.f32.mrb[0].mxu0
        %v2680 = vadd.f32 0.0, %v2679
        %v2681 = vpop.f32.mrb[0].mxu0
        %v2682 = vadd.f32 0.0, %v2681
        %2683 = vmatprep.mubr.f32.mxu0 0.0
        %2684 = vmatmul.mubr.f32.gmra.mrb[0].mxu0 %v2431
        %v2685 = vpop.f32.mrb[0].mxu0
        %v2686 = vadd.f32 0.0, %v2685
        %v2687 = vpop.f32.mrb[0].mxu0
        %v2688 = vadd.f32 0.0, %v2687
        %2689 = vdwg.mxu0
        %2690 = vmatprep.subr.mxu0 %v2320
        %2691 = vmatpush1.msra.mxu0 %v2319
        %2692 = vmatprep.subr.mxu0 %v2325
        %2693 = vmatpush1.msra.mxu0 %v2324
        %2694 = vmatprep.subr.mxu0 %v2330
        %2695 = vmatpush1.msra.mxu0 %v2329
        %2696 = vmatprep.subr.mxu0 %v2335
        %2697 = vmatpush1.msra.mxu0 %v2334
        %2698 = vmatprep.subr.mxu0 0.0
        %2699 = vmatpush1.msra.mxu0 0.0
        %2700 = vmatprep.subr.mxu0 0.0
        %2701 = vmatpush1.msra.mxu0 0.0
        %2702 = vmatprep.subr.mxu0 0.0
        %2703 = vmatpush1.msra.mxu0 0.0
        %2704 = vmatprep.subr.mxu0 0.0
        %2705 = vmatpush1.msra.mxu0 0.0
        %2706 = vmatprep.subr.mxu0 0.0
        %2707 = vmatpush1.msra.mxu0 0.0
        %2708 = vmatprep.subr.mxu0 0.0
        %2709 = vmatpush1.msra.mxu0 0.0
        %2710 = vmatprep.subr.mxu0 0.0
        %2711 = vmatpush1.msra.mxu0 0.0
        %2712 = vmatprep.subr.mxu0 0.0
        %2713 = vmatpush1.msra.mxu0 0.0
        %2714 = vmatprep.subr.mxu0 0.0
        %2715 = vmatpush1.msra.mxu0 0.0
        %2716 = vmatprep.subr.mxu0 0.0
        %2717 = vmatpush1.msra.mxu0 0.0
        %2718 = vmatprep.subr.mxu0 0.0
        %2719 = vmatpush1.msra.mxu0 0.0
        %2720 = vmatprep.subr.mxu0 0.0
        %2721 = vmatpush1.msra.mxu0 0.0
        %2722 = vmatprep.subr.mxu0 0.0
        %2723 = vmatpush1.msra.mxu0 0.0
        %2724 = vmatprep.subr.mxu0 0.0
        %2725 = vmatpush1.msra.mxu0 0.0
        %2726 = vmatprep.subr.mxu0 0.0
        %2727 = vmatpush1.msra.mxu0 0.0
        %2728 = vmatprep.subr.mxu0 0.0
        %2729 = vmatpush1.msra.mxu0 0.0
        %2730 = vmatprep.subr.mxu0 0.0
        %2731 = vmatpush1.msra.mxu0 0.0
        %2732 = vmatprep.subr.mxu0 0.0
        %2733 = vmatpush1.msra.mxu0 0.0
        %2734 = vmatprep.subr.mxu0 0.0
        %2735 = vmatpush1.msra.mxu0 0.0
        %2736 = vmatprep.subr.mxu0 0.0
        %2737 = vmatpush1.msra.mxu0 0.0
        %2738 = vmatprep.subr.mxu0 0.0
        %2739 = vmatpush1.msra.mxu0 0.0
        %2740 = vmatprep.subr.mxu0 0.0
        %2741 = vmatpush1.msra.mxu0 0.0
        %2742 = vmatprep.subr.mxu0 0.0
        %2743 = vmatpush1.msra.mxu0 0.0
        %2744 = vmatprep.subr.mxu0 0.0
        %2745 = vmatpush1.msra.mxu0 0.0
        %2746 = vmatprep.subr.mxu0 0.0
        %2747 = vmatpush1.msra.mxu0 0.0
        %2748 = vmatprep.subr.mxu0 0.0
        %2749 = vmatpush1.msra.mxu0 0.0
        %2750 = vmatprep.subr.mxu0 0.0
        %2751 = vmatpush1.msra.mxu0 0.0
        %2752 = vmatprep.subr.mxu0 0.0
        %2753 = vmatpush1.msra.mxu0 0.0
        %2754 = vmatprep.mubr.f32.mxu0 0.0
        %2755 = vmatmul.mubr.f32.gmra.mrb[0].mxu0 %v2338
        %v2756 = vpop.f32.mrb[0].mxu0
        %v2757 = vadd.f32 0.0, %v2756
        %v2758 = vpop.f32.mrb[0].mxu0
        %v2759 = vadd.f32 0.0, %v2758
        %2760 = vmatprep.mubr.f32.mxu0 0.0
        %2761 = vmatmul.mubr.f32.gmra.mrb[0].mxu0 %v2341
        %v2762 = vpop.f32.mrb[0].mxu0
        %v2763 = vadd.f32 0.0, %v2762
        %v2764 = vpop.f32.mrb[0].mxu0
        %v2765 = vadd.f32 0.0, %v2764
        %2766 = vmatprep.mubr.f32.mxu0 0.0
        %2767 = vmatmul.mubr.f32.gmra.mrb[0].mxu0 %v2344
        %v2768 = vpop.f32.mrb[0].mxu0
        %v2769 = vadd.f32 0.0, %v2768
        %v2770 = vpop.f32.mrb[0].mxu0
        %v2771 = vadd.f32 0.0, %v2770
        %2772 = vmatprep.mubr.f32.mxu0 0.0
        %2773 = vmatmul.mubr.f32.gmra.mrb[0].mxu0 %v2347
        %v2774 = vpop.f32.mrb[0].mxu0
        %v2775 = vadd.f32 0.0, %v2774
        %v2776 = vpop.f32.mrb[0].mxu0
        %v2777 = vadd.f32 0.0, %v2776
        %2778 = vmatprep.mubr.f32.mxu0 0.0
        %2779 = vmatmul.mubr.f32.gmra.mrb[0].mxu0 %v2350
        %v2780 = vpop.f32.mrb[0].mxu0
        %v2781 = vadd.f32 0.0, %v2780
        %v2782 = vpop.f32.mrb[0].mxu0
        %v2783 = vadd.f32 0.0, %v2782
        %2784 = vmatprep.mubr.f32.mxu0 0.0
        %2785 = vmatmul.mubr.f32.gmra.mrb[0].mxu0 %v2353
        %v2786 = vpop.f32.mrb[0].mxu0
        %v2787 = vadd.f32 0.0, %v2786
        %v2788 = vpop.f32.mrb[0].mxu0
        %v2789 = vadd.f32 0.0, %v2788
        %2790 = vmatprep.mubr.f32.mxu0 0.0
        %2791 = vmatmul.mubr.f32.gmra.mrb[0].mxu0 %v2356
        %v2792 = vpop.f32.mrb[0].mxu0
        %v2793 = vadd.f32 0.0, %v2792
        %v2794 = vpop.f32.mrb[0].mxu0
        %v2795 = vadd.f32 0.0, %v2794
        %2796 = vmatprep.mubr.f32.mxu0 0.0
        %2797 = vmatmul.mubr.f32.gmra.mrb[0].mxu0 %v2359
        %v2798 = vpop.f32.mrb[0].mxu0
        %v2799 = vadd.f32 0.0, %v2798
        %v2800 = vpop.f32.mrb[0].mxu0
        %v2801 = vadd.f32 0.0, %v2800
        %2802 = vmatprep.mubr.f32.mxu0 0.0
        %2803 = vmatmul.mubr.f32.gmra.mrb[0].mxu0 %v2362
        %v2804 = vpop.f32.mrb[0].mxu0
        %v2805 = vadd.f32 0.0, %v2804
        %v2806 = vpop.f32.mrb[0].mxu0
        %v2807 = vadd.f32 0.0, %v2806
        %2808 = vmatprep.mubr.f32.mxu0 0.0
        %2809 = vmatmul.mubr.f32.gmra.mrb[0].mxu0 %v2365
        %v2810 = vpop.f32.mrb[0].mxu0
        %v2811 = vadd.f32 0.0, %v2810
        %v2812 = vpop.f32.mrb[0].mxu0
        %v2813 = vadd.f32 0.0, %v2812
        %2814 = vmatprep.mubr.f32.mxu0 0.0
        %2815 = vmatmul.mubr.f32.gmra.mrb[0].mxu0 %v2368
        %v2816 = vpop.f32.mrb[0].mxu0
        %v2817 = vadd.f32 0.0, %v2816
        %v2818 = vpop.f32.mrb[0].mxu0
        %v2819 = vadd.f32 0.0, %v2818
        %2820 = vmatprep.mubr.f32.mxu0 0.0
        %2821 = vmatmul.mubr.f32.gmra.mrb[0].mxu0 %v2371
        %v2822 = vpop.f32.mrb[0].mxu0
        %v2823 = vadd.f32 0.0, %v2822
        %v2824 = vpop.f32.mrb[0].mxu0
        %v2825 = vadd.f32 0.0, %v2824
        %2826 = vmatprep.mubr.f32.mxu0 0.0
        %2827 = vmatmul.mubr.f32.gmra.mrb[0].mxu0 %v2374
        %v2828 = vpop.f32.mrb[0].mxu0
        %v2829 = vadd.f32 0.0, %v2828
        %v2830 = vpop.f32.mrb[0].mxu0
        %v2831 = vadd.f32 0.0, %v2830
        %2832 = vmatprep.mubr.f32.mxu0 0.0
        %2833 = vmatmul.mubr.f32.gmra.mrb[0].mxu0 %v2377
        %v2834 = vpop.f32.mrb[0].mxu0
        %v2835 = vadd.f32 0.0, %v2834
        %v2836 = vpop.f32.mrb[0].mxu0
        %v2837 = vadd.f32 0.0, %v2836
        %2838 = vmatprep.mubr.f32.mxu0 0.0
        %2839 = vmatmul.mubr.f32.gmra.mrb[0].mxu0 %v2380
        %v2840 = vpop.f32.mrb[0].mxu0
        %v2841 = vadd.f32 0.0, %v2840
        %v2842 = vpop.f32.mrb[0].mxu0
        %v2843 = vadd.f32 0.0, %v2842
        %2844 = vmatprep.mubr.f32.mxu0 0.0
        %2845 = vmatmul.mubr.f32.gmra.mrb[0].mxu0 %v2383
        %v2846 = vpop.f32.mrb[0].mxu0
        %v2847 = vadd.f32 0.0, %v2846
        %v2848 = vpop.f32.mrb[0].mxu0
        %v2849 = vadd.f32 0.0, %v2848
        %2850 = vmatprep.mubr.f32.mxu0 0.0
        %2851 = vmatmul.mubr.f32.gmra.mrb[0].mxu0 %v2386
        %v2852 = vpop.f32.mrb[0].mxu0
        %v2853 = vadd.f32 0.0, %v2852
        %v2854 = vpop.f32.mrb[0].mxu0
        %v2855 = vadd.f32 0.0, %v2854
        %2856 = vmatprep.mubr.f32.mxu0 0.0
        %2857 = vmatmul.mubr.f32.gmra.mrb[0].mxu0 %v2389
        %v2858 = vpop.f32.mrb[0].mxu0
        %v2859 = vadd.f32 0.0, %v2858
        %v2860 = vpop.f32.mrb[0].mxu0
        %v2861 = vadd.f32 0.0, %v2860
        %2862 = vmatprep.mubr.f32.mxu0 0.0
        %2863 = vmatmul.mubr.f32.gmra.mrb[0].mxu0 %v2392
        %v2864 = vpop.f32.mrb[0].mxu0
        %v2865 = vadd.f32 0.0, %v2864
        %v2866 = vpop.f32.mrb[0].mxu0
        %v2867 = vadd.f32 0.0, %v2866
        %2868 = vmatprep.mubr.f32.mxu0 0.0
        %2869 = vmatmul.mubr.f32.gmra.mrb[0].mxu0 %v2395
        %v2870 = vpop.f32.mrb[0].mxu0
        %v2871 = vadd.f32 0.0, %v2870
        %v2872 = vpop.f32.mrb[0].mxu0
        %v2873 = vadd.f32 0.0, %v2872
        %2874 = vmatprep.mubr.f32.mxu0 0.0
        %2875 = vmatmul.mubr.f32.gmra.mrb[0].mxu0 %v2398
        %v2876 = vpop.f32.mrb[0].mxu0
        %v2877 = vadd.f32 0.0, %v2876
        %v2878 = vpop.f32.mrb[0].mxu0
        %v2879 = vadd.f32 0.0, %v2878
        %2880 = vmatprep.mubr.f32.mxu0 0.0
        %2881 = vmatmul.mubr.f32.gmra.mrb[0].mxu0 %v2401
        %v2882 = vpop.f32.mrb[0].mxu0
        %v2883 = vadd.f32 0.0, %v2882
        %v2884 = vpop.f32.mrb[0].mxu0
        %v2885 = vadd.f32 0.0, %v2884
        %2886 = vmatprep.mubr.f32.mxu0 0.0
        %2887 = vmatmul.mubr.f32.gmra.mrb[0].mxu0 %v2404
        %v2888 = vpop.f32.mrb[0].mxu0
        %v2889 = vadd.f32 0.0, %v2888
        %v2890 = vpop.f32.mrb[0].mxu0
        %v2891 = vadd.f32 0.0, %v2890
        %2892 = vmatprep.mubr.f32.mxu0 0.0
        %2893 = vmatmul.mubr.f32.gmra.mrb[0].mxu0 %v2407
        %v2894 = vpop.f32.mrb[0].mxu0
        %v2895 = vadd.f32 0.0, %v2894
        %v2896 = vpop.f32.mrb[0].mxu0
        %v2897 = vadd.f32 0.0, %v2896
        %2898 = vmatprep.mubr.f32.mxu0 0.0
        %2899 = vmatmul.mubr.f32.gmra.mrb[0].mxu0 %v2410
        %v2900 = vpop.f32.mrb[0].mxu0
        %v2901 = vadd.f32 0.0, %v2900
        %v2902 = vpop.f32.mrb[0].mxu0
        %v2903 = vadd.f32 0.0, %v2902
        %2904 = vmatprep.mubr.f32.mxu0 0.0
        %2905 = vmatmul.mubr.f32.gmra.mrb[0].mxu0 %v2413
        %v2906 = vpop.f32.mrb[0].mxu0
        %v2907 = vadd.f32 0.0, %v2906
        %v2908 = vpop.f32.mrb[0].mxu0
        %v2909 = vadd.f32 0.0, %v2908
        %2910 = vmatprep.mubr.f32.mxu0 0.0
        %2911 = vmatmul.mubr.f32.gmra.mrb[0].mxu0 %v2416
        %v2912 = vpop.f32.mrb[0].mxu0
        %v2913 = vadd.f32 0.0, %v2912
        %v2914 = vpop.f32.mrb[0].mxu0
        %v2915 = vadd.f32 0.0, %v2914
        %2916 = vmatprep.mubr.f32.mxu0 0.0
        %2917 = vmatmul.mubr.f32.gmra.mrb[0].mxu0 %v2419
        %v2918 = vpop.f32.mrb[0].mxu0
        %v2919 = vadd.f32 0.0, %v2918
        %v2920 = vpop.f32.mrb[0].mxu0
        %v2921 = vadd.f32 0.0, %v2920
        %2922 = vmatprep.mubr.f32.mxu0 0.0
        %2923 = vmatmul.mubr.f32.gmra.mrb[0].mxu0 %v2422
        %v2924 = vpop.f32.mrb[0].mxu0
        %v2925 = vadd.f32 0.0, %v2924
        %v2926 = vpop.f32.mrb[0].mxu0
        %v2927 = vadd.f32 0.0, %v2926
        %2928 = vmatprep.mubr.f32.mxu0 0.0
        %2929 = vmatmul.mubr.f32.gmra.mrb[0].mxu0 %v2425
        %v2930 = vpop.f32.mrb[0].mxu0
        %v2931 = vadd.f32 0.0, %v2930
        %v2932 = vpop.f32.mrb[0].mxu0
        %v2933 = vadd.f32 0.0, %v2932
        %2934 = vmatprep.mubr.f32.mxu0 0.0
        %2935 = vmatmul.mubr.f32.gmra.mrb[0].mxu0 %v2428
        %v2936 = vpop.f32.mrb[0].mxu0
        %v2937 = vadd.f32 0.0, %v2936
        %v2938 = vpop.f32.mrb[0].mxu0
        %v2939 = vadd.f32 0.0, %v2938
        %2940 = vmatprep.mubr.f32.mxu0 0.0
        %2941 = vmatmul.mubr.f32.gmra.mrb[0].mxu0 %v2431
        %v2942 = vpop.f32.mrb[0].mxu0
        %v2943 = vadd.f32 0.0, %v2942
        %v2944 = vpop.f32.mrb[0].mxu0
        %v2945 = vadd.f32 0.0, %v2944
        %2946 = vdwg.mxu0
        %2947 = vmatprep.subr.mxu0 0.0
        %2948 = vmatpush1.msra.mxu0 %v2321
        %2949 = vmatprep.subr.mxu0 0.0
        %2950 = vmatpush1.msra.mxu0 %v2326
        %2951 = vmatprep.subr.mxu0 0.0
        %2952 = vmatpush1.msra.mxu0 %v2331
        %2953 = vmatprep.subr.mxu0 0.0
        %2954 = vmatpush1.msra.mxu0 %v2336
        %2955 = vmatprep.subr.mxu0 0.0
        %2956 = vmatpush1.msra.mxu0 0.0
        %2957 = vmatprep.subr.mxu0 0.0
        %2958 = vmatpush1.msra.mxu0 0.0
        %2959 = vmatprep.subr.mxu0 0.0
        %2960 = vmatpush1.msra.mxu0 0.0
        %2961 = vmatprep.subr.mxu0 0.0
        %2962 = vmatpush1.msra.mxu0 0.0
        %2963 = vmatprep.subr.mxu0 0.0
        %2964 = vmatpush1.msra.mxu0 0.0
        %2965 = vmatprep.subr.mxu0 0.0
        %2966 = vmatpush1.msra.mxu0 0.0
        %2967 = vmatprep.subr.mxu0 0.0
        %2968 = vmatpush1.msra.mxu0 0.0
        %2969 = vmatprep.subr.mxu0 0.0
        %2970 = vmatpush1.msra.mxu0 0.0
        %2971 = vmatprep.subr.mxu0 0.0
        %2972 = vmatpush1.msra.mxu0 0.0
        %2973 = vmatprep.subr.mxu0 0.0
        %2974 = vmatpush1.msra.mxu0 0.0
        %2975 = vmatprep.subr.mxu0 0.0
        %2976 = vmatpush1.msra.mxu0 0.0
        %2977 = vmatprep.subr.mxu0 0.0
        %2978 = vmatpush1.msra.mxu0 0.0
        %2979 = vmatprep.subr.mxu0 0.0
        %2980 = vmatpush1.msra.mxu0 0.0
        %2981 = vmatprep.subr.mxu0 0.0
        %2982 = vmatpush1.msra.mxu0 0.0
        %2983 = vmatprep.subr.mxu0 0.0
        %2984 = vmatpush1.msra.mxu0 0.0
        %2985 = vmatprep.subr.mxu0 0.0
        %2986 = vmatpush1.msra.mxu0 0.0
        %2987 = vmatprep.subr.mxu0 0.0
        %2988 = vmatpush1.msra.mxu0 0.0
        %2989 = vmatprep.subr.mxu0 0.0
        %2990 = vmatpush1.msra.mxu0 0.0
        %2991 = vmatprep.subr.mxu0 0.0
        %2992 = vmatpush1.msra.mxu0 0.0
        %2993 = vmatprep.subr.mxu0 0.0
        %2994 = vmatpush1.msra.mxu0 0.0
        %2995 = vmatprep.subr.mxu0 0.0
        %2996 = vmatpush1.msra.mxu0 0.0
        %2997 = vmatprep.subr.mxu0 0.0
        %2998 = vmatpush1.msra.mxu0 0.0
        %2999 = vmatprep.subr.mxu0 0.0
        %3000 = vmatpush1.msra.mxu0 0.0
        %3001 = vmatprep.subr.mxu0 0.0
        %3002 = vmatpush1.msra.mxu0 0.0
        %3003 = vmatprep.subr.mxu0 0.0
        %3004 = vmatpush1.msra.mxu0 0.0
        %3005 = vmatprep.subr.mxu0 0.0
        %3006 = vmatpush1.msra.mxu0 0.0
        %3007 = vmatprep.subr.mxu0 0.0
        %3008 = vmatpush1.msra.mxu0 0.0
        %3009 = vmatprep.subr.mxu0 0.0
        %3010 = vmatpush1.msra.mxu0 0.0
        %3011 = vmatprep.mubr.f32.mxu0 0.0
        %3012 = vmatmul.mubr.f32.gmra.mrb[0].mxu0 %v2338
        %v3013 = vpop.f32.mrb[0].mxu0
        %v3014 = vadd.f32 0.0, %v3013
        %v3015 = vpop.f32.mrb[0].mxu0
        %3016 = vmatprep.mubr.f32.mxu0 0.0
        %3017 = vmatmul.mubr.f32.gmra.mrb[0].mxu0 %v2341
        %v3018 = vpop.f32.mrb[0].mxu0
        %v3019 = vadd.f32 0.0, %v3018
        %v3020 = vpop.f32.mrb[0].mxu0
        %3021 = vmatprep.mubr.f32.mxu0 0.0
        %3022 = vmatmul.mubr.f32.gmra.mrb[0].mxu0 %v2344
        %v3023 = vpop.f32.mrb[0].mxu0
        %v3024 = vadd.f32 0.0, %v3023
        %v3025 = vpop.f32.mrb[0].mxu0
        %3026 = vmatprep.mubr.f32.mxu0 0.0
        %3027 = vmatmul.mubr.f32.gmra.mrb[0].mxu0 %v2347
        %v3028 = vpop.f32.mrb[0].mxu0
        %v3029 = vadd.f32 0.0, %v3028
        %v3030 = vpop.f32.mrb[0].mxu0
        %3031 = vmatprep.mubr.f32.mxu0 0.0
        %3032 = vmatmul.mubr.f32.gmra.mrb[0].mxu0 %v2350
        %v3033 = vpop.f32.mrb[0].mxu0
        %v3034 = vadd.f32 0.0, %v3033
        %v3035 = vpop.f32.mrb[0].mxu0
        %3036 = vmatprep.mubr.f32.mxu0 0.0
        %3037 = vmatmul.mubr.f32.gmra.mrb[0].mxu0 %v2353
        %v3038 = vpop.f32.mrb[0].mxu0
        %v3039 = vadd.f32 0.0, %v3038
        %v3040 = vpop.f32.mrb[0].mxu0
        %3041 = vmatprep.mubr.f32.mxu0 0.0
        %3042 = vmatmul.mubr.f32.gmra.mrb[0].mxu0 %v2356
        %v3043 = vpop.f32.mrb[0].mxu0
        %v3044 = vadd.f32 0.0, %v3043
        %v3045 = vpop.f32.mrb[0].mxu0
        %3046 = vmatprep.mubr.f32.mxu0 0.0
        %3047 = vmatmul.mubr.f32.gmra.mrb[0].mxu0 %v2359
        %v3048 = vpop.f32.mrb[0].mxu0
        %v3049 = vadd.f32 0.0, %v3048
        %v3050 = vpop.f32.mrb[0].mxu0
        %3051 = vmatprep.mubr.f32.mxu0 0.0
        %3052 = vmatmul.mubr.f32.gmra.mrb[0].mxu0 %v2362
        %v3053 = vpop.f32.mrb[0].mxu0
        %v3054 = vadd.f32 0.0, %v3053
        %v3055 = vpop.f32.mrb[0].mxu0
        %3056 = vmatprep.mubr.f32.mxu0 0.0
        %3057 = vmatmul.mubr.f32.gmra.mrb[0].mxu0 %v2365
        %v3058 = vpop.f32.mrb[0].mxu0
        %v3059 = vadd.f32 0.0, %v3058
        %v3060 = vpop.f32.mrb[0].mxu0
        %3061 = vmatprep.mubr.f32.mxu0 0.0
        %3062 = vmatmul.mubr.f32.gmra.mrb[0].mxu0 %v2368
        %v3063 = vpop.f32.mrb[0].mxu0
        %v3064 = vadd.f32 0.0, %v3063
        %v3065 = vpop.f32.mrb[0].mxu0
        %3066 = vmatprep.mubr.f32.mxu0 0.0
        %3067 = vmatmul.mubr.f32.gmra.mrb[0].mxu0 %v2371
        %v3068 = vpop.f32.mrb[0].mxu0
        %v3069 = vadd.f32 0.0, %v3068
        %v3070 = vpop.f32.mrb[0].mxu0
        %3071 = vmatprep.mubr.f32.mxu0 0.0
        %3072 = vmatmul.mubr.f32.gmra.mrb[0].mxu0 %v2374
        %v3073 = vpop.f32.mrb[0].mxu0
        %v3074 = vadd.f32 0.0, %v3073
        %v3075 = vpop.f32.mrb[0].mxu0
        %3076 = vmatprep.mubr.f32.mxu0 0.0
        %3077 = vmatmul.mubr.f32.gmra.mrb[0].mxu0 %v2377
        %v3078 = vpop.f32.mrb[0].mxu0
        %v3079 = vadd.f32 0.0, %v3078
        %v3080 = vpop.f32.mrb[0].mxu0
        %3081 = vmatprep.mubr.f32.mxu0 0.0
        %3082 = vmatmul.mubr.f32.gmra.mrb[0].mxu0 %v2380
        %v3083 = vpop.f32.mrb[0].mxu0
        %v3084 = vadd.f32 0.0, %v3083
        %v3085 = vpop.f32.mrb[0].mxu0
        %3086 = vmatprep.mubr.f32.mxu0 0.0
        %3087 = vmatmul.mubr.f32.gmra.mrb[0].mxu0 %v2383
        %v3088 = vpop.f32.mrb[0].mxu0
        %v3089 = vadd.f32 0.0, %v3088
        %v3090 = vpop.f32.mrb[0].mxu0
        %3091 = vmatprep.mubr.f32.mxu0 0.0
        %3092 = vmatmul.mubr.f32.gmra.mrb[0].mxu0 %v2386
        %v3093 = vpop.f32.mrb[0].mxu0
        %v3094 = vadd.f32 0.0, %v3093
        %v3095 = vpop.f32.mrb[0].mxu0
        %3096 = vmatprep.mubr.f32.mxu0 0.0
        %3097 = vmatmul.mubr.f32.gmra.mrb[0].mxu0 %v2389
        %v3098 = vpop.f32.mrb[0].mxu0
        %v3099 = vadd.f32 0.0, %v3098
        %v3100 = vpop.f32.mrb[0].mxu0
        %3101 = vmatprep.mubr.f32.mxu0 0.0
        %3102 = vmatmul.mubr.f32.gmra.mrb[0].mxu0 %v2392
        %v3103 = vpop.f32.mrb[0].mxu0
        %v3104 = vadd.f32 0.0, %v3103
        %v3105 = vpop.f32.mrb[0].mxu0
        %3106 = vmatprep.mubr.f32.mxu0 0.0
        %3107 = vmatmul.mubr.f32.gmra.mrb[0].mxu0 %v2395
        %v3108 = vpop.f32.mrb[0].mxu0
        %v3109 = vadd.f32 0.0, %v3108
        %v3110 = vpop.f32.mrb[0].mxu0
        %3111 = vmatprep.mubr.f32.mxu0 0.0
        %3112 = vmatmul.mubr.f32.gmra.mrb[0].mxu0 %v2398
        %v3113 = vpop.f32.mrb[0].mxu0
        %v3114 = vadd.f32 0.0, %v3113
        %v3115 = vpop.f32.mrb[0].mxu0
        %3116 = vmatprep.mubr.f32.mxu0 0.0
        %3117 = vmatmul.mubr.f32.gmra.mrb[0].mxu0 %v2401
        %v3118 = vpop.f32.mrb[0].mxu0
        %v3119 = vadd.f32 0.0, %v3118
        %v3120 = vpop.f32.mrb[0].mxu0
        %3121 = vmatprep.mubr.f32.mxu0 0.0
        %3122 = vmatmul.mubr.f32.gmra.mrb[0].mxu0 %v2404
        %v3123 = vpop.f32.mrb[0].mxu0
        %v3124 = vadd.f32 0.0, %v3123
        %v3125 = vpop.f32.mrb[0].mxu0
        %3126 = vmatprep.mubr.f32.mxu0 0.0
        %3127 = vmatmul.mubr.f32.gmra.mrb[0].mxu0 %v2407
        %v3128 = vpop.f32.mrb[0].mxu0
        %v3129 = vadd.f32 0.0, %v3128
        %v3130 = vpop.f32.mrb[0].mxu0
        %3131 = vmatprep.mubr.f32.mxu0 0.0
        %3132 = vmatmul.mubr.f32.gmra.mrb[0].mxu0 %v2410
        %v3133 = vpop.f32.mrb[0].mxu0
        %v3134 = vadd.f32 0.0, %v3133
        %v3135 = vpop.f32.mrb[0].mxu0
        %3136 = vmatprep.mubr.f32.mxu0 0.0
        %3137 = vmatmul.mubr.f32.gmra.mrb[0].mxu0 %v2413
        %v3138 = vpop.f32.mrb[0].mxu0
        %v3139 = vadd.f32 0.0, %v3138
        %v3140 = vpop.f32.mrb[0].mxu0
        %3141 = vmatprep.mubr.f32.mxu0 0.0
        %3142 = vmatmul.mubr.f32.gmra.mrb[0].mxu0 %v2416
        %v3143 = vpop.f32.mrb[0].mxu0
        %v3144 = vadd.f32 0.0, %v3143
        %v3145 = vpop.f32.mrb[0].mxu0
        %3146 = vmatprep.mubr.f32.mxu0 0.0
        %3147 = vmatmul.mubr.f32.gmra.mrb[0].mxu0 %v2419
        %v3148 = vpop.f32.mrb[0].mxu0
        %v3149 = vadd.f32 0.0, %v3148
        %v3150 = vpop.f32.mrb[0].mxu0
        %3151 = vmatprep.mubr.f32.mxu0 0.0
        %3152 = vmatmul.mubr.f32.gmra.mrb[0].mxu0 %v2422
        %v3153 = vpop.f32.mrb[0].mxu0
        %v3154 = vadd.f32 0.0, %v3153
        %v3155 = vpop.f32.mrb[0].mxu0
        %3156 = vmatprep.mubr.f32.mxu0 0.0
        %3157 = vmatmul.mubr.f32.gmra.mrb[0].mxu0 %v2425
        %v3158 = vpop.f32.mrb[0].mxu0
        %v3159 = vadd.f32 0.0, %v3158
        %v3160 = vpop.f32.mrb[0].mxu0
        %3161 = vmatprep.mubr.f32.mxu0 0.0
        %3162 = vmatmul.mubr.f32.gmra.mrb[0].mxu0 %v2428
        %v3163 = vpop.f32.mrb[0].mxu0
        %v3164 = vadd.f32 0.0, %v3163
        %v3165 = vpop.f32.mrb[0].mxu0
        %3166 = vmatprep.mubr.f32.mxu0 0.0
        %3167 = vmatmul.mubr.f32.gmra.mrb[0].mxu0 %v2431
        %v3168 = vpop.f32.mrb[0].mxu0
        %v3169 = vadd.f32 0.0, %v3168
        %v3170 = vpop.f32.mrb[0].mxu0
        %3171 = vdwg.mxu0
        %vm3172 = vcmp.lt.s32.totalorder %v457, 4
        %v3173 = vsel %vm3172, %v3014, -1e+30
        %v3174 = vsel %vm3172, %v3019, -1e+30
        %v3175 = vsel %vm3172, %v3024, -1e+30
        %v3176 = vsel %vm3172, %v3029, -1e+30
        %v3177 = vsel %vm3172, %v3034, -1e+30
        %v3178 = vsel %vm3172, %v3039, -1e+30
        %v3179 = vsel %vm3172, %v3044, -1e+30
        %v3180 = vsel %vm3172, %v3049, -1e+30
        %v3181 = vsel %vm3172, %v3054, -1e+30
        %v3182 = vsel %vm3172, %v3059, -1e+30
        %v3183 = vsel %vm3172, %v3064, -1e+30
        %v3184 = vsel %vm3172, %v3069, -1e+30
        %v3185 = vsel %vm3172, %v3074, -1e+30
        %v3186 = vsel %vm3172, %v3079, -1e+30
        %v3187 = vsel %vm3172, %v3084, -1e+30
        %v3188 = vsel %vm3172, %v3089, -1e+30
        %v3189 = vsel %vm3172, %v3094, -1e+30
        %v3190 = vsel %vm3172, %v3099, -1e+30
        %v3191 = vsel %vm3172, %v3104, -1e+30
        %v3192 = vsel %vm3172, %v3109, -1e+30
        %v3193 = vsel %vm3172, %v3114, -1e+30
        %v3194 = vsel %vm3172, %v3119, -1e+30
        %v3195 = vsel %vm3172, %v3124, -1e+30
        %v3196 = vsel %vm3172, %v3129, -1e+30
        %v3197 = vsel %vm3172, %v3134, -1e+30
        %v3198 = vsel %vm3172, %v3139, -1e+30
        %v3199 = vsel %vm3172, %v3144, -1e+30
        %v3200 = vsel %vm3172, %v3149, -1e+30
        %v3201 = vsel %vm3172, %v3154, -1e+30
        %v3202 = vsel %vm3172, %v3159, -1e+30
        %v3203 = vsel %vm3172, %v3164, -1e+30
        %v3204 = vsel %vm3172, %v3169, -1e+30
        %3205 = vmax.xlane.f32.xlu0 %v3173
        %v3206 = vpop.xlane.xlu0 %3205
        %3207 = vmax.xlane.f32.xlu0 %v3174
        %v3208 = vpop.xlane.xlu0 %3207
        %3209 = vmax.xlane.f32.xlu0 %v3175
        %v3210 = vpop.xlane.xlu0 %3209
        %3211 = vmax.xlane.f32.xlu0 %v3176
        %v3212 = vpop.xlane.xlu0 %3211
        %3213 = vmax.xlane.f32.xlu0 %v3177
        %v3214 = vpop.xlane.xlu0 %3213
        %3215 = vmax.xlane.f32.xlu0 %v3178
        %v3216 = vpop.xlane.xlu0 %3215
        %3217 = vmax.xlane.f32.xlu0 %v3179
        %v3218 = vpop.xlane.xlu0 %3217
        %3219 = vmax.xlane.f32.xlu0 %v3180
        %v3220 = vpop.xlane.xlu0 %3219
        %3221 = vmax.xlane.f32.xlu0 %v3181
        %v3222 = vpop.xlane.xlu0 %3221
        %3223 = vmax.xlane.f32.xlu0 %v3182
        %v3224 = vpop.xlane.xlu0 %3223
        %3225 = vmax.xlane.f32.xlu0 %v3183
        %v3226 = vpop.xlane.xlu0 %3225
        %3227 = vmax.xlane.f32.xlu0 %v3184
        %v3228 = vpop.xlane.xlu0 %3227
        %3229 = vmax.xlane.f32.xlu0 %v3185
        %v3230 = vpop.xlane.xlu0 %3229
        %3231 = vmax.xlane.f32.xlu0 %v3186
        %v3232 = vpop.xlane.xlu0 %3231
        %3233 = vmax.xlane.f32.xlu0 %v3187
        %v3234 = vpop.xlane.xlu0 %3233
        %3235 = vmax.xlane.f32.xlu0 %v3188
        %v3236 = vpop.xlane.xlu0 %3235
        %3237 = vmax.xlane.f32.xlu0 %v3189
        %v3238 = vpop.xlane.xlu0 %3237
        %3239 = vmax.xlane.f32.xlu0 %v3190
        %v3240 = vpop.xlane.xlu0 %3239
        %3241 = vmax.xlane.f32.xlu0 %v3191
        %v3242 = vpop.xlane.xlu0 %3241
        %3243 = vmax.xlane.f32.xlu0 %v3192
        %v3244 = vpop.xlane.xlu0 %3243
        %3245 = vmax.xlane.f32.xlu0 %v3193
        %v3246 = vpop.xlane.xlu0 %3245
        %3247 = vmax.xlane.f32.xlu0 %v3194
        %v3248 = vpop.xlane.xlu0 %3247
        %3249 = vmax.xlane.f32.xlu0 %v3195
        %v3250 = vpop.xlane.xlu0 %3249
        %3251 = vmax.xlane.f32.xlu0 %v3196
        %v3252 = vpop.xlane.xlu0 %3251
        %3253 = vmax.xlane.f32.xlu0 %v3197
        %v3254 = vpop.xlane.xlu0 %3253
        %3255 = vmax.xlane.f32.xlu0 %v3198
        %v3256 = vpop.xlane.xlu0 %3255
        %3257 = vmax.xlane.f32.xlu0 %v3199
        %v3258 = vpop.xlane.xlu0 %3257
        %3259 = vmax.xlane.f32.xlu0 %v3200
        %v3260 = vpop.xlane.xlu0 %3259
        %3261 = vmax.xlane.f32.xlu0 %v3201
        %v3262 = vpop.xlane.xlu0 %3261
        %3263 = vmax.xlane.f32.xlu0 %v3202
        %v3264 = vpop.xlane.xlu0 %3263
        %3265 = vmax.xlane.f32.xlu0 %v3203
        %v3266 = vpop.xlane.xlu0 %3265
        %3267 = vmax.xlane.f32.xlu0 %v3204
        %v3268 = vpop.xlane.xlu0 %3267
        %v3269 = vsub.f32 %v3173, %v3206
        %v3270 = vsub.f32 %v3174, %v3208
        %v3271 = vsub.f32 %v3175, %v3210
        %v3272 = vsub.f32 %v3176, %v3212
        %v3273 = vsub.f32 %v3177, %v3214
        %v3274 = vsub.f32 %v3178, %v3216
        %v3275 = vsub.f32 %v3179, %v3218
        %v3276 = vsub.f32 %v3180, %v3220
        %v3277 = vsub.f32 %v3181, %v3222
        %v3278 = vsub.f32 %v3182, %v3224
        %v3279 = vsub.f32 %v3183, %v3226
        %v3280 = vsub.f32 %v3184, %v3228
        %v3281 = vsub.f32 %v3185, %v3230
        %v3282 = vsub.f32 %v3186, %v3232
        %v3283 = vsub.f32 %v3187, %v3234
        %v3284 = vsub.f32 %v3188, %v3236
        %v3285 = vsub.f32 %v3189, %v3238
        %v3286 = vsub.f32 %v3190, %v3240
        %v3287 = vsub.f32 %v3191, %v3242
        %v3288 = vsub.f32 %v3192, %v3244
        %v3289 = vsub.f32 %v3193, %v3246
        %v3290 = vsub.f32 %v3194, %v3248
        %v3291 = vsub.f32 %v3195, %v3250
        %v3292 = vsub.f32 %v3196, %v3252
        %v3293 = vsub.f32 %v3197, %v3254
        %v3294 = vsub.f32 %v3198, %v3256
        %v3295 = vsub.f32 %v3199, %v3258
        %v3296 = vsub.f32 %v3200, %v3260
        %v3297 = vsub.f32 %v3201, %v3262
        %v3298 = vsub.f32 %v3202, %v3264
        %v3299 = vsub.f32 %v3203, %v3266
        %v3300 = vsub.f32 %v3204, %v3268
        %v3301 = vmul.f32 %v3269, 1.442695
        %v3302 = vpow.pop %v3301
        %v3303 = vmul.f32 %v3270, 1.442695
        %v3304 = vpow.pop %v3303
        %v3305 = vmul.f32 %v3271, 1.442695
        %v3306 = vpow.pop %v3305
        %v3307 = vmul.f32 %v3272, 1.442695
        %v3308 = vpow.pop %v3307
        %v3309 = vmul.f32 %v3273, 1.442695
        %v3310 = vpow.pop %v3309
        %v3311 = vmul.f32 %v3274, 1.442695
        %v3312 = vpow.pop %v3311
        %v3313 = vmul.f32 %v3275, 1.442695
        %v3314 = vpow.pop %v3313
        %v3315 = vmul.f32 %v3276, 1.442695
        %v3316 = vpow.pop %v3315
        %v3317 = vmul.f32 %v3277, 1.442695
        %v3318 = vpow.pop %v3317
        %v3319 = vmul.f32 %v3278, 1.442695
        %v3320 = vpow.pop %v3319
        %v3321 = vmul.f32 %v3279, 1.442695
        %v3322 = vpow.pop %v3321
        %v3323 = vmul.f32 %v3280, 1.442695
        %v3324 = vpow.pop %v3323
        %v3325 = vmul.f32 %v3281, 1.442695
        %v3326 = vpow.pop %v3325
        %v3327 = vmul.f32 %v3282, 1.442695
        %v3328 = vpow.pop %v3327
        %v3329 = vmul.f32 %v3283, 1.442695
        %v3330 = vpow.pop %v3329
        %v3331 = vmul.f32 %v3284, 1.442695
        %v3332 = vpow.pop %v3331
        %v3333 = vmul.f32 %v3285, 1.442695
        %v3334 = vpow.pop %v3333
        %v3335 = vmul.f32 %v3286, 1.442695
        %v3336 = vpow.pop %v3335
        %v3337 = vmul.f32 %v3287, 1.442695
        %v3338 = vpow.pop %v3337
        %v3339 = vmul.f32 %v3288, 1.442695
        %v3340 = vpow.pop %v3339
        %v3341 = vmul.f32 %v3289, 1.442695
        %v3342 = vpow.pop %v3341
        %v3343 = vmul.f32 %v3290, 1.442695
        %v3344 = vpow.pop %v3343
        %v3345 = vmul.f32 %v3291, 1.442695
        %v3346 = vpow.pop %v3345
        %v3347 = vmul.f32 %v3292, 1.442695
        %v3348 = vpow.pop %v3347
        %v3349 = vmul.f32 %v3293, 1.442695
        %v3350 = vpow.pop %v3349
        %v3351 = vmul.f32 %v3294, 1.442695
        %v3352 = vpow.pop %v3351
        %v3353 = vmul.f32 %v3295, 1.442695
        %v3354 = vpow.pop %v3353
        %v3355 = vmul.f32 %v3296, 1.442695
        %v3356 = vpow.pop %v3355
        %v3357 = vmul.f32 %v3297, 1.442695
        %v3358 = vpow.pop %v3357
        %v3359 = vmul.f32 %v3298, 1.442695
        %v3360 = vpow.pop %v3359
        %v3361 = vmul.f32 %v3299, 1.442695
        %v3362 = vpow.pop %v3361
        %v3363 = vmul.f32 %v3300, 1.442695
        %v3364 = vpow.pop %v3363
        %3365 = vadd.xlane.f32.xlu0 %v3302
        %v3366 = vpop.xlane.xlu0 %3365
        %3367 = vadd.xlane.f32.xlu0 %v3304
        %v3368 = vpop.xlane.xlu0 %3367
        %3369 = vadd.xlane.f32.xlu0 %v3306
        %v3370 = vpop.xlane.xlu0 %3369
        %3371 = vadd.xlane.f32.xlu0 %v3308
        %v3372 = vpop.xlane.xlu0 %3371
        %3373 = vadd.xlane.f32.xlu0 %v3310
        %v3374 = vpop.xlane.xlu0 %3373
        %3375 = vadd.xlane.f32.xlu0 %v3312
        %v3376 = vpop.xlane.xlu0 %3375
        %3377 = vadd.xlane.f32.xlu0 %v3314
        %v3378 = vpop.xlane.xlu0 %3377
        %3379 = vadd.xlane.f32.xlu0 %v3316
        %v3380 = vpop.xlane.xlu0 %3379
        %3381 = vadd.xlane.f32.xlu0 %v3318
        %v3382 = vpop.xlane.xlu0 %3381
        %3383 = vadd.xlane.f32.xlu0 %v3320
        %v3384 = vpop.xlane.xlu0 %3383
        %3385 = vadd.xlane.f32.xlu0 %v3322
        %v3386 = vpop.xlane.xlu0 %3385
        %3387 = vadd.xlane.f32.xlu0 %v3324
        %v3388 = vpop.xlane.xlu0 %3387
        %3389 = vadd.xlane.f32.xlu0 %v3326
        %v3390 = vpop.xlane.xlu0 %3389
        %3391 = vadd.xlane.f32.xlu0 %v3328
        %v3392 = vpop.xlane.xlu0 %3391
        %3393 = vadd.xlane.f32.xlu0 %v3330
        %v3394 = vpop.xlane.xlu0 %3393
        %3395 = vadd.xlane.f32.xlu0 %v3332
        %v3396 = vpop.xlane.xlu0 %3395
        %3397 = vadd.xlane.f32.xlu0 %v3334
        %v3398 = vpop.xlane.xlu0 %3397
        %3399 = vadd.xlane.f32.xlu0 %v3336
        %v3400 = vpop.xlane.xlu0 %3399
        %3401 = vadd.xlane.f32.xlu0 %v3338
        %v3402 = vpop.xlane.xlu0 %3401
        %3403 = vadd.xlane.f32.xlu0 %v3340
        %v3404 = vpop.xlane.xlu0 %3403
        %3405 = vadd.xlane.f32.xlu0 %v3342
        %v3406 = vpop.xlane.xlu0 %3405
        %3407 = vadd.xlane.f32.xlu0 %v3344
        %v3408 = vpop.xlane.xlu0 %3407
        %3409 = vadd.xlane.f32.xlu0 %v3346
        %v3410 = vpop.xlane.xlu0 %3409
        %3411 = vadd.xlane.f32.xlu0 %v3348
        %v3412 = vpop.xlane.xlu0 %3411
        %3413 = vadd.xlane.f32.xlu0 %v3350
        %v3414 = vpop.xlane.xlu0 %3413
        %3415 = vadd.xlane.f32.xlu0 %v3352
        %v3416 = vpop.xlane.xlu0 %3415
        %3417 = vadd.xlane.f32.xlu0 %v3354
        %v3418 = vpop.xlane.xlu0 %3417
        %3419 = vadd.xlane.f32.xlu0 %v3356
        %v3420 = vpop.xlane.xlu0 %3419
        %3421 = vadd.xlane.f32.xlu0 %v3358
        %v3422 = vpop.xlane.xlu0 %3421
        %3423 = vadd.xlane.f32.xlu0 %v3360
        %v3424 = vpop.xlane.xlu0 %3423
        %3425 = vadd.xlane.f32.xlu0 %v3362
        %v3426 = vpop.xlane.xlu0 %3425
        %3427 = vadd.xlane.f32.xlu0 %v3364
        %v3428 = vpop.xlane.xlu0 %3427
        %v3429 = vrcp.pop %v3366
        %v3430 = vmul.f32 %v3302, %v3429
        %v3431 = vrcp.pop %v3368
        %v3432 = vmul.f32 %v3304, %v3431
        %v3433 = vrcp.pop %v3370
        %v3434 = vmul.f32 %v3306, %v3433
        %v3435 = vrcp.pop %v3372
        %v3436 = vmul.f32 %v3308, %v3435
        %v3437 = vrcp.pop %v3374
        %v3438 = vmul.f32 %v3310, %v3437
        %v3439 = vrcp.pop %v3376
        %v3440 = vmul.f32 %v3312, %v3439
        %v3441 = vrcp.pop %v3378
        %v3442 = vmul.f32 %v3314, %v3441
        %v3443 = vrcp.pop %v3380
        %v3444 = vmul.f32 %v3316, %v3443
        %v3445 = vrcp.pop %v3382
        %v3446 = vmul.f32 %v3318, %v3445
        %v3447 = vrcp.pop %v3384
        %v3448 = vmul.f32 %v3320, %v3447
        %v3449 = vrcp.pop %v3386
        %v3450 = vmul.f32 %v3322, %v3449
        %v3451 = vrcp.pop %v3388
        %v3452 = vmul.f32 %v3324, %v3451
        %v3453 = vrcp.pop %v3390
        %v3454 = vmul.f32 %v3326, %v3453
        %v3455 = vrcp.pop %v3392
        %v3456 = vmul.f32 %v3328, %v3455
        %v3457 = vrcp.pop %v3394
        %v3458 = vmul.f32 %v3330, %v3457
        %v3459 = vrcp.pop %v3396
        %v3460 = vmul.f32 %v3332, %v3459
        %v3461 = vrcp.pop %v3398
        %v3462 = vmul.f32 %v3334, %v3461
        %v3463 = vrcp.pop %v3400
        %v3464 = vmul.f32 %v3336, %v3463
        %v3465 = vrcp.pop %v3402
        %v3466 = vmul.f32 %v3338, %v3465
        %v3467 = vrcp.pop %v3404
        %v3468 = vmul.f32 %v3340, %v3467
        %v3469 = vrcp.pop %v3406
        %v3470 = vmul.f32 %v3342, %v3469
        %v3471 = vrcp.pop %v3408
        %v3472 = vmul.f32 %v3344, %v3471
        %v3473 = vrcp.pop %v3410
        %v3474 = vmul.f32 %v3346, %v3473
        %v3475 = vrcp.pop %v3412
        %v3476 = vmul.f32 %v3348, %v3475
        %v3477 = vrcp.pop %v3414
        %v3478 = vmul.f32 %v3350, %v3477
        %v3479 = vrcp.pop %v3416
        %v3480 = vmul.f32 %v3352, %v3479
        %v3481 = vrcp.pop %v3418
        %v3482 = vmul.f32 %v3354, %v3481
        %v3483 = vrcp.pop %v3420
        %v3484 = vmul.f32 %v3356, %v3483
        %v3485 = vrcp.pop %v3422
        %v3486 = vmul.f32 %v3358, %v3485
        %v3487 = vrcp.pop %v3424
        %v3488 = vmul.f32 %v3360, %v3487
        %v3489 = vrcp.pop %v3426
        %v3490 = vmul.f32 %v3362, %v3489
        %v3491 = vrcp.pop %v3428
        %v3492 = vmul.f32 %v3364, %v3491
        %3494 = vset.pattern.permute.xlu0 0
        %3495 = vperm.xlu0 %3494, %v3430
        %v3496 = vpop.permute.xlu0 %3495
        %3499 = vset.pattern.permute.xlu0 0
        %3500 = vperm.xlu0 %3499, %v3432
        %v3501 = vpop.permute.xlu0 %3500
        %3504 = vset.pattern.permute.xlu0 0
        %3505 = vperm.xlu0 %3504, %v3434
        %v3506 = vpop.permute.xlu0 %3505
        %3509 = vset.pattern.permute.xlu0 0
        %3510 = vperm.xlu0 %3509, %v3436
        %v3511 = vpop.permute.xlu0 %3510
        %3514 = vset.pattern.permute.xlu0 0
        %3515 = vperm.xlu0 %3514, %v3438
        %v3516 = vpop.permute.xlu0 %3515
        %3519 = vset.pattern.permute.xlu0 0
        %3520 = vperm.xlu0 %3519, %v3440
        %v3521 = vpop.permute.xlu0 %3520
        %3524 = vset.pattern.permute.xlu0 0
        %3525 = vperm.xlu0 %3524, %v3442
        %v3526 = vpop.permute.xlu0 %3525
        %3529 = vset.pattern.permute.xlu0 0
        %3530 = vperm.xlu0 %3529, %v3444
        %v3531 = vpop.permute.xlu0 %3530
        %3534 = vset.pattern.permute.xlu0 0
        %3535 = vperm.xlu0 %3534, %v3446
        %v3536 = vpop.permute.xlu0 %3535
        %3539 = vset.pattern.permute.xlu0 0
        %3540 = vperm.xlu0 %3539, %v3448
        %v3541 = vpop.permute.xlu0 %3540
        %3544 = vset.pattern.permute.xlu0 0
        %3545 = vperm.xlu0 %3544, %v3450
        %v3546 = vpop.permute.xlu0 %3545
        %3549 = vset.pattern.permute.xlu0 0
        %3550 = vperm.xlu0 %3549, %v3452
        %v3551 = vpop.permute.xlu0 %3550
        %3554 = vset.pattern.permute.xlu0 0
        %3555 = vperm.xlu0 %3554, %v3454
        %v3556 = vpop.permute.xlu0 %3555
        %3559 = vset.pattern.permute.xlu0 0
        %3560 = vperm.xlu0 %3559, %v3456
        %v3561 = vpop.permute.xlu0 %3560
        %3564 = vset.pattern.permute.xlu0 0
        %3565 = vperm.xlu0 %3564, %v3458
        %v3566 = vpop.permute.xlu0 %3565
        %3569 = vset.pattern.permute.xlu0 0
        %3570 = vperm.xlu0 %3569, %v3460
        %v3571 = vpop.permute.xlu0 %3570
        %3574 = vset.pattern.permute.xlu0 0
        %3575 = vperm.xlu0 %3574, %v3462
        %v3576 = vpop.permute.xlu0 %3575
        %3579 = vset.pattern.permute.xlu0 0
        %3580 = vperm.xlu0 %3579, %v3464
        %v3581 = vpop.permute.xlu0 %3580
        %3584 = vset.pattern.permute.xlu0 0
        %3585 = vperm.xlu0 %3584, %v3466
        %v3586 = vpop.permute.xlu0 %3585
        %3589 = vset.pattern.permute.xlu0 0
        %3590 = vperm.xlu0 %3589, %v3468
        %v3591 = vpop.permute.xlu0 %3590
        %3594 = vset.pattern.permute.xlu0 0
        %3595 = vperm.xlu0 %3594, %v3470
        %v3596 = vpop.permute.xlu0 %3595
        %3599 = vset.pattern.permute.xlu0 0
        %3600 = vperm.xlu0 %3599, %v3472
        %v3601 = vpop.permute.xlu0 %3600
        %3604 = vset.pattern.permute.xlu0 0
        %3605 = vperm.xlu0 %3604, %v3474
        %v3606 = vpop.permute.xlu0 %3605
        %3609 = vset.pattern.permute.xlu0 0
        %3610 = vperm.xlu0 %3609, %v3476
        %v3611 = vpop.permute.xlu0 %3610
        %3614 = vset.pattern.permute.xlu0 0
        %3615 = vperm.xlu0 %3614, %v3478
        %v3616 = vpop.permute.xlu0 %3615
        %3619 = vset.pattern.permute.xlu0 0
        %3620 = vperm.xlu0 %3619, %v3480
        %v3621 = vpop.permute.xlu0 %3620
        %3624 = vset.pattern.permute.xlu0 0
        %3625 = vperm.xlu0 %3624, %v3482
        %v3626 = vpop.permute.xlu0 %3625
        %3629 = vset.pattern.permute.xlu0 0
        %3630 = vperm.xlu0 %3629, %v3484
        %v3631 = vpop.permute.xlu0 %3630
        %3634 = vset.pattern.permute.xlu0 0
        %3635 = vperm.xlu0 %3634, %v3486
        %v3636 = vpop.permute.xlu0 %3635
        %3639 = vset.pattern.permute.xlu0 0
        %3640 = vperm.xlu0 %3639, %v3488
        %v3641 = vpop.permute.xlu0 %3640
        %3644 = vset.pattern.permute.xlu0 0
        %3645 = vperm.xlu0 %3644, %v3490
        %v3646 = vpop.permute.xlu0 %3645
        %3649 = vset.pattern.permute.xlu0 0
        %3650 = vperm.xlu0 %3649, %v3492
        %v3651 = vpop.permute.xlu0 %3650
        %v3653 = vmul.f32 %v3496, %v2500
        %v3654 = vmul.f32 %v3501, %v2506
        %v3655 = vmul.f32 %v3506, %v2512
        %v3656 = vmul.f32 %v3511, %v2518
        %v3657 = vmul.f32 %v3516, %v2524
        %v3658 = vmul.f32 %v3521, %v2530
        %v3659 = vmul.f32 %v3526, %v2536
        %v3660 = vmul.f32 %v3531, %v2542
        %v3661 = vmul.f32 %v3536, %v2548
        %v3662 = vmul.f32 %v3541, %v2554
        %v3663 = vmul.f32 %v3546, %v2560
        %v3664 = vmul.f32 %v3551, %v2566
        %v3665 = vmul.f32 %v3556, %v2572
        %v3666 = vmul.f32 %v3561, %v2578
        %v3667 = vmul.f32 %v3566, %v2584
        %v3668 = vmul.f32 %v3571, %v2590
        %v3669 = vmul.f32 %v3576, %v2596
        %v3670 = vmul.f32 %v3581, %v2602
        %v3671 = vmul.f32 %v3586, %v2608
        %v3672 = vmul.f32 %v3591, %v2614
        %v3673 = vmul.f32 %v3596, %v2620
        %v3674 = vmul.f32 %v3601, %v2626
        %v3675 = vmul.f32 %v3606, %v2632
        %v3676 = vmul.f32 %v3611, %v2638
        %v3677 = vmul.f32 %v3616, %v2644
        %v3678 = vmul.f32 %v3621, %v2650
        %v3679 = vmul.f32 %v3626, %v2656
        %v3680 = vmul.f32 %v3631, %v2662
        %v3681 = vmul.f32 %v3636, %v2668
        %v3682 = vmul.f32 %v3641, %v2674
        %v3683 = vmul.f32 %v3646, %v2680
        %v3684 = vmul.f32 %v3651, %v2686
        %3685 = vset.pattern.permute.xlu0 1
        %3686 = vperm.xlu0 %3685, %v3430
        %v3687 = vpop.permute.xlu0 %3686
        %3689 = vset.pattern.permute.xlu0 1
        %3690 = vperm.xlu0 %3689, %v3432
        %v3691 = vpop.permute.xlu0 %3690
        %3693 = vset.pattern.permute.xlu0 1
        %3694 = vperm.xlu0 %3693, %v3434
        %v3695 = vpop.permute.xlu0 %3694
        %3697 = vset.pattern.permute.xlu0 1
        %3698 = vperm.xlu0 %3697, %v3436
        %v3699 = vpop.permute.xlu0 %3698
        %3701 = vset.pattern.permute.xlu0 1
        %3702 = vperm.xlu0 %3701, %v3438
        %v3703 = vpop.permute.xlu0 %3702
        %3705 = vset.pattern.permute.xlu0 1
        %3706 = vperm.xlu0 %3705, %v3440
        %v3707 = vpop.permute.xlu0 %3706
        %3709 = vset.pattern.permute.xlu0 1
        %3710 = vperm.xlu0 %3709, %v3442
        %v3711 = vpop.permute.xlu0 %3710
        %3713 = vset.pattern.permute.xlu0 1
        %3714 = vperm.xlu0 %3713, %v3444
        %v3715 = vpop.permute.xlu0 %3714
        %3717 = vset.pattern.permute.xlu0 1
        %3718 = vperm.xlu0 %3717, %v3446
        %v3719 = vpop.permute.xlu0 %3718
        %3721 = vset.pattern.permute.xlu0 1
        %3722 = vperm.xlu0 %3721, %v3448
        %v3723 = vpop.permute.xlu0 %3722
        %3725 = vset.pattern.permute.xlu0 1
        %3726 = vperm.xlu0 %3725, %v3450
        %v3727 = vpop.permute.xlu0 %3726
        %3729 = vset.pattern.permute.xlu0 1
        %3730 = vperm.xlu0 %3729, %v3452
        %v3731 = vpop.permute.xlu0 %3730
        %3733 = vset.pattern.permute.xlu0 1
        %3734 = vperm.xlu0 %3733, %v3454
        %v3735 = vpop.permute.xlu0 %3734
        %3737 = vset.pattern.permute.xlu0 1
        %3738 = vperm.xlu0 %3737, %v3456
        %v3739 = vpop.permute.xlu0 %3738
        %3741 = vset.pattern.permute.xlu0 1
        %3742 = vperm.xlu0 %3741, %v3458
        %v3743 = vpop.permute.xlu0 %3742
        %3745 = vset.pattern.permute.xlu0 1
        %3746 = vperm.xlu0 %3745, %v3460
        %v3747 = vpop.permute.xlu0 %3746
        %3749 = vset.pattern.permute.xlu0 1
        %3750 = vperm.xlu0 %3749, %v3462
        %v3751 = vpop.permute.xlu0 %3750
        %3753 = vset.pattern.permute.xlu0 1
        %3754 = vperm.xlu0 %3753, %v3464
        %v3755 = vpop.permute.xlu0 %3754
        %3757 = vset.pattern.permute.xlu0 1
        %3758 = vperm.xlu0 %3757, %v3466
        %v3759 = vpop.permute.xlu0 %3758
        %3761 = vset.pattern.permute.xlu0 1
        %3762 = vperm.xlu0 %3761, %v3468
        %v3763 = vpop.permute.xlu0 %3762
        %3765 = vset.pattern.permute.xlu0 1
        %3766 = vperm.xlu0 %3765, %v3470
        %v3767 = vpop.permute.xlu0 %3766
        %3769 = vset.pattern.permute.xlu0 1
        %3770 = vperm.xlu0 %3769, %v3472
        %v3771 = vpop.permute.xlu0 %3770
        %3773 = vset.pattern.permute.xlu0 1
        %3774 = vperm.xlu0 %3773, %v3474
        %v3775 = vpop.permute.xlu0 %3774
        %3777 = vset.pattern.permute.xlu0 1
        %3778 = vperm.xlu0 %3777, %v3476
        %v3779 = vpop.permute.xlu0 %3778
        %3781 = vset.pattern.permute.xlu0 1
        %3782 = vperm.xlu0 %3781, %v3478
        %v3783 = vpop.permute.xlu0 %3782
        %3785 = vset.pattern.permute.xlu0 1
        %3786 = vperm.xlu0 %3785, %v3480
        %v3787 = vpop.permute.xlu0 %3786
        %3789 = vset.pattern.permute.xlu0 1
        %3790 = vperm.xlu0 %3789, %v3482
        %v3791 = vpop.permute.xlu0 %3790
        %3793 = vset.pattern.permute.xlu0 1
        %3794 = vperm.xlu0 %3793, %v3484
        %v3795 = vpop.permute.xlu0 %3794
        %3797 = vset.pattern.permute.xlu0 1
        %3798 = vperm.xlu0 %3797, %v3486
        %v3799 = vpop.permute.xlu0 %3798
        %3801 = vset.pattern.permute.xlu0 1
        %3802 = vperm.xlu0 %3801, %v3488
        %v3803 = vpop.permute.xlu0 %3802
        %3805 = vset.pattern.permute.xlu0 1
        %3806 = vperm.xlu0 %3805, %v3490
        %v3807 = vpop.permute.xlu0 %3806
        %3809 = vset.pattern.permute.xlu0 1
        %3810 = vperm.xlu0 %3809, %v3492
        %v3811 = vpop.permute.xlu0 %3810
        %v3813 = vmul.f32 %v3687, %v2502
        %v3814 = vmul.f32 %v3691, %v2508
        %v3815 = vmul.f32 %v3695, %v2514
        %v3816 = vmul.f32 %v3699, %v2520
        %v3817 = vmul.f32 %v3703, %v2526
        %v3818 = vmul.f32 %v3707, %v2532
        %v3819 = vmul.f32 %v3711, %v2538
        %v3820 = vmul.f32 %v3715, %v2544
        %v3821 = vmul.f32 %v3719, %v2550
        %v3822 = vmul.f32 %v3723, %v2556
        %v3823 = vmul.f32 %v3727, %v2562
        %v3824 = vmul.f32 %v3731, %v2568
        %v3825 = vmul.f32 %v3735, %v2574
        %v3826 = vmul.f32 %v3739, %v2580
        %v3827 = vmul.f32 %v3743, %v2586
        %v3828 = vmul.f32 %v3747, %v2592
        %v3829 = vmul.f32 %v3751, %v2598
        %v3830 = vmul.f32 %v3755, %v2604
        %v3831 = vmul.f32 %v3759, %v2610
        %v3832 = vmul.f32 %v3763, %v2616
        %v3833 = vmul.f32 %v3767, %v2622
        %v3834 = vmul.f32 %v3771, %v2628
        %v3835 = vmul.f32 %v3775, %v2634
        %v3836 = vmul.f32 %v3779, %v2640
        %v3837 = vmul.f32 %v3783, %v2646
        %v3838 = vmul.f32 %v3787, %v2652
        %v3839 = vmul.f32 %v3791, %v2658
        %v3840 = vmul.f32 %v3795, %v2664
        %v3841 = vmul.f32 %v3799, %v2670
        %v3842 = vmul.f32 %v3803, %v2676
        %v3843 = vmul.f32 %v3807, %v2682
        %v3844 = vmul.f32 %v3811, %v2688
        %v3845 = vadd.f32 %v3653, %v3813
        %v3846 = vadd.f32 %v3654, %v3814
        %v3847 = vadd.f32 %v3655, %v3815
        %v3848 = vadd.f32 %v3656, %v3816
        %v3849 = vadd.f32 %v3657, %v3817
        %v3850 = vadd.f32 %v3658, %v3818
        %v3851 = vadd.f32 %v3659, %v3819
        %v3852 = vadd.f32 %v3660, %v3820
        %v3853 = vadd.f32 %v3661, %v3821
        %v3854 = vadd.f32 %v3662, %v3822
        %v3855 = vadd.f32 %v3663, %v3823
        %v3856 = vadd.f32 %v3664, %v3824
        %v3857 = vadd.f32 %v3665, %v3825
        %v3858 = vadd.f32 %v3666, %v3826
        %v3859 = vadd.f32 %v3667, %v3827
        %v3860 = vadd.f32 %v3668, %v3828
        %v3861 = vadd.f32 %v3669, %v3829
        %v3862 = vadd.f32 %v3670, %v3830
        %v3863 = vadd.f32 %v3671, %v3831
        %v3864 = vadd.f32 %v3672, %v3832
        %v3865 = vadd.f32 %v3673, %v3833
        %v3866 = vadd.f32 %v3674, %v3834
        %v3867 = vadd.f32 %v3675, %v3835
        %v3868 = vadd.f32 %v3676, %v3836
        %v3869 = vadd.f32 %v3677, %v3837
        %v3870 = vadd.f32 %v3678, %v3838
        %v3871 = vadd.f32 %v3679, %v3839
        %v3872 = vadd.f32 %v3680, %v3840
        %v3873 = vadd.f32 %v3681, %v3841
        %v3874 = vadd.f32 %v3682, %v3842
        %v3875 = vadd.f32 %v3683, %v3843
        %v3876 = vadd.f32 %v3684, %v3844
        %3877 = vset.pattern.permute.xlu0 2
        %3878 = vperm.xlu0 %3877, %v3430
        %v3879 = vpop.permute.xlu0 %3878
        %3881 = vset.pattern.permute.xlu0 2
        %3882 = vperm.xlu0 %3881, %v3432
        %v3883 = vpop.permute.xlu0 %3882
        %3885 = vset.pattern.permute.xlu0 2
        %3886 = vperm.xlu0 %3885, %v3434
        %v3887 = vpop.permute.xlu0 %3886
        %3889 = vset.pattern.permute.xlu0 2
        %3890 = vperm.xlu0 %3889, %v3436
        %v3891 = vpop.permute.xlu0 %3890
        %3893 = vset.pattern.permute.xlu0 2
        %3894 = vperm.xlu0 %3893, %v3438
        %v3895 = vpop.permute.xlu0 %3894
        %3897 = vset.pattern.permute.xlu0 2
        %3898 = vperm.xlu0 %3897, %v3440
        %v3899 = vpop.permute.xlu0 %3898
        %3901 = vset.pattern.permute.xlu0 2
        %3902 = vperm.xlu0 %3901, %v3442
        %v3903 = vpop.permute.xlu0 %3902
        %3905 = vset.pattern.permute.xlu0 2
        %3906 = vperm.xlu0 %3905, %v3444
        %v3907 = vpop.permute.xlu0 %3906
        %3909 = vset.pattern.permute.xlu0 2
        %3910 = vperm.xlu0 %3909, %v3446
        %v3911 = vpop.permute.xlu0 %3910
        %3913 = vset.pattern.permute.xlu0 2
        %3914 = vperm.xlu0 %3913, %v3448
        %v3915 = vpop.permute.xlu0 %3914
        %3917 = vset.pattern.permute.xlu0 2
        %3918 = vperm.xlu0 %3917, %v3450
        %v3919 = vpop.permute.xlu0 %3918
        %3921 = vset.pattern.permute.xlu0 2
        %3922 = vperm.xlu0 %3921, %v3452
        %v3923 = vpop.permute.xlu0 %3922
        %3925 = vset.pattern.permute.xlu0 2
        %3926 = vperm.xlu0 %3925, %v3454
        %v3927 = vpop.permute.xlu0 %3926
        %3929 = vset.pattern.permute.xlu0 2
        %3930 = vperm.xlu0 %3929, %v3456
        %v3931 = vpop.permute.xlu0 %3930
        %3933 = vset.pattern.permute.xlu0 2
        %3934 = vperm.xlu0 %3933, %v3458
        %v3935 = vpop.permute.xlu0 %3934
        %3937 = vset.pattern.permute.xlu0 2
        %3938 = vperm.xlu0 %3937, %v3460
        %v3939 = vpop.permute.xlu0 %3938
        %3941 = vset.pattern.permute.xlu0 2
        %3942 = vperm.xlu0 %3941, %v3462
        %v3943 = vpop.permute.xlu0 %3942
        %3945 = vset.pattern.permute.xlu0 2
        %3946 = vperm.xlu0 %3945, %v3464
        %v3947 = vpop.permute.xlu0 %3946
        %3949 = vset.pattern.permute.xlu0 2
        %3950 = vperm.xlu0 %3949, %v3466
        %v3951 = vpop.permute.xlu0 %3950
        %3953 = vset.pattern.permute.xlu0 2
        %3954 = vperm.xlu0 %3953, %v3468
        %v3955 = vpop.permute.xlu0 %3954
        %3957 = vset.pattern.permute.xlu0 2
        %3958 = vperm.xlu0 %3957, %v3470
        %v3959 = vpop.permute.xlu0 %3958
        %3961 = vset.pattern.permute.xlu0 2
        %3962 = vperm.xlu0 %3961, %v3472
        %v3963 = vpop.permute.xlu0 %3962
        %3965 = vset.pattern.permute.xlu0 2
        %3966 = vperm.xlu0 %3965, %v3474
        %v3967 = vpop.permute.xlu0 %3966
        %3969 = vset.pattern.permute.xlu0 2
        %3970 = vperm.xlu0 %3969, %v3476
        %v3971 = vpop.permute.xlu0 %3970
        %3973 = vset.pattern.permute.xlu0 2
        %3974 = vperm.xlu0 %3973, %v3478
        %v3975 = vpop.permute.xlu0 %3974
        %3977 = vset.pattern.permute.xlu0 2
        %3978 = vperm.xlu0 %3977, %v3480
        %v3979 = vpop.permute.xlu0 %3978
        %3981 = vset.pattern.permute.xlu0 2
        %3982 = vperm.xlu0 %3981, %v3482
        %v3983 = vpop.permute.xlu0 %3982
        %3985 = vset.pattern.permute.xlu0 2
        %3986 = vperm.xlu0 %3985, %v3484
        %v3987 = vpop.permute.xlu0 %3986
        %3989 = vset.pattern.permute.xlu0 2
        %3990 = vperm.xlu0 %3989, %v3486
        %v3991 = vpop.permute.xlu0 %3990
        %3993 = vset.pattern.permute.xlu0 2
        %3994 = vperm.xlu0 %3993, %v3488
        %v3995 = vpop.permute.xlu0 %3994
        %3997 = vset.pattern.permute.xlu0 2
        %3998 = vperm.xlu0 %3997, %v3490
        %v3999 = vpop.permute.xlu0 %3998
        %4001 = vset.pattern.permute.xlu0 2
        %4002 = vperm.xlu0 %4001, %v3492
        %v4003 = vpop.permute.xlu0 %4002
        %v4005 = vmul.f32 %v3879, %v2757
        %v4006 = vmul.f32 %v3883, %v2763
        %v4007 = vmul.f32 %v3887, %v2769
        %v4008 = vmul.f32 %v3891, %v2775
        %v4009 = vmul.f32 %v3895, %v2781
        %v4010 = vmul.f32 %v3899, %v2787
        %v4011 = vmul.f32 %v3903, %v2793
        %v4012 = vmul.f32 %v3907, %v2799
        %v4013 = vmul.f32 %v3911, %v2805
        %v4014 = vmul.f32 %v3915, %v2811
        %v4015 = vmul.f32 %v3919, %v2817
        %v4016 = vmul.f32 %v3923, %v2823
        %v4017 = vmul.f32 %v3927, %v2829
        %v4018 = vmul.f32 %v3931, %v2835
        %v4019 = vmul.f32 %v3935, %v2841
        %v4020 = vmul.f32 %v3939, %v2847
        %v4021 = vmul.f32 %v3943, %v2853
        %v4022 = vmul.f32 %v3947, %v2859
        %v4023 = vmul.f32 %v3951, %v2865
        %v4024 = vmul.f32 %v3955, %v2871
        %v4025 = vmul.f32 %v3959, %v2877
        %v4026 = vmul.f32 %v3963, %v2883
        %v4027 = vmul.f32 %v3967, %v2889
        %v4028 = vmul.f32 %v3971, %v2895
        %v4029 = vmul.f32 %v3975, %v2901
        %v4030 = vmul.f32 %v3979, %v2907
        %v4031 = vmul.f32 %v3983, %v2913
        %v4032 = vmul.f32 %v3987, %v2919
        %v4033 = vmul.f32 %v3991, %v2925
        %v4034 = vmul.f32 %v3995, %v2931
        %v4035 = vmul.f32 %v3999, %v2937
        %v4036 = vmul.f32 %v4003, %v2943
        %v4037 = vadd.f32 %v3845, %v4005
        %v4038 = vadd.f32 %v3846, %v4006
        %v4039 = vadd.f32 %v3847, %v4007
        %v4040 = vadd.f32 %v3848, %v4008
        %v4041 = vadd.f32 %v3849, %v4009
        %v4042 = vadd.f32 %v3850, %v4010
        %v4043 = vadd.f32 %v3851, %v4011
        %v4044 = vadd.f32 %v3852, %v4012
        %v4045 = vadd.f32 %v3853, %v4013
        %v4046 = vadd.f32 %v3854, %v4014
        %v4047 = vadd.f32 %v3855, %v4015
        %v4048 = vadd.f32 %v3856, %v4016
        %v4049 = vadd.f32 %v3857, %v4017
        %v4050 = vadd.f32 %v3858, %v4018
        %v4051 = vadd.f32 %v3859, %v4019
        %v4052 = vadd.f32 %v3860, %v4020
        %v4053 = vadd.f32 %v3861, %v4021
        %v4054 = vadd.f32 %v3862, %v4022
        %v4055 = vadd.f32 %v3863, %v4023
        %v4056 = vadd.f32 %v3864, %v4024
        %v4057 = vadd.f32 %v3865, %v4025
        %v4058 = vadd.f32 %v3866, %v4026
        %v4059 = vadd.f32 %v3867, %v4027
        %v4060 = vadd.f32 %v3868, %v4028
        %v4061 = vadd.f32 %v3869, %v4029
        %v4062 = vadd.f32 %v3870, %v4030
        %v4063 = vadd.f32 %v3871, %v4031
        %v4064 = vadd.f32 %v3872, %v4032
        %v4065 = vadd.f32 %v3873, %v4033
        %v4066 = vadd.f32 %v3874, %v4034
        %v4067 = vadd.f32 %v3875, %v4035
        %v4068 = vadd.f32 %v3876, %v4036
        %4069 = vset.pattern.permute.xlu0 3
        %4070 = vperm.xlu0 %4069, %v3430
        %v4071 = vpop.permute.xlu0 %4070
        %4073 = vset.pattern.permute.xlu0 3
        %4074 = vperm.xlu0 %4073, %v3432
        %v4075 = vpop.permute.xlu0 %4074
        %4077 = vset.pattern.permute.xlu0 3
        %4078 = vperm.xlu0 %4077, %v3434
        %v4079 = vpop.permute.xlu0 %4078
        %4081 = vset.pattern.permute.xlu0 3
        %4082 = vperm.xlu0 %4081, %v3436
        %v4083 = vpop.permute.xlu0 %4082
        %4085 = vset.pattern.permute.xlu0 3
        %4086 = vperm.xlu0 %4085, %v3438
        %v4087 = vpop.permute.xlu0 %4086
        %4089 = vset.pattern.permute.xlu0 3
        %4090 = vperm.xlu0 %4089, %v3440
        %v4091 = vpop.permute.xlu0 %4090
        %4093 = vset.pattern.permute.xlu0 3
        %4094 = vperm.xlu0 %4093, %v3442
        %v4095 = vpop.permute.xlu0 %4094
        %4097 = vset.pattern.permute.xlu0 3
        %4098 = vperm.xlu0 %4097, %v3444
        %v4099 = vpop.permute.xlu0 %4098
        %4101 = vset.pattern.permute.xlu0 3
        %4102 = vperm.xlu0 %4101, %v3446
        %v4103 = vpop.permute.xlu0 %4102
        %4105 = vset.pattern.permute.xlu0 3
        %4106 = vperm.xlu0 %4105, %v3448
        %v4107 = vpop.permute.xlu0 %4106
        %4109 = vset.pattern.permute.xlu0 3
        %4110 = vperm.xlu0 %4109, %v3450
        %v4111 = vpop.permute.xlu0 %4110
        %4113 = vset.pattern.permute.xlu0 3
        %4114 = vperm.xlu0 %4113, %v3452
        %v4115 = vpop.permute.xlu0 %4114
        %4117 = vset.pattern.permute.xlu0 3
        %4118 = vperm.xlu0 %4117, %v3454
        %v4119 = vpop.permute.xlu0 %4118
        %4121 = vset.pattern.permute.xlu0 3
        %4122 = vperm.xlu0 %4121, %v3456
        %v4123 = vpop.permute.xlu0 %4122
        %4125 = vset.pattern.permute.xlu0 3
        %4126 = vperm.xlu0 %4125, %v3458
        %v4127 = vpop.permute.xlu0 %4126
        %4129 = vset.pattern.permute.xlu0 3
        %4130 = vperm.xlu0 %4129, %v3460
        %v4131 = vpop.permute.xlu0 %4130
        %4133 = vset.pattern.permute.xlu0 3
        %4134 = vperm.xlu0 %4133, %v3462
        %v4135 = vpop.permute.xlu0 %4134
        %4137 = vset.pattern.permute.xlu0 3
        %4138 = vperm.xlu0 %4137, %v3464
        %v4139 = vpop.permute.xlu0 %4138
        %4141 = vset.pattern.permute.xlu0 3
        %4142 = vperm.xlu0 %4141, %v3466
        %v4143 = vpop.permute.xlu0 %4142
        %4145 = vset.pattern.permute.xlu0 3
        %4146 = vperm.xlu0 %4145, %v3468
        %v4147 = vpop.permute.xlu0 %4146
        %4149 = vset.pattern.permute.xlu0 3
        %4150 = vperm.xlu0 %4149, %v3470
        %v4151 = vpop.permute.xlu0 %4150
        %4153 = vset.pattern.permute.xlu0 3
        %4154 = vperm.xlu0 %4153, %v3472
        %v4155 = vpop.permute.xlu0 %4154
        %4157 = vset.pattern.permute.xlu0 3
        %4158 = vperm.xlu0 %4157, %v3474
        %v4159 = vpop.permute.xlu0 %4158
        %4161 = vset.pattern.permute.xlu0 3
        %4162 = vperm.xlu0 %4161, %v3476
        %v4163 = vpop.permute.xlu0 %4162
        %4165 = vset.pattern.permute.xlu0 3
        %4166 = vperm.xlu0 %4165, %v3478
        %v4167 = vpop.permute.xlu0 %4166
        %4169 = vset.pattern.permute.xlu0 3
        %4170 = vperm.xlu0 %4169, %v3480
        %v4171 = vpop.permute.xlu0 %4170
        %4173 = vset.pattern.permute.xlu0 3
        %4174 = vperm.xlu0 %4173, %v3482
        %v4175 = vpop.permute.xlu0 %4174
        %4177 = vset.pattern.permute.xlu0 3
        %4178 = vperm.xlu0 %4177, %v3484
        %v4179 = vpop.permute.xlu0 %4178
        %4181 = vset.pattern.permute.xlu0 3
        %4182 = vperm.xlu0 %4181, %v3486
        %v4183 = vpop.permute.xlu0 %4182
        %4185 = vset.pattern.permute.xlu0 3
        %4186 = vperm.xlu0 %4185, %v3488
        %v4187 = vpop.permute.xlu0 %4186
        %4189 = vset.pattern.permute.xlu0 3
        %4190 = vperm.xlu0 %4189, %v3490
        %v4191 = vpop.permute.xlu0 %4190
        %4193 = vset.pattern.permute.xlu0 3
        %4194 = vperm.xlu0 %4193, %v3492
        %v4195 = vpop.permute.xlu0 %4194
        %v4197 = vmul.f32 %v4071, %v2759
        %v4198 = vmul.f32 %v4075, %v2765
        %v4199 = vmul.f32 %v4079, %v2771
        %v4200 = vmul.f32 %v4083, %v2777
        %v4201 = vmul.f32 %v4087, %v2783
        %v4202 = vmul.f32 %v4091, %v2789
        %v4203 = vmul.f32 %v4095, %v2795
        %v4204 = vmul.f32 %v4099, %v2801
        %v4205 = vmul.f32 %v4103, %v2807
        %v4206 = vmul.f32 %v4107, %v2813
        %v4207 = vmul.f32 %v4111, %v2819
        %v4208 = vmul.f32 %v4115, %v2825
        %v4209 = vmul.f32 %v4119, %v2831
        %v4210 = vmul.f32 %v4123, %v2837
        %v4211 = vmul.f32 %v4127, %v2843
        %v4212 = vmul.f32 %v4131, %v2849
        %v4213 = vmul.f32 %v4135, %v2855
        %v4214 = vmul.f32 %v4139, %v2861
        %v4215 = vmul.f32 %v4143, %v2867
        %v4216 = vmul.f32 %v4147, %v2873
        %v4217 = vmul.f32 %v4151, %v2879
        %v4218 = vmul.f32 %v4155, %v2885
        %v4219 = vmul.f32 %v4159, %v2891
        %v4220 = vmul.f32 %v4163, %v2897
        %v4221 = vmul.f32 %v4167, %v2903
        %v4222 = vmul.f32 %v4171, %v2909
        %v4223 = vmul.f32 %v4175, %v2915
        %v4224 = vmul.f32 %v4179, %v2921
        %v4225 = vmul.f32 %v4183, %v2927
        %v4226 = vmul.f32 %v4187, %v2933
        %v4227 = vmul.f32 %v4191, %v2939
        %v4228 = vmul.f32 %v4195, %v2945
        %v4229 = vadd.f32 %v4037, %v4197
        %v4230 = vadd.f32 %v4038, %v4198
        %v4231 = vadd.f32 %v4039, %v4199
        %v4232 = vadd.f32 %v4040, %v4200
        %v4233 = vadd.f32 %v4041, %v4201
        %v4234 = vadd.f32 %v4042, %v4202
        %v4235 = vadd.f32 %v4043, %v4203
        %v4236 = vadd.f32 %v4044, %v4204
        %v4237 = vadd.f32 %v4045, %v4205
        %v4238 = vadd.f32 %v4046, %v4206
        %v4239 = vadd.f32 %v4047, %v4207
        %v4240 = vadd.f32 %v4048, %v4208
        %v4241 = vadd.f32 %v4049, %v4209
        %v4242 = vadd.f32 %v4050, %v4210
        %v4243 = vadd.f32 %v4051, %v4211
        %v4244 = vadd.f32 %v4052, %v4212
        %v4245 = vadd.f32 %v4053, %v4213
        %v4246 = vadd.f32 %v4054, %v4214
        %v4247 = vadd.f32 %v4055, %v4215
        %v4248 = vadd.f32 %v4056, %v4216
        %v4249 = vadd.f32 %v4057, %v4217
        %v4250 = vadd.f32 %v4058, %v4218
        %v4251 = vadd.f32 %v4059, %v4219
        %v4252 = vadd.f32 %v4060, %v4220
        %v4253 = vadd.f32 %v4061, %v4221
        %v4254 = vadd.f32 %v4062, %v4222
        %v4255 = vadd.f32 %v4063, %v4223
        %v4256 = vadd.f32 %v4064, %v4224
        %v4257 = vadd.f32 %v4065, %v4225
        %v4258 = vadd.f32 %v4066, %v4226
        %v4259 = vadd.f32 %v4067, %v4227
        %v4260 = vadd.f32 %v4068, %v4228
        %v4261 = vmul.f32 %v4229, %v4229
        %v4262 = vmul.f32 %v4230, %v4230
        %v4263 = vmul.f32 %v4231, %v4231
        %v4264 = vmul.f32 %v4232, %v4232
        %v4265 = vmul.f32 %v4233, %v4233
        %v4266 = vmul.f32 %v4234, %v4234
        %v4267 = vmul.f32 %v4235, %v4235
        %v4268 = vmul.f32 %v4236, %v4236
        %v4269 = vmul.f32 %v4237, %v4237
        %v4270 = vmul.f32 %v4238, %v4238
        %v4271 = vmul.f32 %v4239, %v4239
        %v4272 = vmul.f32 %v4240, %v4240
        %v4273 = vmul.f32 %v4241, %v4241
        %v4274 = vmul.f32 %v4242, %v4242
        %v4275 = vmul.f32 %v4243, %v4243
        %v4276 = vmul.f32 %v4244, %v4244
        %v4277 = vmul.f32 %v4245, %v4245
        %v4278 = vmul.f32 %v4246, %v4246
        %v4279 = vmul.f32 %v4247, %v4247
        %v4280 = vmul.f32 %v4248, %v4248
        %v4281 = vmul.f32 %v4249, %v4249
        %v4282 = vmul.f32 %v4250, %v4250
        %v4283 = vmul.f32 %v4251, %v4251
        %v4284 = vmul.f32 %v4252, %v4252
        %v4285 = vmul.f32 %v4253, %v4253
        %v4286 = vmul.f32 %v4254, %v4254
        %v4287 = vmul.f32 %v4255, %v4255
        %v4288 = vmul.f32 %v4256, %v4256
        %v4289 = vmul.f32 %v4257, %v4257
        %v4290 = vmul.f32 %v4258, %v4258
        %v4291 = vmul.f32 %v4259, %v4259
        %v4292 = vmul.f32 %v4260, %v4260
        %4293 = vadd.xlane.f32.xlu0 %v4261
        %v4294 = vpop.xlane.xlu0 %4293
        %4295 = vadd.xlane.f32.xlu0 %v4262
        %v4296 = vpop.xlane.xlu0 %4295
        %4297 = vadd.xlane.f32.xlu0 %v4263
        %v4298 = vpop.xlane.xlu0 %4297
        %4299 = vadd.xlane.f32.xlu0 %v4264
        %v4300 = vpop.xlane.xlu0 %4299
        %4301 = vadd.xlane.f32.xlu0 %v4265
        %v4302 = vpop.xlane.xlu0 %4301
        %4303 = vadd.xlane.f32.xlu0 %v4266
        %v4304 = vpop.xlane.xlu0 %4303
        %4305 = vadd.xlane.f32.xlu0 %v4267
        %v4306 = vpop.xlane.xlu0 %4305
        %4307 = vadd.xlane.f32.xlu0 %v4268
        %v4308 = vpop.xlane.xlu0 %4307
        %4309 = vadd.xlane.f32.xlu0 %v4269
        %v4310 = vpop.xlane.xlu0 %4309
        %4311 = vadd.xlane.f32.xlu0 %v4270
        %v4312 = vpop.xlane.xlu0 %4311
        %4313 = vadd.xlane.f32.xlu0 %v4271
        %v4314 = vpop.xlane.xlu0 %4313
        %4315 = vadd.xlane.f32.xlu0 %v4272
        %v4316 = vpop.xlane.xlu0 %4315
        %4317 = vadd.xlane.f32.xlu0 %v4273
        %v4318 = vpop.xlane.xlu0 %4317
        %4319 = vadd.xlane.f32.xlu0 %v4274
        %v4320 = vpop.xlane.xlu0 %4319
        %4321 = vadd.xlane.f32.xlu0 %v4275
        %v4322 = vpop.xlane.xlu0 %4321
        %4323 = vadd.xlane.f32.xlu0 %v4276
        %v4324 = vpop.xlane.xlu0 %4323
        %4325 = vadd.xlane.f32.xlu0 %v4277
        %v4326 = vpop.xlane.xlu0 %4325
        %4327 = vadd.xlane.f32.xlu0 %v4278
        %v4328 = vpop.xlane.xlu0 %4327
        %4329 = vadd.xlane.f32.xlu0 %v4279
        %v4330 = vpop.xlane.xlu0 %4329
        %4331 = vadd.xlane.f32.xlu0 %v4280
        %v4332 = vpop.xlane.xlu0 %4331
        %4333 = vadd.xlane.f32.xlu0 %v4281
        %v4334 = vpop.xlane.xlu0 %4333
        %4335 = vadd.xlane.f32.xlu0 %v4282
        %v4336 = vpop.xlane.xlu0 %4335
        %4337 = vadd.xlane.f32.xlu0 %v4283
        %v4338 = vpop.xlane.xlu0 %4337
        %4339 = vadd.xlane.f32.xlu0 %v4284
        %v4340 = vpop.xlane.xlu0 %4339
        %4341 = vadd.xlane.f32.xlu0 %v4285
        %v4342 = vpop.xlane.xlu0 %4341
        %4343 = vadd.xlane.f32.xlu0 %v4286
        %v4344 = vpop.xlane.xlu0 %4343
        %4345 = vadd.xlane.f32.xlu0 %v4287
        %v4346 = vpop.xlane.xlu0 %4345
        %4347 = vadd.xlane.f32.xlu0 %v4288
        %v4348 = vpop.xlane.xlu0 %4347
        %4349 = vadd.xlane.f32.xlu0 %v4289
        %v4350 = vpop.xlane.xlu0 %4349
        %4351 = vadd.xlane.f32.xlu0 %v4290
        %v4352 = vpop.xlane.xlu0 %4351
        %4353 = vadd.xlane.f32.xlu0 %v4291
        %v4354 = vpop.xlane.xlu0 %4353
        %4355 = vadd.xlane.f32.xlu0 %v4292
        %v4356 = vpop.xlane.xlu0 %4355
        %v4357 = vrcp.pop 128.0
        %v4358 = vmul.f32 %v4294, %v4357
        %v4359 = vmul.f32 %v4296, %v4357
        %v4360 = vmul.f32 %v4298, %v4357
        %v4361 = vmul.f32 %v4300, %v4357
        %v4362 = vmul.f32 %v4302, %v4357
        %v4363 = vmul.f32 %v4304, %v4357
        %v4364 = vmul.f32 %v4306, %v4357
        %v4365 = vmul.f32 %v4308, %v4357
        %v4366 = vmul.f32 %v4310, %v4357
        %v4367 = vmul.f32 %v4312, %v4357
        %v4368 = vmul.f32 %v4314, %v4357
        %v4369 = vmul.f32 %v4316, %v4357
        %v4370 = vmul.f32 %v4318, %v4357
        %v4371 = vmul.f32 %v4320, %v4357
        %v4372 = vmul.f32 %v4322, %v4357
        %v4373 = vmul.f32 %v4324, %v4357
        %v4374 = vmul.f32 %v4326, %v4357
        %v4375 = vmul.f32 %v4328, %v4357
        %v4376 = vmul.f32 %v4330, %v4357
        %v4377 = vmul.f32 %v4332, %v4357
        %v4378 = vmul.f32 %v4334, %v4357
        %v4379 = vmul.f32 %v4336, %v4357
        %v4380 = vmul.f32 %v4338, %v4357
        %v4381 = vmul.f32 %v4340, %v4357
        %v4382 = vmul.f32 %v4342, %v4357
        %v4383 = vmul.f32 %v4344, %v4357
        %v4384 = vmul.f32 %v4346, %v4357
        %v4385 = vmul.f32 %v4348, %v4357
        %v4386 = vmul.f32 %v4350, %v4357
        %v4387 = vmul.f32 %v4352, %v4357
        %v4388 = vmul.f32 %v4354, %v4357
        %v4389 = vmul.f32 %v4356, %v4357
        %v4390 = vadd.f32 %v4358, 1.1920929e-07
        %v4391 = vadd.f32 %v4359, 1.1920929e-07
        %v4392 = vadd.f32 %v4360, 1.1920929e-07
        %v4393 = vadd.f32 %v4361, 1.1920929e-07
        %v4394 = vadd.f32 %v4362, 1.1920929e-07
        %v4395 = vadd.f32 %v4363, 1.1920929e-07
        %v4396 = vadd.f32 %v4364, 1.1920929e-07
        %v4397 = vadd.f32 %v4365, 1.1920929e-07
        %v4398 = vadd.f32 %v4366, 1.1920929e-07
        %v4399 = vadd.f32 %v4367, 1.1920929e-07
        %v4400 = vadd.f32 %v4368, 1.1920929e-07
        %v4401 = vadd.f32 %v4369, 1.1920929e-07
        %v4402 = vadd.f32 %v4370, 1.1920929e-07
        %v4403 = vadd.f32 %v4371, 1.1920929e-07
        %v4404 = vadd.f32 %v4372, 1.1920929e-07
        %v4405 = vadd.f32 %v4373, 1.1920929e-07
        %v4406 = vadd.f32 %v4374, 1.1920929e-07
        %v4407 = vadd.f32 %v4375, 1.1920929e-07
        %v4408 = vadd.f32 %v4376, 1.1920929e-07
        %v4409 = vadd.f32 %v4377, 1.1920929e-07
        %v4410 = vadd.f32 %v4378, 1.1920929e-07
        %v4411 = vadd.f32 %v4379, 1.1920929e-07
        %v4412 = vadd.f32 %v4380, 1.1920929e-07
        %v4413 = vadd.f32 %v4381, 1.1920929e-07
        %v4414 = vadd.f32 %v4382, 1.1920929e-07
        %v4415 = vadd.f32 %v4383, 1.1920929e-07
        %v4416 = vadd.f32 %v4384, 1.1920929e-07
        %v4417 = vadd.f32 %v4385, 1.1920929e-07
        %v4418 = vadd.f32 %v4386, 1.1920929e-07
        %v4419 = vadd.f32 %v4387, 1.1920929e-07
        %v4420 = vadd.f32 %v4388, 1.1920929e-07
        %v4421 = vadd.f32 %v4389, 1.1920929e-07
        %v4422 = vrsqrt.pop %v4390
        %v4423 = vrsqrt.pop %v4391
        %v4424 = vrsqrt.pop %v4392
        %v4425 = vrsqrt.pop %v4393
        %v4426 = vrsqrt.pop %v4394
        %v4427 = vrsqrt.pop %v4395
        %v4428 = vrsqrt.pop %v4396
        %v4429 = vrsqrt.pop %v4397
        %v4430 = vrsqrt.pop %v4398
        %v4431 = vrsqrt.pop %v4399
        %v4432 = vrsqrt.pop %v4400
        %v4433 = vrsqrt.pop %v4401
        %v4434 = vrsqrt.pop %v4402
        %v4435 = vrsqrt.pop %v4403
        %v4436 = vrsqrt.pop %v4404
        %v4437 = vrsqrt.pop %v4405
        %v4438 = vrsqrt.pop %v4406
        %v4439 = vrsqrt.pop %v4407
        %v4440 = vrsqrt.pop %v4408
        %v4441 = vrsqrt.pop %v4409
        %v4442 = vrsqrt.pop %v4410
        %v4443 = vrsqrt.pop %v4411
        %v4444 = vrsqrt.pop %v4412
        %v4445 = vrsqrt.pop %v4413
        %v4446 = vrsqrt.pop %v4414
        %v4447 = vrsqrt.pop %v4415
        %v4448 = vrsqrt.pop %v4416
        %v4449 = vrsqrt.pop %v4417
        %v4450 = vrsqrt.pop %v4418
        %v4451 = vrsqrt.pop %v4419
        %v4452 = vrsqrt.pop %v4420
        %v4453 = vrsqrt.pop %v4421
        %v4454 = vmul.f32 %v4229, %v4422
        %v4455 = vmul.f32 %v4230, %v4423
        %v4456 = vmul.f32 %v4231, %v4424
        %v4457 = vmul.f32 %v4232, %v4425
        %v4458 = vmul.f32 %v4233, %v4426
        %v4459 = vmul.f32 %v4234, %v4427
        %v4460 = vmul.f32 %v4235, %v4428
        %v4461 = vmul.f32 %v4236, %v4429
        %v4462 = vmul.f32 %v4237, %v4430
        %v4463 = vmul.f32 %v4238, %v4431
        %v4464 = vmul.f32 %v4239, %v4432
        %v4465 = vmul.f32 %v4240, %v4433
        %v4466 = vmul.f32 %v4241, %v4434
        %v4467 = vmul.f32 %v4242, %v4435
        %v4468 = vmul.f32 %v4243, %v4436
        %v4469 = vmul.f32 %v4244, %v4437
        %v4470 = vmul.f32 %v4245, %v4438
        %v4471 = vmul.f32 %v4246, %v4439
        %v4472 = vmul.f32 %v4247, %v4440
        %v4473 = vmul.f32 %v4248, %v4441
        %v4474 = vmul.f32 %v4249, %v4442
        %v4475 = vmul.f32 %v4250, %v4443
        %v4476 = vmul.f32 %v4251, %v4444
        %v4477 = vmul.f32 %v4252, %v4445
        %v4478 = vmul.f32 %v4253, %v4446
        %v4479 = vmul.f32 %v4254, %v4447
        %v4480 = vmul.f32 %v4255, %v4448
        %v4481 = vmul.f32 %v4256, %v4449
        %v4482 = vmul.f32 %v4257, %v4450
        %v4483 = vmul.f32 %v4258, %v4451
        %v4484 = vmul.f32 %v4259, %v4452
        %v4485 = vmul.f32 %v4260, %v4453
        %v4486 = vld [vmem:[%s9] sm:$0x1]
        %v4488 = vlaneseq
        %v4489 = vshrl.u32 %v4488, 7
        %v4490 = vsub.s32 0, %v4489
        %v4491 = vrot.slane %v4486, %v4490
        %v4493 = vmul.f32 %v4454, %v4491
        %v4494 = vmul.f32 %v4455, %v4491
        %v4495 = vmul.f32 %v4456, %v4491
        %v4496 = vmul.f32 %v4457, %v4491
        %v4497 = vmul.f32 %v4458, %v4491
        %v4498 = vmul.f32 %v4459, %v4491
        %v4499 = vmul.f32 %v4460, %v4491
        %v4500 = vmul.f32 %v4461, %v4491
        %v4501 = vmul.f32 %v4462, %v4491
        %v4502 = vmul.f32 %v4463, %v4491
        %v4503 = vmul.f32 %v4464, %v4491
        %v4504 = vmul.f32 %v4465, %v4491
        %v4505 = vmul.f32 %v4466, %v4491
        %v4506 = vmul.f32 %v4467, %v4491
        %v4507 = vmul.f32 %v4468, %v4491
        %v4508 = vmul.f32 %v4469, %v4491
        %v4509 = vmul.f32 %v4470, %v4491
        %v4510 = vmul.f32 %v4471, %v4491
        %v4511 = vmul.f32 %v4472, %v4491
        %v4512 = vmul.f32 %v4473, %v4491
        %v4513 = vmul.f32 %v4474, %v4491
        %v4514 = vmul.f32 %v4475, %v4491
        %v4515 = vmul.f32 %v4476, %v4491
        %v4516 = vmul.f32 %v4477, %v4491
        %v4517 = vmul.f32 %v4478, %v4491
        %v4518 = vmul.f32 %v4479, %v4491
        %v4519 = vmul.f32 %v4480, %v4491
        %v4520 = vmul.f32 %v4481, %v4491
        %v4521 = vmul.f32 %v4482, %v4491
        %v4522 = vmul.f32 %v4483, %v4491
        %v4523 = vmul.f32 %v4484, %v4491
        %v4524 = vmul.f32 %v4485, %v4491
        %4525 = vst [vmem:[%s397] sm:$0xff] %v4493
        %4526 = vst [vmem:[%s397 + $0x8] sm:$0xff] %v4494
        %4527 = vst [vmem:[%s397 + $0x10] sm:$0xff] %v4495
        %4528 = vst [vmem:[%s397 + $0x18] sm:$0xff] %v4496
        %4529 = vst [vmem:[%s397 + $0x20] sm:$0xff] %v4497
        %4530 = vst [vmem:[%s397 + $0x28] sm:$0xff] %v4498
        %4531 = vst [vmem:[%s397 + $0x30] sm:$0xff] %v4499
        %4532 = vst [vmem:[%s397 + $0x38] sm:$0xff] %v4500
        %4533 = vst [vmem:[%s397 + $0x40] sm:$0xff] %v4501
        %4534 = vst [vmem:[%s397 + $0x48] sm:$0xff] %v4502
        %4535 = vst [vmem:[%s397 + $0x50] sm:$0xff] %v4503
        %4536 = vst [vmem:[%s397 + $0x58] sm:$0xff] %v4504
        %4537 = vst [vmem:[%s397 + $0x60] sm:$0xff] %v4505
        %4538 = vst [vmem:[%s397 + $0x68] sm:$0xff] %v4506
        %4539 = vst [vmem:[%s397 + $0x70] sm:$0xff] %v4507
        %4540 = vst [vmem:[%s397 + $0x78] sm:$0xff] %v4508
        %4541 = vst [vmem:[%s397 + $0x80] sm:$0xff] %v4509
        %4542 = vst [vmem:[%s397 + $0x88] sm:$0xff] %v4510
        %4543 = vst [vmem:[%s397 + $0x90] sm:$0xff] %v4511
        %4544 = vst [vmem:[%s397 + $0x98] sm:$0xff] %v4512
        %4545 = vst [vmem:[%s397 + $0xa0] sm:$0xff] %v4513
        %4546 = vst [vmem:[%s397 + $0xa8] sm:$0xff] %v4514
        %4547 = vst [vmem:[%s397 + $0xb0] sm:$0xff] %v4515
        %4548 = vst [vmem:[%s397 + $0xb8] sm:$0xff] %v4516
        %4549 = vst [vmem:[%s397 + $0xc0] sm:$0xff] %v4517
        %4550 = vst [vmem:[%s397 + $0xc8] sm:$0xff] %v4518
        %4551 = vst [vmem:[%s397 + $0xd0] sm:$0xff] %v4519
        %4552 = vst [vmem:[%s397 + $0xd8] sm:$0xff] %v4520
        %4553 = vst [vmem:[%s397 + $0xe0] sm:$0xff] %v4521
        %4554 = vst [vmem:[%s397 + $0xe8] sm:$0xff] %v4522
        %4555 = vst [vmem:[%s397 + $0xf0] sm:$0xff] %v4523
        %4556 = vst [vmem:[%s397 + $0xf8] sm:$0xff] %v4524
        %4557 = vmax.xlane.f32.xlu0 %v4493
        %v4558 = vpop.xlane.xlu0 %4557
        %4559 = vmax.xlane.f32.xlu0 %v4494
        %v4560 = vpop.xlane.xlu0 %4559
        %4561 = vmax.xlane.f32.xlu0 %v4495
        %v4562 = vpop.xlane.xlu0 %4561
        %4563 = vmax.xlane.f32.xlu0 %v4496
        %v4564 = vpop.xlane.xlu0 %4563
        %4565 = vmax.xlane.f32.xlu0 %v4497
        %v4566 = vpop.xlane.xlu0 %4565
        %4567 = vmax.xlane.f32.xlu0 %v4498
        %v4568 = vpop.xlane.xlu0 %4567
        %4569 = vmax.xlane.f32.xlu0 %v4499
        %v4570 = vpop.xlane.xlu0 %4569
        %4571 = vmax.xlane.f32.xlu0 %v4500
        %v4572 = vpop.xlane.xlu0 %4571
        %4573 = vmax.xlane.f32.xlu0 %v4501
        %v4574 = vpop.xlane.xlu0 %4573
        %4575 = vmax.xlane.f32.xlu0 %v4502
        %v4576 = vpop.xlane.xlu0 %4575
        %4577 = vmax.xlane.f32.xlu0 %v4503
        %v4578 = vpop.xlane.xlu0 %4577
        %4579 = vmax.xlane.f32.xlu0 %v4504
        %v4580 = vpop.xlane.xlu0 %4579
        %4581 = vmax.xlane.f32.xlu0 %v4505
        %v4582 = vpop.xlane.xlu0 %4581
        %4583 = vmax.xlane.f32.xlu0 %v4506
        %v4584 = vpop.xlane.xlu0 %4583
        %4585 = vmax.xlane.f32.xlu0 %v4507
        %v4586 = vpop.xlane.xlu0 %4585
        %4587 = vmax.xlane.f32.xlu0 %v4508
        %v4588 = vpop.xlane.xlu0 %4587
        %4589 = vmax.xlane.f32.xlu0 %v4509
        %v4590 = vpop.xlane.xlu0 %4589
        %4591 = vmax.xlane.f32.xlu0 %v4510
        %v4592 = vpop.xlane.xlu0 %4591
        %4593 = vmax.xlane.f32.xlu0 %v4511
        %v4594 = vpop.xlane.xlu0 %4593
        %4595 = vmax.xlane.f32.xlu0 %v4512
        %v4596 = vpop.xlane.xlu0 %4595
        %4597 = vmax.xlane.f32.xlu0 %v4513
        %v4598 = vpop.xlane.xlu0 %4597
        %4599 = vmax.xlane.f32.xlu0 %v4514
        %v4600 = vpop.xlane.xlu0 %4599
        %4601 = vmax.xlane.f32.xlu0 %v4515
        %v4602 = vpop.xlane.xlu0 %4601
        %4603 = vmax.xlane.f32.xlu0 %v4516
        %v4604 = vpop.xlane.xlu0 %4603
        %4605 = vmax.xlane.f32.xlu0 %v4517
        %v4606 = vpop.xlane.xlu0 %4605
        %4607 = vmax.xlane.f32.xlu0 %v4518
        %v4608 = vpop.xlane.xlu0 %4607
        %4609 = vmax.xlane.f32.xlu0 %v4519
        %v4610 = vpop.xlane.xlu0 %4609
        %4611 = vmax.xlane.f32.xlu0 %v4520
        %v4612 = vpop.xlane.xlu0 %4611
        %4613 = vmax.xlane.f32.xlu0 %v4521
        %v4614 = vpop.xlane.xlu0 %4613
        %4615 = vmax.xlane.f32.xlu0 %v4522
        %v4616 = vpop.xlane.xlu0 %4615
        %4617 = vmax.xlane.f32.xlu0 %v4523
        %v4618 = vpop.xlane.xlu0 %4617
        %4619 = vmax.xlane.f32.xlu0 %v4524
        %v4620 = vpop.xlane.xlu0 %4619
        %v4621 = vsub.f32 %v4493, %v4558
        %v4622 = vsub.f32 %v4494, %v4560
        %v4623 = vsub.f32 %v4495, %v4562
        %v4624 = vsub.f32 %v4496, %v4564
        %v4625 = vsub.f32 %v4497, %v4566
        %v4626 = vsub.f32 %v4498, %v4568
        %v4627 = vsub.f32 %v4499, %v4570
        %v4628 = vsub.f32 %v4500, %v4572
        %v4629 = vsub.f32 %v4501, %v4574
        %v4630 = vsub.f32 %v4502, %v4576
        %v4631 = vsub.f32 %v4503, %v4578
        %v4632 = vsub.f32 %v4504, %v4580
        %v4633 = vsub.f32 %v4505, %v4582
        %v4634 = vsub.f32 %v4506, %v4584
        %v4635 = vsub.f32 %v4507, %v4586
        %v4636 = vsub.f32 %v4508, %v4588
        %v4637 = vsub.f32 %v4509, %v4590
        %v4638 = vsub.f32 %v4510, %v4592
        %v4639 = vsub.f32 %v4511, %v4594
        %v4640 = vsub.f32 %v4512, %v4596
        %v4641 = vsub.f32 %v4513, %v4598
        %v4642 = vsub.f32 %v4514, %v4600
        %v4643 = vsub.f32 %v4515, %v4602
        %v4644 = vsub.f32 %v4516, %v4604
        %v4645 = vsub.f32 %v4517, %v4606
        %v4646 = vsub.f32 %v4518, %v4608
        %v4647 = vsub.f32 %v4519, %v4610
        %v4648 = vsub.f32 %v4520, %v4612
        %v4649 = vsub.f32 %v4521, %v4614
        %v4650 = vsub.f32 %v4522, %v4616
        %v4651 = vsub.f32 %v4523, %v4618
        %v4652 = vsub.f32 %v4524, %v4620
        %v4653 = vmul.f32 %v4621, 1.442695
        %v4654 = vpow.pop %v4653
        %v4655 = vmul.f32 %v4622, 1.442695
        %v4656 = vpow.pop %v4655
        %v4657 = vmul.f32 %v4623, 1.442695
        %v4658 = vpow.pop %v4657
        %v4659 = vmul.f32 %v4624, 1.442695
        %v4660 = vpow.pop %v4659
        %v4661 = vmul.f32 %v4625, 1.442695
        %v4662 = vpow.pop %v4661
        %v4663 = vmul.f32 %v4626, 1.442695
        %v4664 = vpow.pop %v4663
        %v4665 = vmul.f32 %v4627, 1.442695
        %v4666 = vpow.pop %v4665
        %v4667 = vmul.f32 %v4628, 1.442695
        %v4668 = vpow.pop %v4667
        %v4669 = vmul.f32 %v4629, 1.442695
        %v4670 = vpow.pop %v4669
        %v4671 = vmul.f32 %v4630, 1.442695
        %v4672 = vpow.pop %v4671
        %v4673 = vmul.f32 %v4631, 1.442695
        %v4674 = vpow.pop %v4673
        %v4675 = vmul.f32 %v4632, 1.442695
        %v4676 = vpow.pop %v4675
        %v4677 = vmul.f32 %v4633, 1.442695
        %v4678 = vpow.pop %v4677
        %v4679 = vmul.f32 %v4634, 1.442695
        %v4680 = vpow.pop %v4679
        %v4681 = vmul.f32 %v4635, 1.442695
        %v4682 = vpow.pop %v4681
        %v4683 = vmul.f32 %v4636, 1.442695
        %v4684 = vpow.pop %v4683
        %v4685 = vmul.f32 %v4637, 1.442695
        %v4686 = vpow.pop %v4685
        %v4687 = vmul.f32 %v4638, 1.442695
        %v4688 = vpow.pop %v4687
        %v4689 = vmul.f32 %v4639, 1.442695
        %v4690 = vpow.pop %v4689
        %v4691 = vmul.f32 %v4640, 1.442695
        %v4692 = vpow.pop %v4691
        %v4693 = vmul.f32 %v4641, 1.442695
        %v4694 = vpow.pop %v4693
        %v4695 = vmul.f32 %v4642, 1.442695
        %v4696 = vpow.pop %v4695
        %v4697 = vmul.f32 %v4643, 1.442695
        %v4698 = vpow.pop %v4697
        %v4699 = vmul.f32 %v4644, 1.442695
        %v4700 = vpow.pop %v4699
        %v4701 = vmul.f32 %v4645, 1.442695
        %v4702 = vpow.pop %v4701
        %v4703 = vmul.f32 %v4646, 1.442695
        %v4704 = vpow.pop %v4703
        %v4705 = vmul.f32 %v4647, 1.442695
        %v4706 = vpow.pop %v4705
        %v4707 = vmul.f32 %v4648, 1.442695
        %v4708 = vpow.pop %v4707
        %v4709 = vmul.f32 %v4649, 1.442695
        %v4710 = vpow.pop %v4709
        %v4711 = vmul.f32 %v4650, 1.442695
        %v4712 = vpow.pop %v4711
        %v4713 = vmul.f32 %v4651, 1.442695
        %v4714 = vpow.pop %v4713
        %v4715 = vmul.f32 %v4652, 1.442695
        %v4716 = vpow.pop %v4715
        %4717 = vadd.xlane.f32.xlu0 %v4654
        %v4718 = vpop.xlane.xlu0 %4717
        %4719 = vadd.xlane.f32.xlu0 %v4656
        %v4720 = vpop.xlane.xlu0 %4719
        %4721 = vadd.xlane.f32.xlu0 %v4658
        %v4722 = vpop.xlane.xlu0 %4721
        %4723 = vadd.xlane.f32.xlu0 %v4660
        %v4724 = vpop.xlane.xlu0 %4723
        %4725 = vadd.xlane.f32.xlu0 %v4662
        %v4726 = vpop.xlane.xlu0 %4725
        %4727 = vadd.xlane.f32.xlu0 %v4664
        %v4728 = vpop.xlane.xlu0 %4727
        %4729 = vadd.xlane.f32.xlu0 %v4666
        %v4730 = vpop.xlane.xlu0 %4729
        %4731 = vadd.xlane.f32.xlu0 %v4668
        %v4732 = vpop.xlane.xlu0 %4731
        %4733 = vadd.xlane.f32.xlu0 %v4670
        %v4734 = vpop.xlane.xlu0 %4733
        %4735 = vadd.xlane.f32.xlu0 %v4672
        %v4736 = vpop.xlane.xlu0 %4735
        %4737 = vadd.xlane.f32.xlu0 %v4674
        %v4738 = vpop.xlane.xlu0 %4737
        %4739 = vadd.xlane.f32.xlu0 %v4676
        %v4740 = vpop.xlane.xlu0 %4739
        %4741 = vadd.xlane.f32.xlu0 %v4678
        %v4742 = vpop.xlane.xlu0 %4741
        %4743 = vadd.xlane.f32.xlu0 %v4680
        %v4744 = vpop.xlane.xlu0 %4743
        %4745 = vadd.xlane.f32.xlu0 %v4682
        %v4746 = vpop.xlane.xlu0 %4745
        %4747 = vadd.xlane.f32.xlu0 %v4684
        %v4748 = vpop.xlane.xlu0 %4747
        %4749 = vadd.xlane.f32.xlu0 %v4686
        %v4750 = vpop.xlane.xlu0 %4749
        %4751 = vadd.xlane.f32.xlu0 %v4688
        %v4752 = vpop.xlane.xlu0 %4751
        %4753 = vadd.xlane.f32.xlu0 %v4690
        %v4754 = vpop.xlane.xlu0 %4753
        %4755 = vadd.xlane.f32.xlu0 %v4692
        %v4756 = vpop.xlane.xlu0 %4755
        %4757 = vadd.xlane.f32.xlu0 %v4694
        %v4758 = vpop.xlane.xlu0 %4757
        %4759 = vadd.xlane.f32.xlu0 %v4696
        %v4760 = vpop.xlane.xlu0 %4759
        %4761 = vadd.xlane.f32.xlu0 %v4698
        %v4762 = vpop.xlane.xlu0 %4761
        %4763 = vadd.xlane.f32.xlu0 %v4700
        %v4764 = vpop.xlane.xlu0 %4763
        %4765 = vadd.xlane.f32.xlu0 %v4702
        %v4766 = vpop.xlane.xlu0 %4765
        %4767 = vadd.xlane.f32.xlu0 %v4704
        %v4768 = vpop.xlane.xlu0 %4767
        %4769 = vadd.xlane.f32.xlu0 %v4706
        %v4770 = vpop.xlane.xlu0 %4769
        %4771 = vadd.xlane.f32.xlu0 %v4708
        %v4772 = vpop.xlane.xlu0 %4771
        %4773 = vadd.xlane.f32.xlu0 %v4710
        %v4774 = vpop.xlane.xlu0 %4773
        %4775 = vadd.xlane.f32.xlu0 %v4712
        %v4776 = vpop.xlane.xlu0 %4775
        %4777 = vadd.xlane.f32.xlu0 %v4714
        %v4778 = vpop.xlane.xlu0 %4777
        %4779 = vadd.xlane.f32.xlu0 %v4716
        %v4780 = vpop.xlane.xlu0 %4779
        %v4781 = vlog2.pop %v4718
        %v4782 = vmul.f32 %v4781, 0.6931472
        %v4783 = vlog2.pop %v4720
        %v4784 = vmul.f32 %v4783, 0.6931472
        %v4785 = vlog2.pop %v4722
        %v4786 = vmul.f32 %v4785, 0.6931472
        %v4787 = vlog2.pop %v4724
        %v4788 = vmul.f32 %v4787, 0.6931472
        %v4789 = vlog2.pop %v4726
        %v4790 = vmul.f32 %v4789, 0.6931472
        %v4791 = vlog2.pop %v4728
        %v4792 = vmul.f32 %v4791, 0.6931472
        %v4793 = vlog2.pop %v4730
        %v4794 = vmul.f32 %v4793, 0.6931472
        %v4795 = vlog2.pop %v4732
        %v4796 = vmul.f32 %v4795, 0.6931472
        %v4797 = vlog2.pop %v4734
        %v4798 = vmul.f32 %v4797, 0.6931472
        %v4799 = vlog2.pop %v4736
        %v4800 = vmul.f32 %v4799, 0.6931472
        %v4801 = vlog2.pop %v4738
        %v4802 = vmul.f32 %v4801, 0.6931472
        %v4803 = vlog2.pop %v4740
        %v4804 = vmul.f32 %v4803, 0.6931472
        %v4805 = vlog2.pop %v4742
        %v4806 = vmul.f32 %v4805, 0.6931472
        %v4807 = vlog2.pop %v4744
        %v4808 = vmul.f32 %v4807, 0.6931472
        %v4809 = vlog2.pop %v4746
        %v4810 = vmul.f32 %v4809, 0.6931472
        %v4811 = vlog2.pop %v4748
        %v4812 = vmul.f32 %v4811, 0.6931472
        %v4813 = vlog2.pop %v4750
        %v4814 = vmul.f32 %v4813, 0.6931472
        %v4815 = vlog2.pop %v4752
        %v4816 = vmul.f32 %v4815, 0.6931472
        %v4817 = vlog2.pop %v4754
        %v4818 = vmul.f32 %v4817, 0.6931472
        %v4819 = vlog2.pop %v4756
        %v4820 = vmul.f32 %v4819, 0.6931472
        %v4821 = vlog2.pop %v4758
        %v4822 = vmul.f32 %v4821, 0.6931472
        %v4823 = vlog2.pop %v4760
        %v4824 = vmul.f32 %v4823, 0.6931472
        %v4825 = vlog2.pop %v4762
        %v4826 = vmul.f32 %v4825, 0.6931472
        %v4827 = vlog2.pop %v4764
        %v4828 = vmul.f32 %v4827, 0.6931472
        %v4829 = vlog2.pop %v4766
        %v4830 = vmul.f32 %v4829, 0.6931472
        %v4831 = vlog2.pop %v4768
        %v4832 = vmul.f32 %v4831, 0.6931472
        %v4833 = vlog2.pop %v4770
        %v4834 = vmul.f32 %v4833, 0.6931472
        %v4835 = vlog2.pop %v4772
        %v4836 = vmul.f32 %v4835, 0.6931472
        %v4837 = vlog2.pop %v4774
        %v4838 = vmul.f32 %v4837, 0.6931472
        %v4839 = vlog2.pop %v4776
        %v4840 = vmul.f32 %v4839, 0.6931472
        %v4841 = vlog2.pop %v4778
        %v4842 = vmul.f32 %v4841, 0.6931472
        %v4843 = vlog2.pop %v4780
        %v4844 = vmul.f32 %v4843, 0.6931472
        %v4845 = vadd.f32 %v4782, %v4558
        %v4846 = vadd.f32 %v4784, %v4560
        %v4847 = vadd.f32 %v4786, %v4562
        %v4848 = vadd.f32 %v4788, %v4564
        %v4849 = vadd.f32 %v4790, %v4566
        %v4850 = vadd.f32 %v4792, %v4568
        %v4851 = vadd.f32 %v4794, %v4570
        %v4852 = vadd.f32 %v4796, %v4572
        %v4853 = vadd.f32 %v4798, %v4574
        %v4854 = vadd.f32 %v4800, %v4576
        %v4855 = vadd.f32 %v4802, %v4578
        %v4856 = vadd.f32 %v4804, %v4580
        %v4857 = vadd.f32 %v4806, %v4582
        %v4858 = vadd.f32 %v4808, %v4584
        %v4859 = vadd.f32 %v4810, %v4586
        %v4860 = vadd.f32 %v4812, %v4588
        %v4861 = vadd.f32 %v4814, %v4590
        %v4862 = vadd.f32 %v4816, %v4592
        %v4863 = vadd.f32 %v4818, %v4594
        %v4864 = vadd.f32 %v4820, %v4596
        %v4865 = vadd.f32 %v4822, %v4598
        %v4866 = vadd.f32 %v4824, %v4600
        %v4867 = vadd.f32 %v4826, %v4602
        %v4868 = vadd.f32 %v4828, %v4604
        %v4869 = vadd.f32 %v4830, %v4606
        %v4870 = vadd.f32 %v4832, %v4608
        %v4871 = vadd.f32 %v4834, %v4610
        %v4872 = vadd.f32 %v4836, %v4612
        %v4873 = vadd.f32 %v4838, %v4614
        %v4874 = vadd.f32 %v4840, %v4616
        %v4875 = vadd.f32 %v4842, %v4618
        %v4876 = vadd.f32 %v4844, %v4620
        %v4877 = vld [vmem:[%s415] sm:$0xff]
        %v4878 = vld [vmem:[%s415 + $0x8] sm:$0xff]
        %v4879 = vld [vmem:[%s415 + $0x10] sm:$0xff]
        %v4880 = vld [vmem:[%s415 + $0x18] sm:$0xff]
        %v4881 = vld [vmem:[%s415 + $0x20] sm:$0xff]
        %v4882 = vld [vmem:[%s415 + $0x28] sm:$0xff]
        %v4883 = vld [vmem:[%s415 + $0x30] sm:$0xff]
        %v4884 = vld [vmem:[%s415 + $0x38] sm:$0xff]
        %v4885 = vld [vmem:[%s415 + $0x40] sm:$0xff]
        %v4886 = vld [vmem:[%s415 + $0x48] sm:$0xff]
        %v4887 = vld [vmem:[%s415 + $0x50] sm:$0xff]
        %v4888 = vld [vmem:[%s415 + $0x58] sm:$0xff]
        %v4889 = vld [vmem:[%s415 + $0x60] sm:$0xff]
        %v4890 = vld [vmem:[%s415 + $0x68] sm:$0xff]
        %v4891 = vld [vmem:[%s415 + $0x70] sm:$0xff]
        %v4892 = vld [vmem:[%s415 + $0x78] sm:$0xff]
        %v4893 = vld [vmem:[%s415 + $0x80] sm:$0xff]
        %v4894 = vld [vmem:[%s415 + $0x88] sm:$0xff]
        %v4895 = vld [vmem:[%s415 + $0x90] sm:$0xff]
        %v4896 = vld [vmem:[%s415 + $0x98] sm:$0xff]
        %v4897 = vld [vmem:[%s415 + $0xa0] sm:$0xff]
        %v4898 = vld [vmem:[%s415 + $0xa8] sm:$0xff]
        %v4899 = vld [vmem:[%s415 + $0xb0] sm:$0xff]
        %v4900 = vld [vmem:[%s415 + $0xb8] sm:$0xff]
        %v4901 = vld [vmem:[%s415 + $0xc0] sm:$0xff]
        %v4902 = vld [vmem:[%s415 + $0xc8] sm:$0xff]
        %v4903 = vld [vmem:[%s415 + $0xd0] sm:$0xff]
        %v4904 = vld [vmem:[%s415 + $0xd8] sm:$0xff]
        %v4905 = vld [vmem:[%s415 + $0xe0] sm:$0xff]
        %v4906 = vld [vmem:[%s415 + $0xe8] sm:$0xff]
        %v4907 = vld [vmem:[%s415 + $0xf0] sm:$0xff]
        %v4908 = vld [vmem:[%s415 + $0xf8] sm:$0xff]
        %4909 = vset.pattern.permute.xlu0 0
        %4910 = vperm.xlu0 %4909, %v4877
        %v4911 = vpop.permute.xlu0 %4910
        %4912 = vset.pattern.permute.xlu0 0
        %4913 = vperm.xlu0 %4912, %v4878
        %v4914 = vpop.permute.xlu0 %4913
        %4915 = vset.pattern.permute.xlu0 0
        %4916 = vperm.xlu0 %4915, %v4879
        %v4917 = vpop.permute.xlu0 %4916
        %4918 = vset.pattern.permute.xlu0 0
        %4919 = vperm.xlu0 %4918, %v4880
        %v4920 = vpop.permute.xlu0 %4919
        %4921 = vset.pattern.permute.xlu0 0
        %4922 = vperm.xlu0 %4921, %v4881
        %v4923 = vpop.permute.xlu0 %4922
        %4924 = vset.pattern.permute.xlu0 0
        %4925 = vperm.xlu0 %4924, %v4882
        %v4926 = vpop.permute.xlu0 %4925
        %4927 = vset.pattern.permute.xlu0 0
        %4928 = vperm.xlu0 %4927, %v4883
        %v4929 = vpop.permute.xlu0 %4928
        %4930 = vset.pattern.permute.xlu0 0
        %4931 = vperm.xlu0 %4930, %v4884
        %v4932 = vpop.permute.xlu0 %4931
        %4933 = vset.pattern.permute.xlu0 0
        %4934 = vperm.xlu0 %4933, %v4885
        %v4935 = vpop.permute.xlu0 %4934
        %4936 = vset.pattern.permute.xlu0 0
        %4937 = vperm.xlu0 %4936, %v4886
        %v4938 = vpop.permute.xlu0 %4937
        %4939 = vset.pattern.permute.xlu0 0
        %4940 = vperm.xlu0 %4939, %v4887
        %v4941 = vpop.permute.xlu0 %4940
        %4942 = vset.pattern.permute.xlu0 0
        %4943 = vperm.xlu0 %4942, %v4888
        %v4944 = vpop.permute.xlu0 %4943
        %4945 = vset.pattern.permute.xlu0 0
        %4946 = vperm.xlu0 %4945, %v4889
        %v4947 = vpop.permute.xlu0 %4946
        %4948 = vset.pattern.permute.xlu0 0
        %4949 = vperm.xlu0 %4948, %v4890
        %v4950 = vpop.permute.xlu0 %4949
        %4951 = vset.pattern.permute.xlu0 0
        %4952 = vperm.xlu0 %4951, %v4891
        %v4953 = vpop.permute.xlu0 %4952
        %4954 = vset.pattern.permute.xlu0 0
        %4955 = vperm.xlu0 %4954, %v4892
        %v4956 = vpop.permute.xlu0 %4955
        %4957 = vset.pattern.permute.xlu0 0
        %4958 = vperm.xlu0 %4957, %v4893
        %v4959 = vpop.permute.xlu0 %4958
        %4960 = vset.pattern.permute.xlu0 0
        %4961 = vperm.xlu0 %4960, %v4894
        %v4962 = vpop.permute.xlu0 %4961
        %4963 = vset.pattern.permute.xlu0 0
        %4964 = vperm.xlu0 %4963, %v4895
        %v4965 = vpop.permute.xlu0 %4964
        %4966 = vset.pattern.permute.xlu0 0
        %4967 = vperm.xlu0 %4966, %v4896
        %v4968 = vpop.permute.xlu0 %4967
        %4969 = vset.pattern.permute.xlu0 0
        %4970 = vperm.xlu0 %4969, %v4897
        %v4971 = vpop.permute.xlu0 %4970
        %4972 = vset.pattern.permute.xlu0 0
        %4973 = vperm.xlu0 %4972, %v4898
        %v4974 = vpop.permute.xlu0 %4973
        %4975 = vset.pattern.permute.xlu0 0
        %4976 = vperm.xlu0 %4975, %v4899
        %v4977 = vpop.permute.xlu0 %4976
        %4978 = vset.pattern.permute.xlu0 0
        %4979 = vperm.xlu0 %4978, %v4900
        %v4980 = vpop.permute.xlu0 %4979
        %4981 = vset.pattern.permute.xlu0 0
        %4982 = vperm.xlu0 %4981, %v4901
        %v4983 = vpop.permute.xlu0 %4982
        %4984 = vset.pattern.permute.xlu0 0
        %4985 = vperm.xlu0 %4984, %v4902
        %v4986 = vpop.permute.xlu0 %4985
        %4987 = vset.pattern.permute.xlu0 0
        %4988 = vperm.xlu0 %4987, %v4903
        %v4989 = vpop.permute.xlu0 %4988
        %4990 = vset.pattern.permute.xlu0 0
        %4991 = vperm.xlu0 %4990, %v4904
        %v4992 = vpop.permute.xlu0 %4991
        %4993 = vset.pattern.permute.xlu0 0
        %4994 = vperm.xlu0 %4993, %v4905
        %v4995 = vpop.permute.xlu0 %4994
        %4996 = vset.pattern.permute.xlu0 0
        %4997 = vperm.xlu0 %4996, %v4906
        %v4998 = vpop.permute.xlu0 %4997
        %4999 = vset.pattern.permute.xlu0 0
        %5000 = vperm.xlu0 %4999, %v4907
        %v5001 = vpop.permute.xlu0 %5000
        %5002 = vset.pattern.permute.xlu0 0
        %5003 = vperm.xlu0 %5002, %v4908
        %v5004 = vpop.permute.xlu0 %5003
        %vm5005 = vcmp.eq.s32.totalorder %v457, %v4911
        %vm5006 = vcmp.eq.s32.totalorder %v457, %v4914
        %vm5007 = vcmp.eq.s32.totalorder %v457, %v4917
        %vm5008 = vcmp.eq.s32.totalorder %v457, %v4920
        %vm5009 = vcmp.eq.s32.totalorder %v457, %v4923
        %vm5010 = vcmp.eq.s32.totalorder %v457, %v4926
        %vm5011 = vcmp.eq.s32.totalorder %v457, %v4929
        %vm5012 = vcmp.eq.s32.totalorder %v457, %v4932
        %vm5013 = vcmp.eq.s32.totalorder %v457, %v4935
        %vm5014 = vcmp.eq.s32.totalorder %v457, %v4938
        %vm5015 = vcmp.eq.s32.totalorder %v457, %v4941
        %vm5016 = vcmp.eq.s32.totalorder %v457, %v4944
        %vm5017 = vcmp.eq.s32.totalorder %v457, %v4947
        %vm5018 = vcmp.eq.s32.totalorder %v457, %v4950
        %vm5019 = vcmp.eq.s32.totalorder %v457, %v4953
        %vm5020 = vcmp.eq.s32.totalorder %v457, %v4956
        %vm5021 = vcmp.eq.s32.totalorder %v457, %v4959
        %vm5022 = vcmp.eq.s32.totalorder %v457, %v4962
        %vm5023 = vcmp.eq.s32.totalorder %v457, %v4965
        %vm5024 = vcmp.eq.s32.totalorder %v457, %v4968
        %vm5025 = vcmp.eq.s32.totalorder %v457, %v4971
        %vm5026 = vcmp.eq.s32.totalorder %v457, %v4974
        %vm5027 = vcmp.eq.s32.totalorder %v457, %v4977
        %vm5028 = vcmp.eq.s32.totalorder %v457, %v4980
        %vm5029 = vcmp.eq.s32.totalorder %v457, %v4983
        %vm5030 = vcmp.eq.s32.totalorder %v457, %v4986
        %vm5031 = vcmp.eq.s32.totalorder %v457, %v4989
        %vm5032 = vcmp.eq.s32.totalorder %v457, %v4992
        %vm5033 = vcmp.eq.s32.totalorder %v457, %v4995
        %vm5034 = vcmp.eq.s32.totalorder %v457, %v4998
        %vm5035 = vcmp.eq.s32.totalorder %v457, %v5001
        %vm5036 = vcmp.eq.s32.totalorder %v457, %v5004
        %v5037 = vsel %vm5005, %v4493, 0.0
        %v5038 = vsel %vm5006, %v4494, 0.0
        %v5039 = vsel %vm5007, %v4495, 0.0
        %v5040 = vsel %vm5008, %v4496, 0.0
        %v5041 = vsel %vm5009, %v4497, 0.0
        %v5042 = vsel %vm5010, %v4498, 0.0
        %v5043 = vsel %vm5011, %v4499, 0.0
        %v5044 = vsel %vm5012, %v4500, 0.0
        %v5045 = vsel %vm5013, %v4501, 0.0
        %v5046 = vsel %vm5014, %v4502, 0.0
        %v5047 = vsel %vm5015, %v4503, 0.0
        %v5048 = vsel %vm5016, %v4504, 0.0
        %v5049 = vsel %vm5017, %v4505, 0.0
        %v5050 = vsel %vm5018, %v4506, 0.0
        %v5051 = vsel %vm5019, %v4507, 0.0
        %v5052 = vsel %vm5020, %v4508, 0.0
        %v5053 = vsel %vm5021, %v4509, 0.0
        %v5054 = vsel %vm5022, %v4510, 0.0
        %v5055 = vsel %vm5023, %v4511, 0.0
        %v5056 = vsel %vm5024, %v4512, 0.0
        %v5057 = vsel %vm5025, %v4513, 0.0
        %v5058 = vsel %vm5026, %v4514, 0.0
        %v5059 = vsel %vm5027, %v4515, 0.0
        %v5060 = vsel %vm5028, %v4516, 0.0
        %v5061 = vsel %vm5029, %v4517, 0.0
        %v5062 = vsel %vm5030, %v4518, 0.0
        %v5063 = vsel %vm5031, %v4519, 0.0
        %v5064 = vsel %vm5032, %v4520, 0.0
        %v5065 = vsel %vm5033, %v4521, 0.0
        %v5066 = vsel %vm5034, %v4522, 0.0
        %v5067 = vsel %vm5035, %v4523, 0.0
        %v5068 = vsel %vm5036, %v4524, 0.0
        %5069 = vadd.xlane.f32.xlu0 %v5037
        %v5070 = vpop.xlane.xlu0 %5069
        %5071 = vadd.xlane.f32.xlu0 %v5038
        %v5072 = vpop.xlane.xlu0 %5071
        %5073 = vadd.xlane.f32.xlu0 %v5039
        %v5074 = vpop.xlane.xlu0 %5073
        %5075 = vadd.xlane.f32.xlu0 %v5040
        %v5076 = vpop.xlane.xlu0 %5075
        %5077 = vadd.xlane.f32.xlu0 %v5041
        %v5078 = vpop.xlane.xlu0 %5077
        %5079 = vadd.xlane.f32.xlu0 %v5042
        %v5080 = vpop.xlane.xlu0 %5079
        %5081 = vadd.xlane.f32.xlu0 %v5043
        %v5082 = vpop.xlane.xlu0 %5081
        %5083 = vadd.xlane.f32.xlu0 %v5044
        %v5084 = vpop.xlane.xlu0 %5083
        %5085 = vadd.xlane.f32.xlu0 %v5045
        %v5086 = vpop.xlane.xlu0 %5085
        %5087 = vadd.xlane.f32.xlu0 %v5046
        %v5088 = vpop.xlane.xlu0 %5087
        %5089 = vadd.xlane.f32.xlu0 %v5047
        %v5090 = vpop.xlane.xlu0 %5089
        %5091 = vadd.xlane.f32.xlu0 %v5048
        %v5092 = vpop.xlane.xlu0 %5091
        %5093 = vadd.xlane.f32.xlu0 %v5049
        %v5094 = vpop.xlane.xlu0 %5093
        %5095 = vadd.xlane.f32.xlu0 %v5050
        %v5096 = vpop.xlane.xlu0 %5095
        %5097 = vadd.xlane.f32.xlu0 %v5051
        %v5098 = vpop.xlane.xlu0 %5097
        %5099 = vadd.xlane.f32.xlu0 %v5052
        %v5100 = vpop.xlane.xlu0 %5099
        %5101 = vadd.xlane.f32.xlu0 %v5053
        %v5102 = vpop.xlane.xlu0 %5101
        %5103 = vadd.xlane.f32.xlu0 %v5054
        %v5104 = vpop.xlane.xlu0 %5103
        %5105 = vadd.xlane.f32.xlu0 %v5055
        %v5106 = vpop.xlane.xlu0 %5105
        %5107 = vadd.xlane.f32.xlu0 %v5056
        %v5108 = vpop.xlane.xlu0 %5107
        %5109 = vadd.xlane.f32.xlu0 %v5057
        %v5110 = vpop.xlane.xlu0 %5109
        %5111 = vadd.xlane.f32.xlu0 %v5058
        %v5112 = vpop.xlane.xlu0 %5111
        %5113 = vadd.xlane.f32.xlu0 %v5059
        %v5114 = vpop.xlane.xlu0 %5113
        %5115 = vadd.xlane.f32.xlu0 %v5060
        %v5116 = vpop.xlane.xlu0 %5115
        %5117 = vadd.xlane.f32.xlu0 %v5061
        %v5118 = vpop.xlane.xlu0 %5117
        %5119 = vadd.xlane.f32.xlu0 %v5062
        %v5120 = vpop.xlane.xlu0 %5119
        %5121 = vadd.xlane.f32.xlu0 %v5063
        %v5122 = vpop.xlane.xlu0 %5121
        %5123 = vadd.xlane.f32.xlu0 %v5064
        %v5124 = vpop.xlane.xlu0 %5123
        %5125 = vadd.xlane.f32.xlu0 %v5065
        %v5126 = vpop.xlane.xlu0 %5125
        %5127 = vadd.xlane.f32.xlu0 %v5066
        %v5128 = vpop.xlane.xlu0 %5127
        %5129 = vadd.xlane.f32.xlu0 %v5067
        %v5130 = vpop.xlane.xlu0 %5129
        %5131 = vadd.xlane.f32.xlu0 %v5068
        %v5132 = vpop.xlane.xlu0 %5131
        %v5133 = vsub.f32 %v4845, %v5070
        %v5134 = vsub.f32 %v4846, %v5072
        %v5135 = vsub.f32 %v4847, %v5074
        %v5136 = vsub.f32 %v4848, %v5076
        %v5137 = vsub.f32 %v4849, %v5078
        %v5138 = vsub.f32 %v4850, %v5080
        %v5139 = vsub.f32 %v4851, %v5082
        %v5140 = vsub.f32 %v4852, %v5084
        %v5141 = vsub.f32 %v4853, %v5086
        %v5142 = vsub.f32 %v4854, %v5088
        %v5143 = vsub.f32 %v4855, %v5090
        %v5144 = vsub.f32 %v4856, %v5092
        %v5145 = vsub.f32 %v4857, %v5094
        %v5146 = vsub.f32 %v4858, %v5096
        %v5147 = vsub.f32 %v4859, %v5098
        %v5148 = vsub.f32 %v4860, %v5100
        %v5149 = vsub.f32 %v4861, %v5102
        %v5150 = vsub.f32 %v4862, %v5104
        %v5151 = vsub.f32 %v4863, %v5106
        %v5152 = vsub.f32 %v4864, %v5108
        %v5153 = vsub.f32 %v4865, %v5110
        %v5154 = vsub.f32 %v4866, %v5112
        %v5155 = vsub.f32 %v4867, %v5114
        %v5156 = vsub.f32 %v4868, %v5116
        %v5157 = vsub.f32 %v4869, %v5118
        %v5158 = vsub.f32 %v4870, %v5120
        %v5159 = vsub.f32 %v4871, %v5122
        %v5160 = vsub.f32 %v4872, %v5124
        %v5161 = vsub.f32 %v4873, %v5126
        %v5162 = vsub.f32 %v4874, %v5128
        %v5163 = vsub.f32 %v4875, %v5130
        %v5164 = vsub.f32 %v4876, %v5132
        %vm5165 = vcmask 7168
        %5166 = vst.msk [vmem:[%s422] sm:$0xff] %vm5165, %v5133
        %5167 = vst.msk [vmem:[%s422 + $0x8] sm:$0xff] %vm5165, %v5134
        %5168 = vst.msk [vmem:[%s422 + $0x10] sm:$0xff] %vm5165, %v5135
        %5169 = vst.msk [vmem:[%s422 + $0x18] sm:$0xff] %vm5165, %v5136
        %5170 = vst.msk [vmem:[%s422 + $0x20] sm:$0xff] %vm5165, %v5137
        %5171 = vst.msk [vmem:[%s422 + $0x28] sm:$0xff] %vm5165, %v5138
        %5172 = vst.msk [vmem:[%s422 + $0x30] sm:$0xff] %vm5165, %v5139
        %5173 = vst.msk [vmem:[%s422 + $0x38] sm:$0xff] %vm5165, %v5140
        %5174 = vst.msk [vmem:[%s422 + $0x40] sm:$0xff] %vm5165, %v5141
        %5175 = vst.msk [vmem:[%s422 + $0x48] sm:$0xff] %vm5165, %v5142
        %5176 = vst.msk [vmem:[%s422 + $0x50] sm:$0xff] %vm5165, %v5143
        %5177 = vst.msk [vmem:[%s422 + $0x58] sm:$0xff] %vm5165, %v5144
        %5178 = vst.msk [vmem:[%s422 + $0x60] sm:$0xff] %vm5165, %v5145
        %5179 = vst.msk [vmem:[%s422 + $0x68] sm:$0xff] %vm5165, %v5146
        %5180 = vst.msk [vmem:[%s422 + $0x70] sm:$0xff] %vm5165, %v5147
        %5181 = vst.msk [vmem:[%s422 + $0x78] sm:$0xff] %vm5165, %v5148
        %5182 = vst.msk [vmem:[%s422 + $0x80] sm:$0xff] %vm5165, %v5149
        %5183 = vst.msk [vmem:[%s422 + $0x88] sm:$0xff] %vm5165, %v5150
        %5184 = vst.msk [vmem:[%s422 + $0x90] sm:$0xff] %vm5165, %v5151
        %5185 = vst.msk [vmem:[%s422 + $0x98] sm:$0xff] %vm5165, %v5152
        %5186 = vst.msk [vmem:[%s422 + $0xa0] sm:$0xff] %vm5165, %v5153
        %5187 = vst.msk [vmem:[%s422 + $0xa8] sm:$0xff] %vm5165, %v5154
        %5188 = vst.msk [vmem:[%s422 + $0xb0] sm:$0xff] %vm5165, %v5155
        %5189 = vst.msk [vmem:[%s422 + $0xb8] sm:$0xff] %vm5165, %v5156
        %5190 = vst.msk [vmem:[%s422 + $0xc0] sm:$0xff] %vm5165, %v5157
        %5191 = vst.msk [vmem:[%s422 + $0xc8] sm:$0xff] %vm5165, %v5158
        %5192 = vst.msk [vmem:[%s422 + $0xd0] sm:$0xff] %vm5165, %v5159
        %5193 = vst.msk [vmem:[%s422 + $0xd8] sm:$0xff] %vm5165, %v5160
        %5194 = vst.msk [vmem:[%s422 + $0xe0] sm:$0xff] %vm5165, %v5161
        %5195 = vst.msk [vmem:[%s422 + $0xe8] sm:$0xff] %vm5165, %v5162
        %5196 = vst.msk [vmem:[%s422 + $0xf0] sm:$0xff] %vm5165, %v5163
        %5197 = vst.msk [vmem:[%s422 + $0xf8] sm:$0xff] %vm5165, %v5164
        %s5198 = sand.u32 %s254, 1
        %s5199 = scalar_lea.sflag [#allocation3], %s5198
        %s5200 = sand.u32 %s254, 1
        %s5201 = smul.addr %s5200, 256
        %s5202 = scalar_lea.vmem [#allocation2], %s5201
        %s5203 = smul.u32 32, %s26
        %p5204 = scmp.lt.s32.totalorder %s5203, 63
        %s5205 = scalar_select %p5204, %s5203, 63
        %s5206 = smul.addr %s5205, 8
        %s5207 = scalar_lea.vmem %s11, %s5206
        // Predicated region
        $region61: #{tpu_custom_call.1} parent=59 // pred_check
          %p5208 = pneg %p264
        $region62: #{tpu_custom_call.1} parent=59 // pred_check_branch
          %5210 = sbr.rel (%p5208) target = $region64
        $region63: #{tpu_custom_call.1} parent=59 // pred_region
          %s5211 = smul.u32 32, %s26
          %s5213 = ssub.s32 4096, 4096
          %5214 = vsyncadd %s5199, %s5213
          %s5215 = smul.addr %s5211, 128
          %s5216 = scalar_lea.hbm %s10, %s5215
          %s5217 = sshll.u32 %s5202, 4
          %s5218 = int_to_ptr.vmem [resolvable:$true] %s5217
          %5223 = dma.vmem_to_hbm [thread:$0]  %s5218, 4096, %s5216, %s5199, 128, 128, 8
        $region64: #{tpu_custom_call.1} parent=59 // pred_fallthru
          _
        // Predicated region
        $region65: #{tpu_custom_call.1} parent=59 // pred_check
          %p5224 = pneg %p290
        $region66: #{tpu_custom_call.1} parent=59 // pred_check_branch
          %5226 = sbr.rel (%p5224) target = $region68
        $region67: #{tpu_custom_call.1} parent=59 // pred_region
          %s5227 = smul.u32 32, %s26
        $region68: #{tpu_custom_call.1} parent=59 // pred_fallthru
          _
      $region60: #{tpu_custom_call.1} parent=5 // pred_fallthru
        _
      %p5228 = scmp.le.s32.totalorder 2, %s21
      // Predicated region
      $region69: #{tpu_custom_call.1} parent=5 // pred_check
        %p5229 = pneg %p5228
      $region70: #{tpu_custom_call.1} parent=5 // pred_check_branch
        %5231 = sbr.rel (%p5229) target = $region72
      $region71: #{tpu_custom_call.1} parent=5 // pred_region
        %s5232 = ssub.s32 %s21, 2
        // Predicated region
        $region73: #{tpu_custom_call.1} parent=71 // pred_check
          %p5233 = pneg %p270
        $region74: #{tpu_custom_call.1} parent=71 // pred_check_branch
          %5235 = sbr.rel (%p5233) target = $region76
        $region75: #{tpu_custom_call.1} parent=71 // pred_region
          %s5236 = sand.u32 %s255, 1
          %s5237 = scalar_lea.sflag [#allocation3], %s5236
          %s5238 = sand.u32 %s255, 1
          %s5239 = smul.addr %s5238, 256
          %s5240 = scalar_lea.vmem [#allocation2], %s5239
          %5241 = dma.done %s5237, 4096
        $region76: #{tpu_custom_call.1} parent=71 // pred_fallthru
          _
        // Predicated region
        $region77: #{tpu_custom_call.1} parent=71 // pred_check
          %p5242 = pneg %p296
        $region78: #{tpu_custom_call.1} parent=71 // pred_check_branch
          %5244 = sbr.rel (%p5242) target = $region80
        $region79: #{tpu_custom_call.1} parent=71 // pred_region
          %s5245 = smul.u32 32, %s27
          %p5246 = scmp.lt.s32.totalorder %s5245, 63
          %s5247 = scalar_select %p5246, %s5245, 63
          %s5248 = smul.addr %s5247, 8
          %s5249 = scalar_lea.vmem %s11, %s5248
        $region80: #{tpu_custom_call.1} parent=71 // pred_fallthru
          _
      $region72: #{tpu_custom_call.1} parent=5 // pred_fallthru
        _
    $region6: #{tpu_custom_call.1} parent=1 // loop_footer
      %s25 = sadd.s32 1, %s21
    $region7: #{tpu_custom_call.1} parent=1 // loop_footer_branch
      %20 = sbr.rel target = $region3
    $region8: #{tpu_custom_call.1} parent=1 // loop_exit
      _
    %5250 = vsyncpa [#allocation3], 1
    %s5251 = scalar_lea.sflag [#allocation3], 1
    %5252 = vsyncpa %s5251, 1

</llo_original>
